<compile_context>
chip_gen: v7x
topology: tpu7x:2x2x1
jax: 0.10.0
libtpu: 0.0.40
codegen_flags: <defaults>
</compile_context>

<pallas_src>
import functools

import jax
import jax.numpy as jnp
from jax import lax
from jax.experimental import pallas as pl
from jax.experimental.pallas import tpu as pltpu

# Small, shape-consistent hyperparameters (args.*):
EMB = 32          # args.embedding_size
HID = 32          # args.lstm_hidden_size
NUM_LAYERS = 2    # args.num_lstm_layers
VOCAB = 16        # len(vocab)
NUM_TR = 8        # len(tadashi.TrEnum)
SEQ = 8           # token sequence length

HPAD = 128        # lane-padded hidden width (one full vreg of lanes)
GATE = 4 * HPAD   # padded gate width; gate k lives at lanes [k*HPAD, k*HPAD+HID)


def trann_kernel(x_ref, wih0_ref, whh0_ref, b0_ref,
                 wih1_ref, whh1_ref, b1_ref,
                 onehot_ref, wlh_ref, wlt_ref, blin_ref, out_ref):
    """Two-layer LSTM recurrence (interleaved) + linear head, all in-kernel."""
    T = x_ref.shape[0]

    # Hoisted layer-0 input-to-hidden pre-activations: one (T,E)@(E,4*HPAD)
    # matmul + bias broadcast, done once instead of per recurrence step.
    pre0 = (jnp.dot(x_ref[...], wih0_ref[...],
                    preferred_element_type=jnp.float32) + b0_ref[...])
    b1 = b1_ref[...]                                           # (1, 4*HPAD)

    def cell(gates, c):
        # PyTorch LSTM gate order: i, f, g, o.  Slices are vreg-aligned.
        i_g = jax.nn.sigmoid(gates[:, 0 * HPAD:1 * HPAD])
        f_g = jax.nn.sigmoid(gates[:, 1 * HPAD:2 * HPAD])
        g_g = jnp.tanh(gates[:, 2 * HPAD:3 * HPAD])
        o_g = jax.nn.sigmoid(gates[:, 3 * HPAD:4 * HPAD])
        c_new = f_g * c + i_g * g_g
        h_new = o_g * jnp.tanh(c_new)
        return h_new, c_new

    z = jnp.zeros((1, HPAD), jnp.float32)
    h0, c0, h1, c1 = z, z, z, z

    # Fully unrolled (T static).  Layer-1 step t is issued right after layer-0
    # step t, so its MXU/EUP work overlaps layer-0 step t+1's dependency chain.
    # Padded lanes of h/c stay 0 (pad weights/biases are 0 -> g_pad=tanh(0)=0).
    for t in range(T):
        g0 = pre0[t:t + 1, :] + jnp.dot(h0, whh0_ref[...],
                                        preferred_element_type=jnp.float32)
        h0, c0 = cell(g0, c0)
        g1 = (jnp.dot(h0, wih1_ref[...], preferred_element_type=jnp.float32)
              + b1
              + jnp.dot(h1, whh1_ref[...], preferred_element_type=jnp.float32))
        h1, c1 = cell(g1, c1)

    # TranNN head: Linear(hstack([h_last, one_hot])) with the weight split into
    # a hidden part and a one-hot part (mathematically identical; pads are 0).
    val = (jnp.sum(h1 * wlh_ref[...])
           + jnp.sum(onehot_ref[...] * wlt_ref[...])
           + blin_ref[0, 0])
    out_ref[...] = val.reshape(1, 1)


def init_params(key):
    """Torch-like parameters (weights pre-transposed to (in, out))."""
    ks = jax.random.split(key, 10)
    s_lstm = 1.0 / jnp.sqrt(jnp.float32(HID))
    s_lin = 1.0 / jnp.sqrt(jnp.float32(HID + NUM_TR))

    def u(k, shape, scale):
        return jax.random.uniform(k, shape, jnp.float32, -scale, scale)

    return {
        "embedding": jax.random.normal(ks[0], (VOCAB, EMB), jnp.float32),
        # LSTM layer 0: torch W_ih (4H, E), W_hh (4H, H)  -> stored transposed.
        "wih0": u(ks[1], (EMB, 4 * HID), s_lstm),
        "whh0": u(ks[2], (HID, 4 * HID), s_lstm),
        "b0":   u(ks[3], (1, 4 * HID), s_lstm),   # b_ih + b_hh folded together
        # LSTM layer 1: torch W_ih (4H, H), W_hh (4H, H)  -> stored transposed.
        "wih1": u(ks[4], (HID, 4 * HID), s_lstm),
        "whh1": u(ks[5], (HID, 4 * HID), s_lstm),
        "b1":   u(ks[6], (1, 4 * HID), s_lstm),
        # TranNN.linear: torch weight (1, H + NUM_TR), bias (1,)
        "wl_h": u(ks[7], (1, HID), s_lin),
        "wl_t": u(ks[8], (1, NUM_TR), s_lin),
        "bl":   u(ks[9], (1, 1), s_lin),
    }


def pack_params(p):
    """One-time repack into the lane-aligned kernel layout (pads are zero)."""
    def gate_pad_cols(w):                       # (in, 4H) -> (in, 4*HPAD)
        out = jnp.zeros((w.shape[0], GATE), jnp.float32)
        for k in range(4):
            out = out.at[:, k * HPAD:k * HPAD + HID].set(
                w[:, k * HID:(k + 1) * HID])
        return out

    def pad_rows(w, rows):                      # (HID, .) -> (HPAD, .)
        return jnp.zeros((rows, w.shape[1]), jnp.float32).at[:w.shape[0]].set(w)

    return {
        "embedding": p["embedding"],
        "wih0": gate_pad_cols(p["wih0"]),                  # (EMB, 4*HPAD)
        "whh0": pad_rows(gate_pad_cols(p["whh0"]), HPAD),  # (HPAD, 4*HPAD)
        "b0":   gate_pad_cols(p["b0"]),                    # (1, 4*HPAD)
        "wih1": pad_rows(gate_pad_cols(p["wih1"]), HPAD),
        "whh1": pad_rows(gate_pad_cols(p["whh1"]), HPAD),
        "b1":   gate_pad_cols(p["b1"]),
        "wl_h": jnp.zeros((1, HPAD), jnp.float32).at[:, :HID].set(p["wl_h"]),
        "wl_t": jnp.zeros((1, HPAD), jnp.float32).at[:, :NUM_TR].set(p["wl_t"]),
        "bl":   p["bl"],
    }


@jax.jit
def trann_forward(indices, tr_idx, kparams):
    emb = kparams["embedding"][indices]                         # (T, E) gather (glue)
    # one_hot over HPAD classes == one_hot over NUM_TR, zero-padded to 128 lanes
    onehot = jax.nn.one_hot(tr_idx, HPAD, dtype=jnp.float32).reshape(1, HPAD)
    vmem = functools.partial(pl.BlockSpec, memory_space=pltpu.MemorySpace.VMEM)
    out = pl.pallas_call(
        trann_kernel,
        out_shape=jax.ShapeDtypeStruct((1, 1), jnp.float32),
        in_specs=[vmem()] * 11,
        out_specs=vmem(),
    )(emb,
      kparams["wih0"], kparams["whh0"], kparams["b0"],
      kparams["wih1"], kparams["whh1"], kparams["b1"],
      onehot, kparams["wl_h"], kparams["wl_t"], kparams["bl"])
    return out.reshape(1)   # matches PyTorch nn.Linear output shape (1,)


def trann_reference(indices, tr_idx, params):
    """Pure-JAX reference (lax.scan LSTM, unpadded) for correctness checking."""
    x = params["embedding"][indices]

    def layer(x_seq, wih, whh, b):
        def step(carry, x_t):
            h, c = carry
            gates = x_t @ wih + h @ whh + b[0]
            i = jax.nn.sigmoid(gates[:HID])
            f = jax.nn.sigmoid(gates[HID:2 * HID])
            g = jnp.tanh(gates[2 * HID:3 * HID])
            o = jax.nn.sigmoid(gates[3 * HID:])
            c = f * c + i * g
            h = o * jnp.tanh(c)
            return (h, c), h
        (h, _), hs = lax.scan(step,
                              (jnp.zeros(HID, jnp.float32),
                               jnp.zeros(HID, jnp.float32)), x_seq)
        return hs, h

    hs0, _ = layer(x, params["wih0"], params["whh0"], params["b0"])
    _, h_last = layer(hs0, params["wih1"], params["whh1"], params["b1"])
    onehot = jax.nn.one_hot(tr_idx, NUM_TR, dtype=jnp.float32)
    combined = jnp.concatenate([h_last, onehot])
    w = jnp.concatenate([params["wl_h"][0], params["wl_t"][0]])
    return (combined @ w + params["bl"][0, 0]).reshape(1)


if __name__ == "__main__":
    key = jax.random.PRNGKey(0)
    pkey, ikey = jax.random.split(key)
    params = init_params(pkey)
    kparams = pack_params(params)                          # one-time repack
    indices = jax.random.randint(ikey, (SEQ,), 0, VOCAB)   # synthetic token ids
    tr_idx = jnp.int32(3)                                  # synthetic TrEnum index

    out = trann_forward(indices, tr_idx, kparams)
    out = jax.block_until_ready(out)

    ref = trann_reference(indices, tr_idx, params)
    assert out.shape == (1,)
    assert jnp.allclose(out, ref, atol=1e-5, rtol=1e-5), (out, ref)
    print("KERNEL_OK")
</pallas_src>

<mosaic_0001>
module attributes {stable_mosaic.version = 11 : i64} {
  func.func @trann_kernel(%arg0: memref<8x32xf32, #tpu.memory_space<vmem>>, %arg1: memref<32x512xf32, #tpu.memory_space<vmem>>, %arg2: memref<128x512xf32, #tpu.memory_space<vmem>>, %arg3: memref<1x512xf32, #tpu.memory_space<vmem>>, %arg4: memref<128x512xf32, #tpu.memory_space<vmem>>, %arg5: memref<128x512xf32, #tpu.memory_space<vmem>>, %arg6: memref<1x512xf32, #tpu.memory_space<vmem>>, %arg7: memref<1x128xf32, #tpu.memory_space<vmem>>, %arg8: memref<1x128xf32, #tpu.memory_space<vmem>>, %arg9: memref<1x128xf32, #tpu.memory_space<vmem>>, %arg10: memref<1x1xf32, #tpu.memory_space<vmem>>, %arg11: memref<1x1xf32, #tpu.memory_space<vmem>>) attributes {dimension_semantics = [], scalar_prefetch = 0 : i64, scratch_operands = 0 : i64, tpu.core_type = #tpu.core_type<tc>} {
    %c0 = arith.constant 0 : index
    %c0_0 = arith.constant 0 : index
    %0 = vector.load %arg0[%c0, %c0_0] : memref<8x32xf32, #tpu.memory_space<vmem>>, vector<8x32xf32>
    %c0_1 = arith.constant 0 : index
    %c0_2 = arith.constant 0 : index
    %1 = vector.load %arg1[%c0_1, %c0_2] : memref<32x512xf32, #tpu.memory_space<vmem>>, vector<32x512xf32>
    %cst = arith.constant dense<0.000000e+00> : vector<8x512xf32>
    %2 = tpu.matmul %0, %1, %cst {dimension_numbers = #tpu.dot_dimension_numbers<[1], [0], [0], [1], [0, 0, 1, 1], [], []>} : vector<8x32xf32>, vector<32x512xf32>, vector<8x512xf32> -> vector<8x512xf32>
    %c0_3 = arith.constant 0 : index
    %c0_4 = arith.constant 0 : index
    %3 = vector.load %arg3[%c0_3, %c0_4] : memref<1x512xf32, #tpu.memory_space<vmem>>, vector<1x512xf32>
    %4 = vector.broadcast %3 : vector<1x512xf32> to vector<8x512xf32>
    %5 = arith.addf %2, %4 : vector<8x512xf32>
    %c0_5 = arith.constant 0 : index
    %c0_6 = arith.constant 0 : index
    %6 = vector.load %arg6[%c0_5, %c0_6] : memref<1x512xf32, #tpu.memory_space<vmem>>, vector<1x512xf32>
    %cst_7 = arith.constant 0.000000e+00 : f32
    %7 = vector.broadcast %cst_7 : f32 to vector<1x128xf32>
    %8 = vector.extract_strided_slice %5 {offsets = [0, 0], sizes = [1, 512], strides = [1, 1]} : vector<8x512xf32> to vector<1x512xf32>
    %c0_8 = arith.constant 0 : index
    %c0_9 = arith.constant 0 : index
    %9 = vector.load %arg2[%c0_8, %c0_9] : memref<128x512xf32, #tpu.memory_space<vmem>>, vector<128x512xf32>
    %cst_10 = arith.constant dense<0.000000e+00> : vector<1x512xf32>
    %10 = tpu.matmul %7, %9, %cst_10 {dimension_numbers = #tpu.dot_dimension_numbers<[1], [0], [0], [1], [0, 0, 1, 1], [], []>} : vector<1x128xf32>, vector<128x512xf32>, vector<1x512xf32> -> vector<1x512xf32>
    %11 = arith.addf %8, %10 : vector<1x512xf32>
    %12 = vector.extract_strided_slice %11 {offsets = [0, 0], sizes = [1, 128], strides = [1, 1]} : vector<1x512xf32> to vector<1x128xf32>
    %13 = arith.negf %12 : vector<1x128xf32>
    %14 = math.exp %13 : vector<1x128xf32>
    %cst_11 = arith.constant 1.000000e+00 : f32
    %15 = vector.broadcast %cst_11 : f32 to vector<1x128xf32>
    %16 = arith.addf %15, %14 : vector<1x128xf32>
    %17 = arith.divf %15, %16 : vector<1x128xf32>
    %18 = vector.extract_strided_slice %11 {offsets = [0, 128], sizes = [1, 128], strides = [1, 1]} : vector<1x512xf32> to vector<1x128xf32>
    %19 = arith.negf %18 : vector<1x128xf32>
    %20 = math.exp %19 : vector<1x128xf32>
    %cst_12 = arith.constant 1.000000e+00 : f32
    %21 = vector.broadcast %cst_12 : f32 to vector<1x128xf32>
    %22 = arith.addf %21, %20 : vector<1x128xf32>
    %23 = arith.divf %21, %22 : vector<1x128xf32>
    %24 = vector.extract_strided_slice %11 {offsets = [0, 256], sizes = [1, 128], strides = [1, 1]} : vector<1x512xf32> to vector<1x128xf32>
    %25 = math.tanh %24 : vector<1x128xf32>
    %26 = vector.extract_strided_slice %11 {offsets = [0, 384], sizes = [1, 128], strides = [1, 1]} : vector<1x512xf32> to vector<1x128xf32>
    %27 = arith.negf %26 : vector<1x128xf32>
    %28 = math.exp %27 : vector<1x128xf32>
    %cst_13 = arith.constant 1.000000e+00 : f32
    %29 = vector.broadcast %cst_13 : f32 to vector<1x128xf32>
    %30 = arith.addf %29, %28 : vector<1x128xf32>
    %31 = arith.divf %29, %30 : vector<1x128xf32>
    %32 = arith.mulf %23, %7 : vector<1x128xf32>
    %33 = arith.mulf %17, %25 : vector<1x128xf32>
    %34 = arith.addf %32, %33 : vector<1x128xf32>
    %35 = math.tanh %34 : vector<1x128xf32>
    %36 = arith.mulf %31, %35 : vector<1x128xf32>
    %c0_14 = arith.constant 0 : index
    %c0_15 = arith.constant 0 : index
    %37 = vector.load %arg4[%c0_14, %c0_15] : memref<128x512xf32, #tpu.memory_space<vmem>>, vector<128x512xf32>
    %cst_16 = arith.constant dense<0.000000e+00> : vector<1x512xf32>
    %38 = tpu.matmul %36, %37, %cst_16 {dimension_numbers = #tpu.dot_dimension_numbers<[1], [0], [0], [1], [0, 0, 1, 1], [], []>} : vector<1x128xf32>, vector<128x512xf32>, vector<1x512xf32> -> vector<1x512xf32>
    %39 = arith.addf %38, %6 : vector<1x512xf32>
    %c0_17 = arith.constant 0 : index
    %c0_18 = arith.constant 0 : index
    %40 = vector.load %arg5[%c0_17, %c0_18] : memref<128x512xf32, #tpu.memory_space<vmem>>, vector<128x512xf32>
    %cst_19 = arith.constant dense<0.000000e+00> : vector<1x512xf32>
    %41 = tpu.matmul %7, %40, %cst_19 {dimension_numbers = #tpu.dot_dimension_numbers<[1], [0], [0], [1], [0, 0, 1, 1], [], []>} : vector<1x128xf32>, vector<128x512xf32>, vector<1x512xf32> -> vector<1x512xf32>
    %42 = arith.addf %39, %41 : vector<1x512xf32>
    %43 = vector.extract_strided_slice %42 {offsets = [0, 0], sizes = [1, 128], strides = [1, 1]} : vector<1x512xf32> to vector<1x128xf32>
    %44 = arith.negf %43 : vector<1x128xf32>
    %45 = math.exp %44 : vector<1x128xf32>
    %cst_20 = arith.constant 1.000000e+00 : f32
    %46 = vector.broadcast %cst_20 : f32 to vector<1x128xf32>
    %47 = arith.addf %46, %45 : vector<1x128xf32>
    %48 = arith.divf %46, %47 : vector<1x128xf32>
    %49 = vector.extract_strided_slice %42 {offsets = [0, 128], sizes = [1, 128], strides = [1, 1]} : vector<1x512xf32> to vector<1x128xf32>
    %50 = arith.negf %49 : vector<1x128xf32>
    %51 = math.exp %50 : vector<1x128xf32>
    %cst_21 = arith.constant 1.000000e+00 : f32
    %52 = vector.broadcast %cst_21 : f32 to vector<1x128xf32>
    %53 = arith.addf %52, %51 : vector<1x128xf32>
    %54 = arith.divf %52, %53 : vector<1x128xf32>
    %55 = vector.extract_strided_slice %42 {offsets = [0, 256], sizes = [1, 128], strides = [1, 1]} : vector<1x512xf32> to vector<1x128xf32>
    %56 = math.tanh %55 : vector<1x128xf32>
    %57 = vector.extract_strided_slice %42 {offsets = [0, 384], sizes = [1, 128], strides = [1, 1]} : vector<1x512xf32> to vector<1x128xf32>
    %58 = arith.negf %57 : vector<1x128xf32>
    %59 = math.exp %58 : vector<1x128xf32>
    %cst_22 = arith.constant 1.000000e+00 : f32
    %60 = vector.broadcast %cst_22 : f32 to vector<1x128xf32>
    %61 = arith.addf %60, %59 : vector<1x128xf32>
    %62 = arith.divf %60, %61 : vector<1x128xf32>
    %63 = arith.mulf %54, %7 : vector<1x128xf32>
    %64 = arith.mulf %48, %56 : vector<1x128xf32>
    %65 = arith.addf %63, %64 : vector<1x128xf32>
    %66 = math.tanh %65 : vector<1x128xf32>
    %67 = arith.mulf %62, %66 : vector<1x128xf32>
    %68 = vector.extract_strided_slice %5 {offsets = [1, 0], sizes = [1, 512], strides = [1, 1]} : vector<8x512xf32> to vector<1x512xf32>
    %c0_23 = arith.constant 0 : index
    %c0_24 = arith.constant 0 : index
    %69 = vector.load %arg2[%c0_23, %c0_24] : memref<128x512xf32, #tpu.memory_space<vmem>>, vector<128x512xf32>
    %cst_25 = arith.constant dense<0.000000e+00> : vector<1x512xf32>
    %70 = tpu.matmul %36, %69, %cst_25 {dimension_numbers = #tpu.dot_dimension_numbers<[1], [0], [0], [1], [0, 0, 1, 1], [], []>} : vector<1x128xf32>, vector<128x512xf32>, vector<1x512xf32> -> vector<1x512xf32>
    %71 = arith.addf %68, %70 : vector<1x512xf32>
    %72 = vector.extract_strided_slice %71 {offsets = [0, 0], sizes = [1, 128], strides = [1, 1]} : vector<1x512xf32> to vector<1x128xf32>
    %73 = arith.negf %72 : vector<1x128xf32>
    %74 = math.exp %73 : vector<1x128xf32>
    %cst_26 = arith.constant 1.000000e+00 : f32
    %75 = vector.broadcast %cst_26 : f32 to vector<1x128xf32>
    %76 = arith.addf %75, %74 : vector<1x128xf32>
    %77 = arith.divf %75, %76 : vector<1x128xf32>
    %78 = vector.extract_strided_slice %71 {offsets = [0, 128], sizes = [1, 128], strides = [1, 1]} : vector<1x512xf32> to vector<1x128xf32>
    %79 = arith.negf %78 : vector<1x128xf32>
    %80 = math.exp %79 : vector<1x128xf32>
    %cst_27 = arith.constant 1.000000e+00 : f32
    %81 = vector.broadcast %cst_27 : f32 to vector<1x128xf32>
    %82 = arith.addf %81, %80 : vector<1x128xf32>
    %83 = arith.divf %81, %82 : vector<1x128xf32>
    %84 = vector.extract_strided_slice %71 {offsets = [0, 256], sizes = [1, 128], strides = [1, 1]} : vector<1x512xf32> to vector<1x128xf32>
    %85 = math.tanh %84 : vector<1x128xf32>
    %86 = vector.extract_strided_slice %71 {offsets = [0, 384], sizes = [1, 128], strides = [1, 1]} : vector<1x512xf32> to vector<1x128xf32>
    %87 = arith.negf %86 : vector<1x128xf32>
    %88 = math.exp %87 : vector<1x128xf32>
    %cst_28 = arith.constant 1.000000e+00 : f32
    %89 = vector.broadcast %cst_28 : f32 to vector<1x128xf32>
    %90 = arith.addf %89, %88 : vector<1x128xf32>
    %91 = arith.divf %89, %90 : vector<1x128xf32>
    %92 = arith.mulf %83, %34 : vector<1x128xf32>
    %93 = arith.mulf %77, %85 : vector<1x128xf32>
    %94 = arith.addf %92, %93 : vector<1x128xf32>
    %95 = math.tanh %94 : vector<1x128xf32>
    %96 = arith.mulf %91, %95 : vector<1x128xf32>
    %c0_29 = arith.constant 0 : index
    %c0_30 = arith.constant 0 : index
    %97 = vector.load %arg4[%c0_29, %c0_30] : memref<128x512xf32, #tpu.memory_space<vmem>>, vector<128x512xf32>
    %cst_31 = arith.constant dense<0.000000e+00> : vector<1x512xf32>
    %98 = tpu.matmul %96, %97, %cst_31 {dimension_numbers = #tpu.dot_dimension_numbers<[1], [0], [0], [1], [0, 0, 1, 1], [], []>} : vector<1x128xf32>, vector<128x512xf32>, vector<1x512xf32> -> vector<1x512xf32>
    %99 = arith.addf %98, %6 : vector<1x512xf32>
    %c0_32 = arith.constant 0 : index
    %c0_33 = arith.constant 0 : index
    %100 = vector.load %arg5[%c0_32, %c0_33] : memref<128x512xf32, #tpu.memory_space<vmem>>, vector<128x512xf32>
    %cst_34 = arith.constant dense<0.000000e+00> : vector<1x512xf32>
    %101 = tpu.matmul %67, %100, %cst_34 {dimension_numbers = #tpu.dot_dimension_numbers<[1], [0], [0], [1], [0, 0, 1, 1], [], []>} : vector<1x128xf32>, vector<128x512xf32>, vector<1x512xf32> -> vector<1x512xf32>
    %102 = arith.addf %99, %101 : vector<1x512xf32>
    %103 = vector.extract_strided_slice %102 {offsets = [0, 0], sizes = [1, 128], strides = [1, 1]} : vector<1x512xf32> to vector<1x128xf32>
    %104 = arith.negf %103 : vector<1x128xf32>
    %105 = math.exp %104 : vector<1x128xf32>
    %cst_35 = arith.constant 1.000000e+00 : f32
    %106 = vector.broadcast %cst_35 : f32 to vector<1x128xf32>
    %107 = arith.addf %106, %105 : vector<1x128xf32>
    %108 = arith.divf %106, %107 : vector<1x128xf32>
    %109 = vector.extract_strided_slice %102 {offsets = [0, 128], sizes = [1, 128], strides = [1, 1]} : vector<1x512xf32> to vector<1x128xf32>
    %110 = arith.negf %109 : vector<1x128xf32>
    %111 = math.exp %110 : vector<1x128xf32>
    %cst_36 = arith.constant 1.000000e+00 : f32
    %112 = vector.broadcast %cst_36 : f32 to vector<1x128xf32>
    %113 = arith.addf %112, %111 : vector<1x128xf32>
    %114 = arith.divf %112, %113 : vector<1x128xf32>
    %115 = vector.extract_strided_slice %102 {offsets = [0, 256], sizes = [1, 128], strides = [1, 1]} : vector<1x512xf32> to vector<1x128xf32>
    %116 = math.tanh %115 : vector<1x128xf32>
    %117 = vector.extract_strided_slice %102 {offsets = [0, 384], sizes = [1, 128], strides = [1, 1]} : vector<1x512xf32> to vector<1x128xf32>
    %118 = arith.negf %117 : vector<1x128xf32>
    %119 = math.exp %118 : vector<1x128xf32>
    %cst_37 = arith.constant 1.000000e+00 : f32
    %120 = vector.broadcast %cst_37 : f32 to vector<1x128xf32>
    %121 = arith.addf %120, %119 : vector<1x128xf32>
    %122 = arith.divf %120, %121 : vector<1x128xf32>
    %123 = arith.mulf %114, %65 : vector<1x128xf32>
    %124 = arith.mulf %108, %116 : vector<1x128xf32>
    %125 = arith.addf %123, %124 : vector<1x128xf32>
    %126 = math.tanh %125 : vector<1x128xf32>
    %127 = arith.mulf %122, %126 : vector<1x128xf32>
    %128 = vector.extract_strided_slice %5 {offsets = [2, 0], sizes = [1, 512], strides = [1, 1]} : vector<8x512xf32> to vector<1x512xf32>
    %c0_38 = arith.constant 0 : index
    %c0_39 = arith.constant 0 : index
    %129 = vector.load %arg2[%c0_38, %c0_39] : memref<128x512xf32, #tpu.memory_space<vmem>>, vector<128x512xf32>
    %cst_40 = arith.constant dense<0.000000e+00> : vector<1x512xf32>
    %130 = tpu.matmul %96, %129, %cst_40 {dimension_numbers = #tpu.dot_dimension_numbers<[1], [0], [0], [1], [0, 0, 1, 1], [], []>} : vector<1x128xf32>, vector<128x512xf32>, vector<1x512xf32> -> vector<1x512xf32>
    %131 = arith.addf %128, %130 : vector<1x512xf32>
    %132 = vector.extract_strided_slice %131 {offsets = [0, 0], sizes = [1, 128], strides = [1, 1]} : vector<1x512xf32> to vector<1x128xf32>
    %133 = arith.negf %132 : vector<1x128xf32>
    %134 = math.exp %133 : vector<1x128xf32>
    %cst_41 = arith.constant 1.000000e+00 : f32
    %135 = vector.broadcast %cst_41 : f32 to vector<1x128xf32>
    %136 = arith.addf %135, %134 : vector<1x128xf32>
    %137 = arith.divf %135, %136 : vector<1x128xf32>
    %138 = vector.extract_strided_slice %131 {offsets = [0, 128], sizes = [1, 128], strides = [1, 1]} : vector<1x512xf32> to vector<1x128xf32>
    %139 = arith.negf %138 : vector<1x128xf32>
    %140 = math.exp %139 : vector<1x128xf32>
    %cst_42 = arith.constant 1.000000e+00 : f32
    %141 = vector.broadcast %cst_42 : f32 to vector<1x128xf32>
    %142 = arith.addf %141, %140 : vector<1x128xf32>
    %143 = arith.divf %141, %142 : vector<1x128xf32>
    %144 = vector.extract_strided_slice %131 {offsets = [0, 256], sizes = [1, 128], strides = [1, 1]} : vector<1x512xf32> to vector<1x128xf32>
    %145 = math.tanh %144 : vector<1x128xf32>
    %146 = vector.extract_strided_slice %131 {offsets = [0, 384], sizes = [1, 128], strides = [1, 1]} : vector<1x512xf32> to vector<1x128xf32>
    %147 = arith.negf %146 : vector<1x128xf32>
    %148 = math.exp %147 : vector<1x128xf32>
    %cst_43 = arith.constant 1.000000e+00 : f32
    %149 = vector.broadcast %cst_43 : f32 to vector<1x128xf32>
    %150 = arith.addf %149, %148 : vector<1x128xf32>
    %151 = arith.divf %149, %150 : vector<1x128xf32>
    %152 = arith.mulf %143, %94 : vector<1x128xf32>
    %153 = arith.mulf %137, %145 : vector<1x128xf32>
    %154 = arith.addf %152, %153 : vector<1x128xf32>
    %155 = math.tanh %154 : vector<1x128xf32>
    %156 = arith.mulf %151, %155 : vector<1x128xf32>
    %c0_44 = arith.constant 0 : index
    %c0_45 = arith.constant 0 : index
    %157 = vector.load %arg4[%c0_44, %c0_45] : memref<128x512xf32, #tpu.memory_space<vmem>>, vector<128x512xf32>
    %cst_46 = arith.constant dense<0.000000e+00> : vector<1x512xf32>
    %158 = tpu.matmul %156, %157, %cst_46 {dimension_numbers = #tpu.dot_dimension_numbers<[1], [0], [0], [1], [0, 0, 1, 1], [], []>} : vector<1x128xf32>, vector<128x512xf32>, vector<1x512xf32> -> vector<1x512xf32>
    %159 = arith.addf %158, %6 : vector<1x512xf32>
    %c0_47 = arith.constant 0 : index
    %c0_48 = arith.constant 0 : index
    %160 = vector.load %arg5[%c0_47, %c0_48] : memref<128x512xf32, #tpu.memory_space<vmem>>, vector<128x512xf32>
    %cst_49 = arith.constant dense<0.000000e+00> : vector<1x512xf32>
    %161 = tpu.matmul %127, %160, %cst_49 {dimension_numbers = #tpu.dot_dimension_numbers<[1], [0], [0], [1], [0, 0, 1, 1], [], []>} : vector<1x128xf32>, vector<128x512xf32>, vector<1x512xf32> -> vector<1x512xf32>
    %162 = arith.addf %159, %161 : vector<1x512xf32>
    %163 = vector.extract_strided_slice %162 {offsets = [0, 0], sizes = [1, 128], strides = [1, 1]} : vector<1x512xf32> to vector<1x128xf32>
    %164 = arith.negf %163 : vector<1x128xf32>
    %165 = math.exp %164 : vector<1x128xf32>
    %cst_50 = arith.constant 1.000000e+00 : f32
    %166 = vector.broadcast %cst_50 : f32 to vector<1x128xf32>
    %167 = arith.addf %166, %165 : vector<1x128xf32>
    %168 = arith.divf %166, %167 : vector<1x128xf32>
    %169 = vector.extract_strided_slice %162 {offsets = [0, 128], sizes = [1, 128], strides = [1, 1]} : vector<1x512xf32> to vector<1x128xf32>
    %170 = arith.negf %169 : vector<1x128xf32>
    %171 = math.exp %170 : vector<1x128xf32>
    %cst_51 = arith.constant 1.000000e+00 : f32
    %172 = vector.broadcast %cst_51 : f32 to vector<1x128xf32>
    %173 = arith.addf %172, %171 : vector<1x128xf32>
    %174 = arith.divf %172, %173 : vector<1x128xf32>
    %175 = vector.extract_strided_slice %162 {offsets = [0, 256], sizes = [1, 128], strides = [1, 1]} : vector<1x512xf32> to vector<1x128xf32>
    %176 = math.tanh %175 : vector<1x128xf32>
    %177 = vector.extract_strided_slice %162 {offsets = [0, 384], sizes = [1, 128], strides = [1, 1]} : vector<1x512xf32> to vector<1x128xf32>
    %178 = arith.negf %177 : vector<1x128xf32>
    %179 = math.exp %178 : vector<1x128xf32>
    %cst_52 = arith.constant 1.000000e+00 : f32
    %180 = vector.broadcast %cst_52 : f32 to vector<1x128xf32>
    %181 = arith.addf %180, %179 : vector<1x128xf32>
    %182 = arith.divf %180, %181 : vector<1x128xf32>
    %183 = arith.mulf %174, %125 : vector<1x128xf32>
    %184 = arith.mulf %168, %176 : vector<1x128xf32>
    %185 = arith.addf %183, %184 : vector<1x128xf32>
    %186 = math.tanh %185 : vector<1x128xf32>
    %187 = arith.mulf %182, %186 : vector<1x128xf32>
    %188 = vector.extract_strided_slice %5 {offsets = [3, 0], sizes = [1, 512], strides = [1, 1]} : vector<8x512xf32> to vector<1x512xf32>
    %c0_53 = arith.constant 0 : index
    %c0_54 = arith.constant 0 : index
    %189 = vector.load %arg2[%c0_53, %c0_54] : memref<128x512xf32, #tpu.memory_space<vmem>>, vector<128x512xf32>
    %cst_55 = arith.constant dense<0.000000e+00> : vector<1x512xf32>
    %190 = tpu.matmul %156, %189, %cst_55 {dimension_numbers = #tpu.dot_dimension_numbers<[1], [0], [0], [1], [0, 0, 1, 1], [], []>} : vector<1x128xf32>, vector<128x512xf32>, vector<1x512xf32> -> vector<1x512xf32>
    %191 = arith.addf %188, %190 : vector<1x512xf32>
    %192 = vector.extract_strided_slice %191 {offsets = [0, 0], sizes = [1, 128], strides = [1, 1]} : vector<1x512xf32> to vector<1x128xf32>
    %193 = arith.negf %192 : vector<1x128xf32>
    %194 = math.exp %193 : vector<1x128xf32>
    %cst_56 = arith.constant 1.000000e+00 : f32
    %195 = vector.broadcast %cst_56 : f32 to vector<1x128xf32>
    %196 = arith.addf %195, %194 : vector<1x128xf32>
    %197 = arith.divf %195, %196 : vector<1x128xf32>
    %198 = vector.extract_strided_slice %191 {offsets = [0, 128], sizes = [1, 128], strides = [1, 1]} : vector<1x512xf32> to vector<1x128xf32>
    %199 = arith.negf %198 : vector<1x128xf32>
    %200 = math.exp %199 : vector<1x128xf32>
    %cst_57 = arith.constant 1.000000e+00 : f32
    %201 = vector.broadcast %cst_57 : f32 to vector<1x128xf32>
    %202 = arith.addf %201, %200 : vector<1x128xf32>
    %203 = arith.divf %201, %202 : vector<1x128xf32>
    %204 = vector.extract_strided_slice %191 {offsets = [0, 256], sizes = [1, 128], strides = [1, 1]} : vector<1x512xf32> to vector<1x128xf32>
    %205 = math.tanh %204 : vector<1x128xf32>
    %206 = vector.extract_strided_slice %191 {offsets = [0, 384], sizes = [1, 128], strides = [1, 1]} : vector<1x512xf32> to vector<1x128xf32>
    %207 = arith.negf %206 : vector<1x128xf32>
    %208 = math.exp %207 : vector<1x128xf32>
    %cst_58 = arith.constant 1.000000e+00 : f32
    %209 = vector.broadcast %cst_58 : f32 to vector<1x128xf32>
    %210 = arith.addf %209, %208 : vector<1x128xf32>
    %211 = arith.divf %209, %210 : vector<1x128xf32>
    %212 = arith.mulf %203, %154 : vector<1x128xf32>
    %213 = arith.mulf %197, %205 : vector<1x128xf32>
    %214 = arith.addf %212, %213 : vector<1x128xf32>
    %215 = math.tanh %214 : vector<1x128xf32>
    %216 = arith.mulf %211, %215 : vector<1x128xf32>
    %c0_59 = arith.constant 0 : index
    %c0_60 = arith.constant 0 : index
    %217 = vector.load %arg4[%c0_59, %c0_60] : memref<128x512xf32, #tpu.memory_space<vmem>>, vector<128x512xf32>
    %cst_61 = arith.constant dense<0.000000e+00> : vector<1x512xf32>
    %218 = tpu.matmul %216, %217, %cst_61 {dimension_numbers = #tpu.dot_dimension_numbers<[1], [0], [0], [1], [0, 0, 1, 1], [], []>} : vector<1x128xf32>, vector<128x512xf32>, vector<1x512xf32> -> vector<1x512xf32>
    %219 = arith.addf %218, %6 : vector<1x512xf32>
    %c0_62 = arith.constant 0 : index
    %c0_63 = arith.constant 0 : index
    %220 = vector.load %arg5[%c0_62, %c0_63] : memref<128x512xf32, #tpu.memory_space<vmem>>, vector<128x512xf32>
    %cst_64 = arith.constant dense<0.000000e+00> : vector<1x512xf32>
    %221 = tpu.matmul %187, %220, %cst_64 {dimension_numbers = #tpu.dot_dimension_numbers<[1], [0], [0], [1], [0, 0, 1, 1], [], []>} : vector<1x128xf32>, vector<128x512xf32>, vector<1x512xf32> -> vector<1x512xf32>
    %222 = arith.addf %219, %221 : vector<1x512xf32>
    %223 = vector.extract_strided_slice %222 {offsets = [0, 0], sizes = [1, 128], strides = [1, 1]} : vector<1x512xf32> to vector<1x128xf32>
    %224 = arith.negf %223 : vector<1x128xf32>
    %225 = math.exp %224 : vector<1x128xf32>
    %cst_65 = arith.constant 1.000000e+00 : f32
    %226 = vector.broadcast %cst_65 : f32 to vector<1x128xf32>
    %227 = arith.addf %226, %225 : vector<1x128xf32>
    %228 = arith.divf %226, %227 : vector<1x128xf32>
    %229 = vector.extract_strided_slice %222 {offsets = [0, 128], sizes = [1, 128], strides = [1, 1]} : vector<1x512xf32> to vector<1x128xf32>
    %230 = arith.negf %229 : vector<1x128xf32>
    %231 = math.exp %230 : vector<1x128xf32>
    %cst_66 = arith.constant 1.000000e+00 : f32
    %232 = vector.broadcast %cst_66 : f32 to vector<1x128xf32>
    %233 = arith.addf %232, %231 : vector<1x128xf32>
    %234 = arith.divf %232, %233 : vector<1x128xf32>
    %235 = vector.extract_strided_slice %222 {offsets = [0, 256], sizes = [1, 128], strides = [1, 1]} : vector<1x512xf32> to vector<1x128xf32>
    %236 = math.tanh %235 : vector<1x128xf32>
    %237 = vector.extract_strided_slice %222 {offsets = [0, 384], sizes = [1, 128], strides = [1, 1]} : vector<1x512xf32> to vector<1x128xf32>
    %238 = arith.negf %237 : vector<1x128xf32>
    %239 = math.exp %238 : vector<1x128xf32>
    %cst_67 = arith.constant 1.000000e+00 : f32
    %240 = vector.broadcast %cst_67 : f32 to vector<1x128xf32>
    %241 = arith.addf %240, %239 : vector<1x128xf32>
    %242 = arith.divf %240, %241 : vector<1x128xf32>
    %243 = arith.mulf %234, %185 : vector<1x128xf32>
    %244 = arith.mulf %228, %236 : vector<1x128xf32>
    %245 = arith.addf %243, %244 : vector<1x128xf32>
    %246 = math.tanh %245 : vector<1x128xf32>
    %247 = arith.mulf %242, %246 : vector<1x128xf32>
    %248 = vector.extract_strided_slice %5 {offsets = [4, 0], sizes = [1, 512], strides = [1, 1]} : vector<8x512xf32> to vector<1x512xf32>
    %c0_68 = arith.constant 0 : index
    %c0_69 = arith.constant 0 : index
    %249 = vector.load %arg2[%c0_68, %c0_69] : memref<128x512xf32, #tpu.memory_space<vmem>>, vector<128x512xf32>
    %cst_70 = arith.constant dense<0.000000e+00> : vector<1x512xf32>
    %250 = tpu.matmul %216, %249, %cst_70 {dimension_numbers = #tpu.dot_dimension_numbers<[1], [0], [0], [1], [0, 0, 1, 1], [], []>} : vector<1x128xf32>, vector<128x512xf32>, vector<1x512xf32> -> vector<1x512xf32>
    %251 = arith.addf %248, %250 : vector<1x512xf32>
    %252 = vector.extract_strided_slice %251 {offsets = [0, 0], sizes = [1, 128], strides = [1, 1]} : vector<1x512xf32> to vector<1x128xf32>
    %253 = arith.negf %252 : vector<1x128xf32>
    %254 = math.exp %253 : vector<1x128xf32>
    %cst_71 = arith.constant 1.000000e+00 : f32
    %255 = vector.broadcast %cst_71 : f32 to vector<1x128xf32>
    %256 = arith.addf %255, %254 : vector<1x128xf32>
    %257 = arith.divf %255, %256 : vector<1x128xf32>
    %258 = vector.extract_strided_slice %251 {offsets = [0, 128], sizes = [1, 128], strides = [1, 1]} : vector<1x512xf32> to vector<1x128xf32>
    %259 = arith.negf %258 : vector<1x128xf32>
    %260 = math.exp %259 : vector<1x128xf32>
    %cst_72 = arith.constant 1.000000e+00 : f32
    %261 = vector.broadcast %cst_72 : f32 to vector<1x128xf32>
    %262 = arith.addf %261, %260 : vector<1x128xf32>
    %263 = arith.divf %261, %262 : vector<1x128xf32>
    %264 = vector.extract_strided_slice %251 {offsets = [0, 256], sizes = [1, 128], strides = [1, 1]} : vector<1x512xf32> to vector<1x128xf32>
    %265 = math.tanh %264 : vector<1x128xf32>
    %266 = vector.extract_strided_slice %251 {offsets = [0, 384], sizes = [1, 128], strides = [1, 1]} : vector<1x512xf32> to vector<1x128xf32>
    %267 = arith.negf %266 : vector<1x128xf32>
    %268 = math.exp %267 : vector<1x128xf32>
    %cst_73 = arith.constant 1.000000e+00 : f32
    %269 = vector.broadcast %cst_73 : f32 to vector<1x128xf32>
    %270 = arith.addf %269, %268 : vector<1x128xf32>
    %271 = arith.divf %269, %270 : vector<1x128xf32>
    %272 = arith.mulf %263, %214 : vector<1x128xf32>
    %273 = arith.mulf %257, %265 : vector<1x128xf32>
    %274 = arith.addf %272, %273 : vector<1x128xf32>
    %275 = math.tanh %274 : vector<1x128xf32>
    %276 = arith.mulf %271, %275 : vector<1x128xf32>
    %c0_74 = arith.constant 0 : index
    %c0_75 = arith.constant 0 : index
    %277 = vector.load %arg4[%c0_74, %c0_75] : memref<128x512xf32, #tpu.memory_space<vmem>>, vector<128x512xf32>
    %cst_76 = arith.constant dense<0.000000e+00> : vector<1x512xf32>
    %278 = tpu.matmul %276, %277, %cst_76 {dimension_numbers = #tpu.dot_dimension_numbers<[1], [0], [0], [1], [0, 0, 1, 1], [], []>} : vector<1x128xf32>, vector<128x512xf32>, vector<1x512xf32> -> vector<1x512xf32>
    %279 = arith.addf %278, %6 : vector<1x512xf32>
    %c0_77 = arith.constant 0 : index
    %c0_78 = arith.constant 0 : index
    %280 = vector.load %arg5[%c0_77, %c0_78] : memref<128x512xf32, #tpu.memory_space<vmem>>, vector<128x512xf32>
    %cst_79 = arith.constant dense<0.000000e+00> : vector<1x512xf32>
    %281 = tpu.matmul %247, %280, %cst_79 {dimension_numbers = #tpu.dot_dimension_numbers<[1], [0], [0], [1], [0, 0, 1, 1], [], []>} : vector<1x128xf32>, vector<128x512xf32>, vector<1x512xf32> -> vector<1x512xf32>
    %282 = arith.addf %279, %281 : vector<1x512xf32>
    %283 = vector.extract_strided_slice %282 {offsets = [0, 0], sizes = [1, 128], strides = [1, 1]} : vector<1x512xf32> to vector<1x128xf32>
    %284 = arith.negf %283 : vector<1x128xf32>
    %285 = math.exp %284 : vector<1x128xf32>
    %cst_80 = arith.constant 1.000000e+00 : f32
    %286 = vector.broadcast %cst_80 : f32 to vector<1x128xf32>
    %287 = arith.addf %286, %285 : vector<1x128xf32>
    %288 = arith.divf %286, %287 : vector<1x128xf32>
    %289 = vector.extract_strided_slice %282 {offsets = [0, 128], sizes = [1, 128], strides = [1, 1]} : vector<1x512xf32> to vector<1x128xf32>
    %290 = arith.negf %289 : vector<1x128xf32>
    %291 = math.exp %290 : vector<1x128xf32>
    %cst_81 = arith.constant 1.000000e+00 : f32
    %292 = vector.broadcast %cst_81 : f32 to vector<1x128xf32>
    %293 = arith.addf %292, %291 : vector<1x128xf32>
    %294 = arith.divf %292, %293 : vector<1x128xf32>
    %295 = vector.extract_strided_slice %282 {offsets = [0, 256], sizes = [1, 128], strides = [1, 1]} : vector<1x512xf32> to vector<1x128xf32>
    %296 = math.tanh %295 : vector<1x128xf32>
    %297 = vector.extract_strided_slice %282 {offsets = [0, 384], sizes = [1, 128], strides = [1, 1]} : vector<1x512xf32> to vector<1x128xf32>
    %298 = arith.negf %297 : vector<1x128xf32>
    %299 = math.exp %298 : vector<1x128xf32>
    %cst_82 = arith.constant 1.000000e+00 : f32
    %300 = vector.broadcast %cst_82 : f32 to vector<1x128xf32>
    %301 = arith.addf %300, %299 : vector<1x128xf32>
    %302 = arith.divf %300, %301 : vector<1x128xf32>
    %303 = arith.mulf %294, %245 : vector<1x128xf32>
    %304 = arith.mulf %288, %296 : vector<1x128xf32>
    %305 = arith.addf %303, %304 : vector<1x128xf32>
    %306 = math.tanh %305 : vector<1x128xf32>
    %307 = arith.mulf %302, %306 : vector<1x128xf32>
    %308 = vector.extract_strided_slice %5 {offsets = [5, 0], sizes = [1, 512], strides = [1, 1]} : vector<8x512xf32> to vector<1x512xf32>
    %c0_83 = arith.constant 0 : index
    %c0_84 = arith.constant 0 : index
    %309 = vector.load %arg2[%c0_83, %c0_84] : memref<128x512xf32, #tpu.memory_space<vmem>>, vector<128x512xf32>
    %cst_85 = arith.constant dense<0.000000e+00> : vector<1x512xf32>
    %310 = tpu.matmul %276, %309, %cst_85 {dimension_numbers = #tpu.dot_dimension_numbers<[1], [0], [0], [1], [0, 0, 1, 1], [], []>} : vector<1x128xf32>, vector<128x512xf32>, vector<1x512xf32> -> vector<1x512xf32>
    %311 = arith.addf %308, %310 : vector<1x512xf32>
    %312 = vector.extract_strided_slice %311 {offsets = [0, 0], sizes = [1, 128], strides = [1, 1]} : vector<1x512xf32> to vector<1x128xf32>
    %313 = arith.negf %312 : vector<1x128xf32>
    %314 = math.exp %313 : vector<1x128xf32>
    %cst_86 = arith.constant 1.000000e+00 : f32
    %315 = vector.broadcast %cst_86 : f32 to vector<1x128xf32>
    %316 = arith.addf %315, %314 : vector<1x128xf32>
    %317 = arith.divf %315, %316 : vector<1x128xf32>
    %318 = vector.extract_strided_slice %311 {offsets = [0, 128], sizes = [1, 128], strides = [1, 1]} : vector<1x512xf32> to vector<1x128xf32>
    %319 = arith.negf %318 : vector<1x128xf32>
    %320 = math.exp %319 : vector<1x128xf32>
    %cst_87 = arith.constant 1.000000e+00 : f32
    %321 = vector.broadcast %cst_87 : f32 to vector<1x128xf32>
    %322 = arith.addf %321, %320 : vector<1x128xf32>
    %323 = arith.divf %321, %322 : vector<1x128xf32>
    %324 = vector.extract_strided_slice %311 {offsets = [0, 256], sizes = [1, 128], strides = [1, 1]} : vector<1x512xf32> to vector<1x128xf32>
    %325 = math.tanh %324 : vector<1x128xf32>
    %326 = vector.extract_strided_slice %311 {offsets = [0, 384], sizes = [1, 128], strides = [1, 1]} : vector<1x512xf32> to vector<1x128xf32>
    %327 = arith.negf %326 : vector<1x128xf32>
    %328 = math.exp %327 : vector<1x128xf32>
    %cst_88 = arith.constant 1.000000e+00 : f32
    %329 = vector.broadcast %cst_88 : f32 to vector<1x128xf32>
    %330 = arith.addf %329, %328 : vector<1x128xf32>
    %331 = arith.divf %329, %330 : vector<1x128xf32>
    %332 = arith.mulf %323, %274 : vector<1x128xf32>
    %333 = arith.mulf %317, %325 : vector<1x128xf32>
    %334 = arith.addf %332, %333 : vector<1x128xf32>
    %335 = math.tanh %334 : vector<1x128xf32>
    %336 = arith.mulf %331, %335 : vector<1x128xf32>
    %c0_89 = arith.constant 0 : index
    %c0_90 = arith.constant 0 : index
    %337 = vector.load %arg4[%c0_89, %c0_90] : memref<128x512xf32, #tpu.memory_space<vmem>>, vector<128x512xf32>
    %cst_91 = arith.constant dense<0.000000e+00> : vector<1x512xf32>
    %338 = tpu.matmul %336, %337, %cst_91 {dimension_numbers = #tpu.dot_dimension_numbers<[1], [0], [0], [1], [0, 0, 1, 1], [], []>} : vector<1x128xf32>, vector<128x512xf32>, vector<1x512xf32> -> vector<1x512xf32>
    %339 = arith.addf %338, %6 : vector<1x512xf32>
    %c0_92 = arith.constant 0 : index
    %c0_93 = arith.constant 0 : index
    %340 = vector.load %arg5[%c0_92, %c0_93] : memref<128x512xf32, #tpu.memory_space<vmem>>, vector<128x512xf32>
    %cst_94 = arith.constant dense<0.000000e+00> : vector<1x512xf32>
    %341 = tpu.matmul %307, %340, %cst_94 {dimension_numbers = #tpu.dot_dimension_numbers<[1], [0], [0], [1], [0, 0, 1, 1], [], []>} : vector<1x128xf32>, vector<128x512xf32>, vector<1x512xf32> -> vector<1x512xf32>
    %342 = arith.addf %339, %341 : vector<1x512xf32>
    %343 = vector.extract_strided_slice %342 {offsets = [0, 0], sizes = [1, 128], strides = [1, 1]} : vector<1x512xf32> to vector<1x128xf32>
    %344 = arith.negf %343 : vector<1x128xf32>
    %345 = math.exp %344 : vector<1x128xf32>
    %cst_95 = arith.constant 1.000000e+00 : f32
    %346 = vector.broadcast %cst_95 : f32 to vector<1x128xf32>
    %347 = arith.addf %346, %345 : vector<1x128xf32>
    %348 = arith.divf %346, %347 : vector<1x128xf32>
    %349 = vector.extract_strided_slice %342 {offsets = [0, 128], sizes = [1, 128], strides = [1, 1]} : vector<1x512xf32> to vector<1x128xf32>
    %350 = arith.negf %349 : vector<1x128xf32>
    %351 = math.exp %350 : vector<1x128xf32>
    %cst_96 = arith.constant 1.000000e+00 : f32
    %352 = vector.broadcast %cst_96 : f32 to vector<1x128xf32>
    %353 = arith.addf %352, %351 : vector<1x128xf32>
    %354 = arith.divf %352, %353 : vector<1x128xf32>
    %355 = vector.extract_strided_slice %342 {offsets = [0, 256], sizes = [1, 128], strides = [1, 1]} : vector<1x512xf32> to vector<1x128xf32>
    %356 = math.tanh %355 : vector<1x128xf32>
    %357 = vector.extract_strided_slice %342 {offsets = [0, 384], sizes = [1, 128], strides = [1, 1]} : vector<1x512xf32> to vector<1x128xf32>
    %358 = arith.negf %357 : vector<1x128xf32>
    %359 = math.exp %358 : vector<1x128xf32>
    %cst_97 = arith.constant 1.000000e+00 : f32
    %360 = vector.broadcast %cst_97 : f32 to vector<1x128xf32>
    %361 = arith.addf %360, %359 : vector<1x128xf32>
    %362 = arith.divf %360, %361 : vector<1x128xf32>
    %363 = arith.mulf %354, %305 : vector<1x128xf32>
    %364 = arith.mulf %348, %356 : vector<1x128xf32>
    %365 = arith.addf %363, %364 : vector<1x128xf32>
    %366 = math.tanh %365 : vector<1x128xf32>
    %367 = arith.mulf %362, %366 : vector<1x128xf32>
    %368 = vector.extract_strided_slice %5 {offsets = [6, 0], sizes = [1, 512], strides = [1, 1]} : vector<8x512xf32> to vector<1x512xf32>
    %c0_98 = arith.constant 0 : index
    %c0_99 = arith.constant 0 : index
    %369 = vector.load %arg2[%c0_98, %c0_99] : memref<128x512xf32, #tpu.memory_space<vmem>>, vector<128x512xf32>
    %cst_100 = arith.constant dense<0.000000e+00> : vector<1x512xf32>
    %370 = tpu.matmul %336, %369, %cst_100 {dimension_numbers = #tpu.dot_dimension_numbers<[1], [0], [0], [1], [0, 0, 1, 1], [], []>} : vector<1x128xf32>, vector<128x512xf32>, vector<1x512xf32> -> vector<1x512xf32>
    %371 = arith.addf %368, %370 : vector<1x512xf32>
    %372 = vector.extract_strided_slice %371 {offsets = [0, 0], sizes = [1, 128], strides = [1, 1]} : vector<1x512xf32> to vector<1x128xf32>
    %373 = arith.negf %372 : vector<1x128xf32>
    %374 = math.exp %373 : vector<1x128xf32>
    %cst_101 = arith.constant 1.000000e+00 : f32
    %375 = vector.broadcast %cst_101 : f32 to vector<1x128xf32>
    %376 = arith.addf %375, %374 : vector<1x128xf32>
    %377 = arith.divf %375, %376 : vector<1x128xf32>
    %378 = vector.extract_strided_slice %371 {offsets = [0, 128], sizes = [1, 128], strides = [1, 1]} : vector<1x512xf32> to vector<1x128xf32>
    %379 = arith.negf %378 : vector<1x128xf32>
    %380 = math.exp %379 : vector<1x128xf32>
    %cst_102 = arith.constant 1.000000e+00 : f32
    %381 = vector.broadcast %cst_102 : f32 to vector<1x128xf32>
    %382 = arith.addf %381, %380 : vector<1x128xf32>
    %383 = arith.divf %381, %382 : vector<1x128xf32>
    %384 = vector.extract_strided_slice %371 {offsets = [0, 256], sizes = [1, 128], strides = [1, 1]} : vector<1x512xf32> to vector<1x128xf32>
    %385 = math.tanh %384 : vector<1x128xf32>
    %386 = vector.extract_strided_slice %371 {offsets = [0, 384], sizes = [1, 128], strides = [1, 1]} : vector<1x512xf32> to vector<1x128xf32>
    %387 = arith.negf %386 : vector<1x128xf32>
    %388 = math.exp %387 : vector<1x128xf32>
    %cst_103 = arith.constant 1.000000e+00 : f32
    %389 = vector.broadcast %cst_103 : f32 to vector<1x128xf32>
    %390 = arith.addf %389, %388 : vector<1x128xf32>
    %391 = arith.divf %389, %390 : vector<1x128xf32>
    %392 = arith.mulf %383, %334 : vector<1x128xf32>
    %393 = arith.mulf %377, %385 : vector<1x128xf32>
    %394 = arith.addf %392, %393 : vector<1x128xf32>
    %395 = math.tanh %394 : vector<1x128xf32>
    %396 = arith.mulf %391, %395 : vector<1x128xf32>
    %c0_104 = arith.constant 0 : index
    %c0_105 = arith.constant 0 : index
    %397 = vector.load %arg4[%c0_104, %c0_105] : memref<128x512xf32, #tpu.memory_space<vmem>>, vector<128x512xf32>
    %cst_106 = arith.constant dense<0.000000e+00> : vector<1x512xf32>
    %398 = tpu.matmul %396, %397, %cst_106 {dimension_numbers = #tpu.dot_dimension_numbers<[1], [0], [0], [1], [0, 0, 1, 1], [], []>} : vector<1x128xf32>, vector<128x512xf32>, vector<1x512xf32> -> vector<1x512xf32>
    %399 = arith.addf %398, %6 : vector<1x512xf32>
    %c0_107 = arith.constant 0 : index
    %c0_108 = arith.constant 0 : index
    %400 = vector.load %arg5[%c0_107, %c0_108] : memref<128x512xf32, #tpu.memory_space<vmem>>, vector<128x512xf32>
    %cst_109 = arith.constant dense<0.000000e+00> : vector<1x512xf32>
    %401 = tpu.matmul %367, %400, %cst_109 {dimension_numbers = #tpu.dot_dimension_numbers<[1], [0], [0], [1], [0, 0, 1, 1], [], []>} : vector<1x128xf32>, vector<128x512xf32>, vector<1x512xf32> -> vector<1x512xf32>
    %402 = arith.addf %399, %401 : vector<1x512xf32>
    %403 = vector.extract_strided_slice %402 {offsets = [0, 0], sizes = [1, 128], strides = [1, 1]} : vector<1x512xf32> to vector<1x128xf32>
    %404 = arith.negf %403 : vector<1x128xf32>
    %405 = math.exp %404 : vector<1x128xf32>
    %cst_110 = arith.constant 1.000000e+00 : f32
    %406 = vector.broadcast %cst_110 : f32 to vector<1x128xf32>
    %407 = arith.addf %406, %405 : vector<1x128xf32>
    %408 = arith.divf %406, %407 : vector<1x128xf32>
    %409 = vector.extract_strided_slice %402 {offsets = [0, 128], sizes = [1, 128], strides = [1, 1]} : vector<1x512xf32> to vector<1x128xf32>
    %410 = arith.negf %409 : vector<1x128xf32>
    %411 = math.exp %410 : vector<1x128xf32>
    %cst_111 = arith.constant 1.000000e+00 : f32
    %412 = vector.broadcast %cst_111 : f32 to vector<1x128xf32>
    %413 = arith.addf %412, %411 : vector<1x128xf32>
    %414 = arith.divf %412, %413 : vector<1x128xf32>
    %415 = vector.extract_strided_slice %402 {offsets = [0, 256], sizes = [1, 128], strides = [1, 1]} : vector<1x512xf32> to vector<1x128xf32>
    %416 = math.tanh %415 : vector<1x128xf32>
    %417 = vector.extract_strided_slice %402 {offsets = [0, 384], sizes = [1, 128], strides = [1, 1]} : vector<1x512xf32> to vector<1x128xf32>
    %418 = arith.negf %417 : vector<1x128xf32>
    %419 = math.exp %418 : vector<1x128xf32>
    %cst_112 = arith.constant 1.000000e+00 : f32
    %420 = vector.broadcast %cst_112 : f32 to vector<1x128xf32>
    %421 = arith.addf %420, %419 : vector<1x128xf32>
    %422 = arith.divf %420, %421 : vector<1x128xf32>
    %423 = arith.mulf %414, %365 : vector<1x128xf32>
    %424 = arith.mulf %408, %416 : vector<1x128xf32>
    %425 = arith.addf %423, %424 : vector<1x128xf32>
    %426 = math.tanh %425 : vector<1x128xf32>
    %427 = arith.mulf %422, %426 : vector<1x128xf32>
    %428 = vector.extract_strided_slice %5 {offsets = [7, 0], sizes = [1, 512], strides = [1, 1]} : vector<8x512xf32> to vector<1x512xf32>
    %c0_113 = arith.constant 0 : index
    %c0_114 = arith.constant 0 : index
    %429 = vector.load %arg2[%c0_113, %c0_114] : memref<128x512xf32, #tpu.memory_space<vmem>>, vector<128x512xf32>
    %cst_115 = arith.constant dense<0.000000e+00> : vector<1x512xf32>
    %430 = tpu.matmul %396, %429, %cst_115 {dimension_numbers = #tpu.dot_dimension_numbers<[1], [0], [0], [1], [0, 0, 1, 1], [], []>} : vector<1x128xf32>, vector<128x512xf32>, vector<1x512xf32> -> vector<1x512xf32>
    %431 = arith.addf %428, %430 : vector<1x512xf32>
    %432 = vector.extract_strided_slice %431 {offsets = [0, 0], sizes = [1, 128], strides = [1, 1]} : vector<1x512xf32> to vector<1x128xf32>
    %433 = arith.negf %432 : vector<1x128xf32>
    %434 = math.exp %433 : vector<1x128xf32>
    %cst_116 = arith.constant 1.000000e+00 : f32
    %435 = vector.broadcast %cst_116 : f32 to vector<1x128xf32>
    %436 = arith.addf %435, %434 : vector<1x128xf32>
    %437 = arith.divf %435, %436 : vector<1x128xf32>
    %438 = vector.extract_strided_slice %431 {offsets = [0, 128], sizes = [1, 128], strides = [1, 1]} : vector<1x512xf32> to vector<1x128xf32>
    %439 = arith.negf %438 : vector<1x128xf32>
    %440 = math.exp %439 : vector<1x128xf32>
    %cst_117 = arith.constant 1.000000e+00 : f32
    %441 = vector.broadcast %cst_117 : f32 to vector<1x128xf32>
    %442 = arith.addf %441, %440 : vector<1x128xf32>
    %443 = arith.divf %441, %442 : vector<1x128xf32>
    %444 = vector.extract_strided_slice %431 {offsets = [0, 256], sizes = [1, 128], strides = [1, 1]} : vector<1x512xf32> to vector<1x128xf32>
    %445 = math.tanh %444 : vector<1x128xf32>
    %446 = vector.extract_strided_slice %431 {offsets = [0, 384], sizes = [1, 128], strides = [1, 1]} : vector<1x512xf32> to vector<1x128xf32>
    %447 = arith.negf %446 : vector<1x128xf32>
    %448 = math.exp %447 : vector<1x128xf32>
    %cst_118 = arith.constant 1.000000e+00 : f32
    %449 = vector.broadcast %cst_118 : f32 to vector<1x128xf32>
    %450 = arith.addf %449, %448 : vector<1x128xf32>
    %451 = arith.divf %449, %450 : vector<1x128xf32>
    %452 = arith.mulf %443, %394 : vector<1x128xf32>
    %453 = arith.mulf %437, %445 : vector<1x128xf32>
    %454 = arith.addf %452, %453 : vector<1x128xf32>
    %455 = math.tanh %454 : vector<1x128xf32>
    %456 = arith.mulf %451, %455 : vector<1x128xf32>
    %c0_119 = arith.constant 0 : index
    %c0_120 = arith.constant 0 : index
    %457 = vector.load %arg4[%c0_119, %c0_120] : memref<128x512xf32, #tpu.memory_space<vmem>>, vector<128x512xf32>
    %cst_121 = arith.constant dense<0.000000e+00> : vector<1x512xf32>
    %458 = tpu.matmul %456, %457, %cst_121 {dimension_numbers = #tpu.dot_dimension_numbers<[1], [0], [0], [1], [0, 0, 1, 1], [], []>} : vector<1x128xf32>, vector<128x512xf32>, vector<1x512xf32> -> vector<1x512xf32>
    %459 = arith.addf %458, %6 : vector<1x512xf32>
    %c0_122 = arith.constant 0 : index
    %c0_123 = arith.constant 0 : index
    %460 = vector.load %arg5[%c0_122, %c0_123] : memref<128x512xf32, #tpu.memory_space<vmem>>, vector<128x512xf32>
    %cst_124 = arith.constant dense<0.000000e+00> : vector<1x512xf32>
    %461 = tpu.matmul %427, %460, %cst_124 {dimension_numbers = #tpu.dot_dimension_numbers<[1], [0], [0], [1], [0, 0, 1, 1], [], []>} : vector<1x128xf32>, vector<128x512xf32>, vector<1x512xf32> -> vector<1x512xf32>
    %462 = arith.addf %459, %461 : vector<1x512xf32>
    %463 = vector.extract_strided_slice %462 {offsets = [0, 0], sizes = [1, 128], strides = [1, 1]} : vector<1x512xf32> to vector<1x128xf32>
    %464 = arith.negf %463 : vector<1x128xf32>
    %465 = math.exp %464 : vector<1x128xf32>
    %cst_125 = arith.constant 1.000000e+00 : f32
    %466 = vector.broadcast %cst_125 : f32 to vector<1x128xf32>
    %467 = arith.addf %466, %465 : vector<1x128xf32>
    %468 = arith.divf %466, %467 : vector<1x128xf32>
    %469 = vector.extract_strided_slice %462 {offsets = [0, 128], sizes = [1, 128], strides = [1, 1]} : vector<1x512xf32> to vector<1x128xf32>
    %470 = arith.negf %469 : vector<1x128xf32>
    %471 = math.exp %470 : vector<1x128xf32>
    %cst_126 = arith.constant 1.000000e+00 : f32
    %472 = vector.broadcast %cst_126 : f32 to vector<1x128xf32>
    %473 = arith.addf %472, %471 : vector<1x128xf32>
    %474 = arith.divf %472, %473 : vector<1x128xf32>
    %475 = vector.extract_strided_slice %462 {offsets = [0, 256], sizes = [1, 128], strides = [1, 1]} : vector<1x512xf32> to vector<1x128xf32>
    %476 = math.tanh %475 : vector<1x128xf32>
    %477 = vector.extract_strided_slice %462 {offsets = [0, 384], sizes = [1, 128], strides = [1, 1]} : vector<1x512xf32> to vector<1x128xf32>
    %478 = arith.negf %477 : vector<1x128xf32>
    %479 = math.exp %478 : vector<1x128xf32>
    %cst_127 = arith.constant 1.000000e+00 : f32
    %480 = vector.broadcast %cst_127 : f32 to vector<1x128xf32>
    %481 = arith.addf %480, %479 : vector<1x128xf32>
    %482 = arith.divf %480, %481 : vector<1x128xf32>
    %483 = arith.mulf %474, %425 : vector<1x128xf32>
    %484 = arith.mulf %468, %476 : vector<1x128xf32>
    %485 = arith.addf %483, %484 : vector<1x128xf32>
    %486 = math.tanh %485 : vector<1x128xf32>
    %487 = arith.mulf %482, %486 : vector<1x128xf32>
    %c0_128 = arith.constant 0 : index
    %c0_129 = arith.constant 0 : index
    %488 = vector.load %arg8[%c0_128, %c0_129] : memref<1x128xf32, #tpu.memory_space<vmem>>, vector<1x128xf32>
    %489 = arith.mulf %487, %488 : vector<1x128xf32>
    %490 = vector.shape_cast %489 : vector<1x128xf32> to vector<1x1x128xf32>
    %cst_130 = arith.constant dense<0.000000e+00> : vector<1xf32>
    %491 = vector.multi_reduction <add>, %490, %cst_130 [1, 2] : vector<1x1x128xf32> to vector<1xf32>
    %492 = vector.shape_cast %491 : vector<1xf32> to vector<1x1x1xf32>
    %493 = vector.extract %492[0, 0, 0] : f32 from vector<1x1x1xf32>
    %c0_131 = arith.constant 0 : index
    %c0_132 = arith.constant 0 : index
    %494 = vector.load %arg7[%c0_131, %c0_132] : memref<1x128xf32, #tpu.memory_space<vmem>>, vector<1x128xf32>
    %c0_133 = arith.constant 0 : index
    %c0_134 = arith.constant 0 : index
    %495 = vector.load %arg9[%c0_133, %c0_134] : memref<1x128xf32, #tpu.memory_space<vmem>>, vector<1x128xf32>
    %496 = arith.mulf %494, %495 : vector<1x128xf32>
    %497 = vector.shape_cast %496 : vector<1x128xf32> to vector<1x1x128xf32>
    %cst_135 = arith.constant dense<0.000000e+00> : vector<1xf32>
    %498 = vector.multi_reduction <add>, %497, %cst_135 [1, 2] : vector<1x1x128xf32> to vector<1xf32>
    %499 = vector.shape_cast %498 : vector<1xf32> to vector<1x1x1xf32>
    %500 = vector.extract %499[0, 0, 0] : f32 from vector<1x1x1xf32>
    %501 = arith.addf %493, %500 : f32
    %c0_136 = arith.constant 0 : index
    %c0_137 = arith.constant 0 : index
    %502 = vector.load %arg10[%c0_136, %c0_137] : memref<1x1xf32, #tpu.memory_space<vmem>>, vector<1x1xf32>
    %503 = vector.extract %502[0, 0] : f32 from vector<1x1xf32>
    %504 = arith.addf %501, %503 : f32
    %505 = vector.broadcast %504 : f32 to vector<1x1xf32>
    %c0_138 = arith.constant 0 : index
    %c0_139 = arith.constant 0 : index
    %506 = vector.load %arg11[%c0_138, %c0_139] : memref<1x1xf32, #tpu.memory_space<vmem>>, vector<1x1xf32>
    tpu.vector_store %arg11[%c0_138, %c0_139], %505 {strides = array<i32>} : memref<1x1xf32, #tpu.memory_space<vmem>>, vector<1x1xf32>,
    return
  }
}

</mosaic_0001>

<llo_original>
// kernel: trann_forward.1
$region0: #{trann_forward.1}
  #allocation0 [shape = 'u32[]', space=smem, size = 0x4, offset = 0x4, fixed_abs, tag = 'smem constant byte address 0x4 - core index']
  #allocation1 [shape = 'u32[144,128]{1,0:T(1,128)}', space=vmem, size = 0x12000, scoped, tag = 'internal scratch']
  #allocation2 [shape = 'f32[1,1]{1,0:T(1,128)S(1)}', space=vmem, size = 0x200, scoped, tag = 'scoped memory for trann_forward.1']
  %s0 = inlined_call_operand.vmem [shape: f32[8,32], index: 0, kind: input, shape index: {}]
  %s1 = inlined_call_operand.hbm [shape: f32[32,512], index: 1, kind: input, shape index: {}]
  %s2 = inlined_call_operand.hbm [shape: f32[128,512], index: 2, kind: input, shape index: {}]
  %s3 = inlined_call_operand.vmem [shape: f32[1,512], index: 3, kind: input, shape index: {}]
  %s4 = inlined_call_operand.hbm [shape: f32[128,512], index: 4, kind: input, shape index: {}]
  %s5 = inlined_call_operand.hbm [shape: f32[128,512], index: 5, kind: input, shape index: {}]
  %s6 = inlined_call_operand.vmem [shape: f32[1,512], index: 6, kind: input, shape index: {}]
  %s7 = inlined_call_operand.vmem [shape: f32[1,128], index: 7, kind: input, shape index: {}]
  %s8 = inlined_call_operand.vmem [shape: f32[1,128], index: 8, kind: input, shape index: {}]
  %s9 = inlined_call_operand.vmem [shape: f32[1,128], index: 9, kind: input, shape index: {}]
  %s10 = inlined_call_operand.<no memory space> [shape: f32[1,1], index: 10, kind: input, shape index: {}]
  %s11 = inlined_call_operand.hbm [shape: f32[1,1], index: 11, kind: output, shape index: {}]
  %s12 = sld [smem:[#allocation0]]
  $region70: #{trann_forward.1} parent=0
    _
  %s14 = ssub.s32 1, %s12
  %s15 = scalar_select 0, %s14, %s12
  %v16 = vstv %s10
  %17 = vst [vmem:[#allocation2] sm:$0x1] %v16
  $region1: #{trann_forward.1} parent=0
    #allocation3 [shape = 'u8[65536]{0}', space=vmem, size = 0x10000, scoped, tag = 'input window, operand 1, single buffered']
    #allocation4 [shape = 's32[1]{0}', space=sflag, size = 0x4, scoped, tag = 'scoped memory for trann_forward.1']
    #allocation5 [shape = 's32[1]{0}', space=sflag, size = 0x4, scoped, tag = 'scoped memory for trann_forward.1']
    #allocation6 [shape = 'u8[262144]{0}', space=vmem, size = 0x40000, scoped, tag = 'input window, operand 2, single buffered']
    #allocation7 [shape = 's32[1]{0}', space=sflag, size = 0x4, scoped, tag = 'scoped memory for trann_forward.1']
    #allocation8 [shape = 'u8[262144]{0}', space=vmem, size = 0x40000, scoped, tag = 'input window, operand 4, single buffered']
    #allocation9 [shape = 'u8[262144]{0}', space=vmem, size = 0x40000, scoped, tag = 'input window, operand 5, single buffered']
    #allocation10 [shape = 's32[1]{0}', space=sflag, size = 0x4, scoped, tag = 'scoped memory for trann_forward.1']
    #allocation11 [shape = 'u8[512]{0}', space=vmem, size = 0x400, scoped, tag = 'output window, operand 0, single buffered']
    %18 = vsyncpa [#allocation4], 0
    %19 = vsyncpa [#allocation7], 0
    %20 = vsyncpa [#allocation10], 0
    %21 = vsyncpa [#allocation5], 0
    // Predicated region
    $region2: #{trann_forward.1} parent=1 // pred_check
      _
    $region3: #{trann_forward.1} parent=1 // pred_check_branch
      %23 = sbr.rel (0) target = $region5
    $region4: #{trann_forward.1} parent=1 // pred_region
      _
    $region5: #{trann_forward.1} parent=1 // pred_fallthru
      _
    // Predicated region
    $region6: #{trann_forward.1} parent=1 // pred_check
      _
    $region7: #{trann_forward.1} parent=1 // pred_check_branch
      %25 = sbr.rel (0) target = $region9
    $region8: #{trann_forward.1} parent=1 // pred_region
      %s27 = ssub.s32 2048, 2048
      %28 = vsyncadd [#allocation4], %s27
      %s29 = sshll.u32 [#allocation3], 4
      %s30 = int_to_ptr.vmem [resolvable:$true] %s29
      %35 = dma.hbm_to_vmem [thread:$0]  %s1, 2048, %s30, [#allocation4], 512, 512, 32
    $region9: #{trann_forward.1} parent=1 // pred_fallthru
      _
    // Predicated region
    $region10: #{trann_forward.1} parent=1 // pred_check
      _
    $region11: #{trann_forward.1} parent=1 // pred_check_branch
      %37 = sbr.rel (0) target = $region13
    $region12: #{trann_forward.1} parent=1 // pred_region
      %s39 = ssub.s32 8192, 8192
      %40 = vsyncadd [#allocation7], %s39
      %s41 = sshll.u32 [#allocation6], 4
      %s42 = int_to_ptr.vmem [resolvable:$true] %s41
      %47 = dma.hbm_to_vmem [thread:$0]  %s2, 8192, %s42, [#allocation7], 512, 512, 32
    $region13: #{trann_forward.1} parent=1 // pred_fallthru
      _
    // Predicated region
    $region14: #{trann_forward.1} parent=1 // pred_check
      _
    $region15: #{trann_forward.1} parent=1 // pred_check_branch
      %49 = sbr.rel (0) target = $region17
    $region16: #{trann_forward.1} parent=1 // pred_region
      _
    $region17: #{trann_forward.1} parent=1 // pred_fallthru
      _
    // Predicated region
    $region18: #{trann_forward.1} parent=1 // pred_check
      _
    $region19: #{trann_forward.1} parent=1 // pred_check_branch
      %51 = sbr.rel (0) target = $region21
    $region20: #{trann_forward.1} parent=1 // pred_region
      %s53 = ssub.s32 8192, 8192
      %54 = vsyncadd [#allocation7], %s53
      %s55 = sshll.u32 [#allocation8], 4
      %s56 = int_to_ptr.vmem [resolvable:$true] %s55
      %61 = dma.hbm_to_vmem [thread:$0]  %s4, 8192, %s56, [#allocation7], 512, 512, 32
    $region21: #{trann_forward.1} parent=1 // pred_fallthru
      _
    // Predicated region
    $region22: #{trann_forward.1} parent=1 // pred_check
      _
    $region23: #{trann_forward.1} parent=1 // pred_check_branch
      %63 = sbr.rel (0) target = $region25
    $region24: #{trann_forward.1} parent=1 // pred_region
      %s65 = ssub.s32 8192, 8192
      %66 = vsyncadd [#allocation10], %s65
      %s67 = sshll.u32 [#allocation9], 4
      %s68 = int_to_ptr.vmem [resolvable:$true] %s67
      %73 = dma.hbm_to_vmem [thread:$0]  %s5, 8192, %s68, [#allocation10], 512, 512, 32
    $region25: #{trann_forward.1} parent=1 // pred_fallthru
      _
    // Predicated region
    $region26: #{trann_forward.1} parent=1 // pred_check
      _
    $region27: #{trann_forward.1} parent=1 // pred_check_branch
      %75 = sbr.rel (0) target = $region29
    $region28: #{trann_forward.1} parent=1 // pred_region
      _
    $region29: #{trann_forward.1} parent=1 // pred_fallthru
      _
    // Predicated region
    $region30: #{trann_forward.1} parent=1 // pred_check
      _
    $region31: #{trann_forward.1} parent=1 // pred_check_branch
      %77 = sbr.rel (0) target = $region33
    $region32: #{trann_forward.1} parent=1 // pred_region
      _
    $region33: #{trann_forward.1} parent=1 // pred_fallthru
      _
    // Predicated region
    $region34: #{trann_forward.1} parent=1 // pred_check
      _
    $region35: #{trann_forward.1} parent=1 // pred_check_branch
      %79 = sbr.rel (0) target = $region37
    $region36: #{trann_forward.1} parent=1 // pred_region
      _
    $region37: #{trann_forward.1} parent=1 // pred_fallthru
      _
    // Predicated region
    $region38: #{trann_forward.1} parent=1 // pred_check
      _
    $region39: #{trann_forward.1} parent=1 // pred_check_branch
      %81 = sbr.rel (0) target = $region41
    $region40: #{trann_forward.1} parent=1 // pred_region
      _
    $region41: #{trann_forward.1} parent=1 // pred_fallthru
      _
    // Predicated region
    $region42: #{trann_forward.1} parent=1 // pred_check
      _
    $region43: #{trann_forward.1} parent=1 // pred_check_branch
      %83 = sbr.rel (0) target = $region45
    $region44: #{trann_forward.1} parent=1 // pred_region
      _
    $region45: #{trann_forward.1} parent=1 // pred_fallthru
      _
    // Predicated region
    $region46: #{trann_forward.1} parent=1 // pred_check
      _
    $region47: #{trann_forward.1} parent=1 // pred_check_branch
      %85 = sbr.rel (0) target = $region49
    $region48: #{trann_forward.1} parent=1 // pred_region
      %86 = dma.done [#allocation4], 2048
    $region49: #{trann_forward.1} parent=1 // pred_fallthru
      _
    // Predicated region
    $region50: #{trann_forward.1} parent=1 // pred_check
      _
    $region51: #{trann_forward.1} parent=1 // pred_check_branch
      %88 = sbr.rel (0) target = $region53
    $region52: #{trann_forward.1} parent=1 // pred_region
      %89 = dma.done [#allocation7], 8192
    $region53: #{trann_forward.1} parent=1 // pred_fallthru
      _
    // Predicated region
    $region54: #{trann_forward.1} parent=1 // pred_check
      _
    $region55: #{trann_forward.1} parent=1 // pred_check_branch
      %91 = sbr.rel (0) target = $region57
    $region56: #{trann_forward.1} parent=1 // pred_region
      %92 = dma.done [#allocation7], 8192
    $region57: #{trann_forward.1} parent=1 // pred_fallthru
      _
    // Predicated region
    $region58: #{trann_forward.1} parent=1 // pred_check
      _
    $region59: #{trann_forward.1} parent=1 // pred_check_branch
      %94 = sbr.rel (0) target = $region61
    $region60: #{trann_forward.1} parent=1 // pred_region
      %95 = dma.done [#allocation10], 8192
    $region61: #{trann_forward.1} parent=1 // pred_fallthru
      _
    %v96 = vld [vmem:[%s0] sm:$0xff]
    %v97 = vld [vmem:[#allocation3] sm:$0xff]
    %v98 = vld [vmem:[#allocation3 + $0x8] sm:$0xff]
    %v99 = vld [vmem:[#allocation3 + $0x10] sm:$0xff]
    %v100 = vld [vmem:[#allocation3 + $0x18] sm:$0xff]
    %v101 = vld [vmem:[#allocation3 + $0x20] sm:$0xff]
    %v102 = vld [vmem:[#allocation3 + $0x28] sm:$0xff]
    %v103 = vld [vmem:[#allocation3 + $0x30] sm:$0xff]
    %v104 = vld [vmem:[#allocation3 + $0x38] sm:$0xff]
    %v105 = vld [vmem:[#allocation3 + $0x40] sm:$0xff]
    %v106 = vld [vmem:[#allocation3 + $0x48] sm:$0xff]
    %v107 = vld [vmem:[#allocation3 + $0x50] sm:$0xff]
    %v108 = vld [vmem:[#allocation3 + $0x58] sm:$0xff]
    %v109 = vld [vmem:[#allocation3 + $0x60] sm:$0xff]
    %v110 = vld [vmem:[#allocation3 + $0x68] sm:$0xff]
    %v111 = vld [vmem:[#allocation3 + $0x70] sm:$0xff]
    %v112 = vld [vmem:[#allocation3 + $0x78] sm:$0xff]
    %v113 = vld [vmem:[%s3] sm:$0xf]
    %v115 = vlaneseq
    %v116 = vshrl.u32 %v115, 7
    %v117 = vsub.s32 0, %v116
    %v118 = vrot.slane %v113, %v117
    %v119 = vlaneseq
    %v120 = vshrl.u32 %v119, 7
    %v121 = vsub.s32 1, %v120
    %v122 = vrot.slane %v113, %v121
    %v123 = vlaneseq
    %v124 = vshrl.u32 %v123, 7
    %v125 = vsub.s32 2, %v124
    %v126 = vrot.slane %v113, %v125
    %v127 = vlaneseq
    %v128 = vshrl.u32 %v127, 7
    %v129 = vsub.s32 3, %v128
    %v130 = vrot.slane %v113, %v129
    %vm135 = vcmask 261120
    %v137 = vsel %vm135, %v96, 0
    %139 = vmatprep.subr.mxu0 %v98
    %140 = vmatpush1.msra.mxu0 %v97
    %141 = vmatprep.subr.mxu0 %v102
    %142 = vmatpush1.msra.mxu0 %v101
    %143 = vmatprep.subr.mxu0 %v106
    %144 = vmatpush1.msra.mxu0 %v105
    %145 = vmatprep.subr.mxu0 %v110
    %146 = vmatpush1.msra.mxu0 %v109
    %147 = vmatprep.subr.mxu0 0.0
    %148 = vmatpush1.msra.mxu0 0.0
    %149 = vmatprep.subr.mxu0 0.0
    %150 = vmatpush1.msra.mxu0 0.0
    %151 = vmatprep.subr.mxu0 0.0
    %152 = vmatpush1.msra.mxu0 0.0
    %153 = vmatprep.subr.mxu0 0.0
    %154 = vmatpush1.msra.mxu0 0.0
    %155 = vmatprep.subr.mxu0 0.0
    %156 = vmatpush1.msra.mxu0 0.0
    %157 = vmatprep.subr.mxu0 0.0
    %158 = vmatpush1.msra.mxu0 0.0
    %159 = vmatprep.subr.mxu0 0.0
    %160 = vmatpush1.msra.mxu0 0.0
    %161 = vmatprep.subr.mxu0 0.0
    %162 = vmatpush1.msra.mxu0 0.0
    %163 = vmatprep.subr.mxu0 0.0
    %164 = vmatpush1.msra.mxu0 0.0
    %165 = vmatprep.subr.mxu0 0.0
    %166 = vmatpush1.msra.mxu0 0.0
    %167 = vmatprep.subr.mxu0 0.0
    %168 = vmatpush1.msra.mxu0 0.0
    %169 = vmatprep.subr.mxu0 0.0
    %170 = vmatpush1.msra.mxu0 0.0
    %171 = vmatprep.subr.mxu0 0.0
    %172 = vmatpush1.msra.mxu0 0.0
    %173 = vmatprep.subr.mxu0 0.0
    %174 = vmatpush1.msra.mxu0 0.0
    %175 = vmatprep.subr.mxu0 0.0
    %176 = vmatpush1.msra.mxu0 0.0
    %177 = vmatprep.subr.mxu0 0.0
    %178 = vmatpush1.msra.mxu0 0.0
    %179 = vmatprep.subr.mxu0 0.0
    %180 = vmatpush1.msra.mxu0 0.0
    %181 = vmatprep.subr.mxu0 0.0
    %182 = vmatpush1.msra.mxu0 0.0
    %183 = vmatprep.subr.mxu0 0.0
    %184 = vmatpush1.msra.mxu0 0.0
    %185 = vmatprep.subr.mxu0 0.0
    %186 = vmatpush1.msra.mxu0 0.0
    %187 = vmatprep.subr.mxu0 0.0
    %188 = vmatpush1.msra.mxu0 0.0
    %189 = vmatprep.subr.mxu0 0.0
    %190 = vmatpush1.msra.mxu0 0.0
    %191 = vmatprep.subr.mxu0 0.0
    %192 = vmatpush1.msra.mxu0 0.0
    %193 = vmatprep.subr.mxu0 0.0
    %194 = vmatpush1.msra.mxu0 0.0
    %195 = vmatprep.subr.mxu0 0.0
    %196 = vmatpush1.msra.mxu0 0.0
    %197 = vmatprep.subr.mxu0 0.0
    %198 = vmatpush1.msra.mxu0 0.0
    %199 = vmatprep.subr.mxu0 0.0
    %200 = vmatpush1.msra.mxu0 0.0
    %201 = vmatprep.subr.mxu0 0.0
    %202 = vmatpush1.msra.mxu0 0.0
    %203 = vmatprep.mubr.f32.mxu0 0.0
    %204 = vmatmul.mubr.f32.gmra.mrb[0].mxu0 %v137
    %v205 = vpop.f32.mrb[0].mxu0
    %v206 = vadd.f32 %v118, %v205
    %v207 = vpop.f32.mrb[0].mxu0
    %v208 = vadd.f32 %v122, %v207
    %209 = vdwg.mxu0
    %210 = vmatprep.subr.mxu0 %v100
    %211 = vmatpush1.msra.mxu0 %v99
    %212 = vmatprep.subr.mxu0 %v104
    %213 = vmatpush1.msra.mxu0 %v103
    %214 = vmatprep.subr.mxu0 %v108
    %215 = vmatpush1.msra.mxu0 %v107
    %216 = vmatprep.subr.mxu0 %v112
    %217 = vmatpush1.msra.mxu0 %v111
    %218 = vmatprep.subr.mxu0 0.0
    %219 = vmatpush1.msra.mxu0 0.0
    %220 = vmatprep.subr.mxu0 0.0
    %221 = vmatpush1.msra.mxu0 0.0
    %222 = vmatprep.subr.mxu0 0.0
    %223 = vmatpush1.msra.mxu0 0.0
    %224 = vmatprep.subr.mxu0 0.0
    %225 = vmatpush1.msra.mxu0 0.0
    %226 = vmatprep.subr.mxu0 0.0
    %227 = vmatpush1.msra.mxu0 0.0
    %228 = vmatprep.subr.mxu0 0.0
    %229 = vmatpush1.msra.mxu0 0.0
    %230 = vmatprep.subr.mxu0 0.0
    %231 = vmatpush1.msra.mxu0 0.0
    %232 = vmatprep.subr.mxu0 0.0
    %233 = vmatpush1.msra.mxu0 0.0
    %234 = vmatprep.subr.mxu0 0.0
    %235 = vmatpush1.msra.mxu0 0.0
    %236 = vmatprep.subr.mxu0 0.0
    %237 = vmatpush1.msra.mxu0 0.0
    %238 = vmatprep.subr.mxu0 0.0
    %239 = vmatpush1.msra.mxu0 0.0
    %240 = vmatprep.subr.mxu0 0.0
    %241 = vmatpush1.msra.mxu0 0.0
    %242 = vmatprep.subr.mxu0 0.0
    %243 = vmatpush1.msra.mxu0 0.0
    %244 = vmatprep.subr.mxu0 0.0
    %245 = vmatpush1.msra.mxu0 0.0
    %246 = vmatprep.subr.mxu0 0.0
    %247 = vmatpush1.msra.mxu0 0.0
    %248 = vmatprep.subr.mxu0 0.0
    %249 = vmatpush1.msra.mxu0 0.0
    %250 = vmatprep.subr.mxu0 0.0
    %251 = vmatpush1.msra.mxu0 0.0
    %252 = vmatprep.subr.mxu0 0.0
    %253 = vmatpush1.msra.mxu0 0.0
    %254 = vmatprep.subr.mxu0 0.0
    %255 = vmatpush1.msra.mxu0 0.0
    %256 = vmatprep.subr.mxu0 0.0
    %257 = vmatpush1.msra.mxu0 0.0
    %258 = vmatprep.subr.mxu0 0.0
    %259 = vmatpush1.msra.mxu0 0.0
    %260 = vmatprep.subr.mxu0 0.0
    %261 = vmatpush1.msra.mxu0 0.0
    %262 = vmatprep.subr.mxu0 0.0
    %263 = vmatpush1.msra.mxu0 0.0
    %264 = vmatprep.subr.mxu0 0.0
    %265 = vmatpush1.msra.mxu0 0.0
    %266 = vmatprep.subr.mxu0 0.0
    %267 = vmatpush1.msra.mxu0 0.0
    %268 = vmatprep.subr.mxu0 0.0
    %269 = vmatpush1.msra.mxu0 0.0
    %270 = vmatprep.subr.mxu0 0.0
    %271 = vmatpush1.msra.mxu0 0.0
    %272 = vmatprep.subr.mxu0 0.0
    %273 = vmatpush1.msra.mxu0 0.0
    %274 = vmatprep.mubr.f32.mxu0 0.0
    %275 = vmatmul.mubr.f32.gmra.mrb[0].mxu0 %v137
    %v276 = vpop.f32.mrb[0].mxu0
    %v277 = vadd.f32 %v126, %v276
    %v278 = vpop.f32.mrb[0].mxu0
    %v279 = vadd.f32 %v130, %v278
    %280 = vdwg.mxu0
    %v281 = vld [vmem:[%s6] sm:$0xf]
    %v282 = vld [vmem:[#allocation6] sm:$0xff]
    %v283 = vld [vmem:[#allocation6 + $0x8] sm:$0xff]
    %v284 = vld [vmem:[#allocation6 + $0x10] sm:$0xff]
    %v285 = vld [vmem:[#allocation6 + $0x18] sm:$0xff]
    %v286 = vld [vmem:[#allocation6 + $0x20] sm:$0xff]
    %v287 = vld [vmem:[#allocation6 + $0x28] sm:$0xff]
    %v288 = vld [vmem:[#allocation6 + $0x30] sm:$0xff]
    %v289 = vld [vmem:[#allocation6 + $0x38] sm:$0xff]
    %v290 = vld [vmem:[#allocation6 + $0x40] sm:$0xff]
    %v291 = vld [vmem:[#allocation6 + $0x48] sm:$0xff]
    %v292 = vld [vmem:[#allocation6 + $0x50] sm:$0xff]
    %v293 = vld [vmem:[#allocation6 + $0x58] sm:$0xff]
    %v294 = vld [vmem:[#allocation6 + $0x60] sm:$0xff]
    %v295 = vld [vmem:[#allocation6 + $0x68] sm:$0xff]
    %v296 = vld [vmem:[#allocation6 + $0x70] sm:$0xff]
    %v297 = vld [vmem:[#allocation6 + $0x78] sm:$0xff]
    %v298 = vld [vmem:[#allocation6 + $0x80] sm:$0xff]
    %v299 = vld [vmem:[#allocation6 + $0x88] sm:$0xff]
    %v300 = vld [vmem:[#allocation6 + $0x90] sm:$0xff]
    %v301 = vld [vmem:[#allocation6 + $0x98] sm:$0xff]
    %v302 = vld [vmem:[#allocation6 + $0xa0] sm:$0xff]
    %v303 = vld [vmem:[#allocation6 + $0xa8] sm:$0xff]
    %v304 = vld [vmem:[#allocation6 + $0xb0] sm:$0xff]
    %v305 = vld [vmem:[#allocation6 + $0xb8] sm:$0xff]
    %v306 = vld [vmem:[#allocation6 + $0xc0] sm:$0xff]
    %v307 = vld [vmem:[#allocation6 + $0xc8] sm:$0xff]
    %v308 = vld [vmem:[#allocation6 + $0xd0] sm:$0xff]
    %v309 = vld [vmem:[#allocation6 + $0xd8] sm:$0xff]
    %v310 = vld [vmem:[#allocation6 + $0xe0] sm:$0xff]
    %v311 = vld [vmem:[#allocation6 + $0xe8] sm:$0xff]
    %v312 = vld [vmem:[#allocation6 + $0xf0] sm:$0xff]
    %v313 = vld [vmem:[#allocation6 + $0xf8] sm:$0xff]
    %v314 = vld [vmem:[#allocation6 + $0x100] sm:$0xff]
    %v315 = vld [vmem:[#allocation6 + $0x108] sm:$0xff]
    %v316 = vld [vmem:[#allocation6 + $0x110] sm:$0xff]
    %v317 = vld [vmem:[#allocation6 + $0x118] sm:$0xff]
    %v318 = vld [vmem:[#allocation6 + $0x120] sm:$0xff]
    %v319 = vld [vmem:[#allocation6 + $0x128] sm:$0xff]
    %v320 = vld [vmem:[#allocation6 + $0x130] sm:$0xff]
    %v321 = vld [vmem:[#allocation6 + $0x138] sm:$0xff]
    %v322 = vld [vmem:[#allocation6 + $0x140] sm:$0xff]
    %v323 = vld [vmem:[#allocation6 + $0x148] sm:$0xff]
    %v324 = vld [vmem:[#allocation6 + $0x150] sm:$0xff]
    %v325 = vld [vmem:[#allocation6 + $0x158] sm:$0xff]
    %v326 = vld [vmem:[#allocation6 + $0x160] sm:$0xff]
    %v327 = vld [vmem:[#allocation6 + $0x168] sm:$0xff]
    %v328 = vld [vmem:[#allocation6 + $0x170] sm:$0xff]
    %v329 = vld [vmem:[#allocation6 + $0x178] sm:$0xff]
    %v330 = vld [vmem:[#allocation6 + $0x180] sm:$0xff]
    %v331 = vld [vmem:[#allocation6 + $0x188] sm:$0xff]
    %v332 = vld [vmem:[#allocation6 + $0x190] sm:$0xff]
    %v333 = vld [vmem:[#allocation6 + $0x198] sm:$0xff]
    %v334 = vld [vmem:[#allocation6 + $0x1a0] sm:$0xff]
    %v335 = vld [vmem:[#allocation6 + $0x1a8] sm:$0xff]
    %v336 = vld [vmem:[#allocation6 + $0x1b0] sm:$0xff]
    %v337 = vld [vmem:[#allocation6 + $0x1b8] sm:$0xff]
    %v338 = vld [vmem:[#allocation6 + $0x1c0] sm:$0xff]
    %v339 = vld [vmem:[#allocation6 + $0x1c8] sm:$0xff]
    %v340 = vld [vmem:[#allocation6 + $0x1d0] sm:$0xff]
    %v341 = vld [vmem:[#allocation6 + $0x1d8] sm:$0xff]
    %v342 = vld [vmem:[#allocation6 + $0x1e0] sm:$0xff]
    %v343 = vld [vmem:[#allocation6 + $0x1e8] sm:$0xff]
    %v344 = vld [vmem:[#allocation6 + $0x1f0] sm:$0xff]
    %v345 = vld [vmem:[#allocation6 + $0x1f8] sm:$0xff]
    %346 = vmatprep.subr.mxu0 %v283
    %347 = vmatpush1.msra.mxu0 %v282
    %348 = vmatprep.subr.mxu0 %v287
    %349 = vmatpush1.msra.mxu0 %v286
    %350 = vmatprep.subr.mxu0 %v291
    %351 = vmatpush1.msra.mxu0 %v290
    %352 = vmatprep.subr.mxu0 %v295
    %353 = vmatpush1.msra.mxu0 %v294
    %354 = vmatprep.subr.mxu0 %v299
    %355 = vmatpush1.msra.mxu0 %v298
    %356 = vmatprep.subr.mxu0 %v303
    %357 = vmatpush1.msra.mxu0 %v302
    %358 = vmatprep.subr.mxu0 %v307
    %359 = vmatpush1.msra.mxu0 %v306
    %360 = vmatprep.subr.mxu0 %v311
    %361 = vmatpush1.msra.mxu0 %v310
    %362 = vmatprep.subr.mxu0 %v315
    %363 = vmatpush1.msra.mxu0 %v314
    %364 = vmatprep.subr.mxu0 %v319
    %365 = vmatpush1.msra.mxu0 %v318
    %366 = vmatprep.subr.mxu0 %v323
    %367 = vmatpush1.msra.mxu0 %v322
    %368 = vmatprep.subr.mxu0 %v327
    %369 = vmatpush1.msra.mxu0 %v326
    %370 = vmatprep.subr.mxu0 %v331
    %371 = vmatpush1.msra.mxu0 %v330
    %372 = vmatprep.subr.mxu0 %v335
    %373 = vmatpush1.msra.mxu0 %v334
    %374 = vmatprep.subr.mxu0 %v339
    %375 = vmatpush1.msra.mxu0 %v338
    %376 = vmatprep.subr.mxu0 %v343
    %377 = vmatpush1.msra.mxu0 %v342
    %378 = vmatprep.subr.mxu0 0.0
    %379 = vmatpush1.msra.mxu0 0.0
    %380 = vmatprep.subr.mxu0 0.0
    %381 = vmatpush1.msra.mxu0 0.0
    %382 = vmatprep.subr.mxu0 0.0
    %383 = vmatpush1.msra.mxu0 0.0
    %384 = vmatprep.subr.mxu0 0.0
    %385 = vmatpush1.msra.mxu0 0.0
    %386 = vmatprep.subr.mxu0 0.0
    %387 = vmatpush1.msra.mxu0 0.0
    %388 = vmatprep.subr.mxu0 0.0
    %389 = vmatpush1.msra.mxu0 0.0
    %390 = vmatprep.subr.mxu0 0.0
    %391 = vmatpush1.msra.mxu0 0.0
    %392 = vmatprep.subr.mxu0 0.0
    %393 = vmatpush1.msra.mxu0 0.0
    %394 = vmatprep.subr.mxu0 0.0
    %395 = vmatpush1.msra.mxu0 0.0
    %396 = vmatprep.subr.mxu0 0.0
    %397 = vmatpush1.msra.mxu0 0.0
    %398 = vmatprep.subr.mxu0 0.0
    %399 = vmatpush1.msra.mxu0 0.0
    %400 = vmatprep.subr.mxu0 0.0
    %401 = vmatpush1.msra.mxu0 0.0
    %402 = vmatprep.subr.mxu0 0.0
    %403 = vmatpush1.msra.mxu0 0.0
    %404 = vmatprep.subr.mxu0 0.0
    %405 = vmatpush1.msra.mxu0 0.0
    %406 = vmatprep.subr.mxu0 0.0
    %407 = vmatpush1.msra.mxu0 0.0
    %408 = vmatprep.subr.mxu0 0.0
    %409 = vmatpush1.msra.mxu0 0.0
    %410 = vmatprep.mubr.f32.mxu0 0.0
    %411 = vmatmul.mubr.f32.gmra.mrb[0].mxu0 0.0
    %v412 = vpop.f32.mrb[0].mxu0
    %v413 = vadd.f32 0.0, %v412
    %v414 = vpop.f32.mrb[0].mxu0
    %v415 = vadd.f32 0.0, %v414
    %416 = vdwg.mxu0
    %417 = vmatprep.subr.mxu0 %v285
    %418 = vmatpush1.msra.mxu0 %v284
    %419 = vmatprep.subr.mxu0 %v289
    %420 = vmatpush1.msra.mxu0 %v288
    %421 = vmatprep.subr.mxu0 %v293
    %422 = vmatpush1.msra.mxu0 %v292
    %423 = vmatprep.subr.mxu0 %v297
    %424 = vmatpush1.msra.mxu0 %v296
    %425 = vmatprep.subr.mxu0 %v301
    %426 = vmatpush1.msra.mxu0 %v300
    %427 = vmatprep.subr.mxu0 %v305
    %428 = vmatpush1.msra.mxu0 %v304
    %429 = vmatprep.subr.mxu0 %v309
    %430 = vmatpush1.msra.mxu0 %v308
    %431 = vmatprep.subr.mxu0 %v313
    %432 = vmatpush1.msra.mxu0 %v312
    %433 = vmatprep.subr.mxu0 %v317
    %434 = vmatpush1.msra.mxu0 %v316
    %435 = vmatprep.subr.mxu0 %v321
    %436 = vmatpush1.msra.mxu0 %v320
    %437 = vmatprep.subr.mxu0 %v325
    %438 = vmatpush1.msra.mxu0 %v324
    %439 = vmatprep.subr.mxu0 %v329
    %440 = vmatpush1.msra.mxu0 %v328
    %441 = vmatprep.subr.mxu0 %v333
    %442 = vmatpush1.msra.mxu0 %v332
    %443 = vmatprep.subr.mxu0 %v337
    %444 = vmatpush1.msra.mxu0 %v336
    %445 = vmatprep.subr.mxu0 %v341
    %446 = vmatpush1.msra.mxu0 %v340
    %447 = vmatprep.subr.mxu0 %v345
    %448 = vmatpush1.msra.mxu0 %v344
    %449 = vmatprep.subr.mxu0 0.0
    %450 = vmatpush1.msra.mxu0 0.0
    %451 = vmatprep.subr.mxu0 0.0
    %452 = vmatpush1.msra.mxu0 0.0
    %453 = vmatprep.subr.mxu0 0.0
    %454 = vmatpush1.msra.mxu0 0.0
    %455 = vmatprep.subr.mxu0 0.0
    %456 = vmatpush1.msra.mxu0 0.0
    %457 = vmatprep.subr.mxu0 0.0
    %458 = vmatpush1.msra.mxu0 0.0
    %459 = vmatprep.subr.mxu0 0.0
    %460 = vmatpush1.msra.mxu0 0.0
    %461 = vmatprep.subr.mxu0 0.0
    %462 = vmatpush1.msra.mxu0 0.0
    %463 = vmatprep.subr.mxu0 0.0
    %464 = vmatpush1.msra.mxu0 0.0
    %465 = vmatprep.subr.mxu0 0.0
    %466 = vmatpush1.msra.mxu0 0.0
    %467 = vmatprep.subr.mxu0 0.0
    %468 = vmatpush1.msra.mxu0 0.0
    %469 = vmatprep.subr.mxu0 0.0
    %470 = vmatpush1.msra.mxu0 0.0
    %471 = vmatprep.subr.mxu0 0.0
    %472 = vmatpush1.msra.mxu0 0.0
    %473 = vmatprep.subr.mxu0 0.0
    %474 = vmatpush1.msra.mxu0 0.0
    %475 = vmatprep.subr.mxu0 0.0
    %476 = vmatpush1.msra.mxu0 0.0
    %477 = vmatprep.subr.mxu0 0.0
    %478 = vmatpush1.msra.mxu0 0.0
    %479 = vmatprep.subr.mxu0 0.0
    %480 = vmatpush1.msra.mxu0 0.0
    %481 = vmatprep.mubr.f32.mxu0 0.0
    %482 = vmatmul.mubr.f32.gmra.mrb[0].mxu0 0.0
    %v483 = vpop.f32.mrb[0].mxu0
    %v484 = vadd.f32 0.0, %v483
    %v485 = vpop.f32.mrb[0].mxu0
    %v486 = vadd.f32 0.0, %v485
    %487 = vdwg.mxu0
    %v488 = vadd.f32 %v206, %v413
    %v489 = vadd.f32 %v208, %v415
    %v490 = vadd.f32 %v277, %v484
    %v491 = vadd.f32 %v279, %v486
    %v492 = vxor.u32 %v488, 2147483648
    %v493 = vmul.f32 %v492, 1.442695
    %v494 = vpow.pop %v493
    %v495 = vadd.f32 %v494, 1.0
    %v496 = vrcp.pop %v495
    %v497 = vmul.f32 1.0, %v496
    %v498 = vxor.u32 %v489, 2147483648
    %v499 = vmul.f32 %v498, 1.442695
    %v500 = vpow.pop %v499
    %v501 = vadd.f32 %v500, 1.0
    %v502 = vrcp.pop %v501
    %v503 = vmul.f32 1.0, %v502
    %v504 = vtanh.pop %v490
    %v505 = vxor.u32 %v491, 2147483648
    %v506 = vmul.f32 %v505, 1.442695
    %v507 = vpow.pop %v506
    %v508 = vadd.f32 %v507, 1.0
    %v509 = vrcp.pop %v508
    %v510 = vmul.f32 1.0, %v509
    %v511 = vmul.f32 %v503, 0.0
    %v512 = vmul.f32 %v497, %v504
    %v513 = vadd.f32 %v511, %v512
    %v514 = vtanh.pop %v513
    %v515 = vmul.f32 %v510, %v514
    %v516 = vld [vmem:[#allocation8] sm:$0xff]
    %v517 = vld [vmem:[#allocation8 + $0x8] sm:$0xff]
    %v518 = vld [vmem:[#allocation8 + $0x10] sm:$0xff]
    %v519 = vld [vmem:[#allocation8 + $0x18] sm:$0xff]
    %v520 = vld [vmem:[#allocation8 + $0x20] sm:$0xff]
    %v521 = vld [vmem:[#allocation8 + $0x28] sm:$0xff]
    %v522 = vld [vmem:[#allocation8 + $0x30] sm:$0xff]
    %v523 = vld [vmem:[#allocation8 + $0x38] sm:$0xff]
    %v524 = vld [vmem:[#allocation8 + $0x40] sm:$0xff]
    %v525 = vld [vmem:[#allocation8 + $0x48] sm:$0xff]
    %v526 = vld [vmem:[#allocation8 + $0x50] sm:$0xff]
    %v527 = vld [vmem:[#allocation8 + $0x58] sm:$0xff]
    %v528 = vld [vmem:[#allocation8 + $0x60] sm:$0xff]
    %v529 = vld [vmem:[#allocation8 + $0x68] sm:$0xff]
    %v530 = vld [vmem:[#allocation8 + $0x70] sm:$0xff]
    %v531 = vld [vmem:[#allocation8 + $0x78] sm:$0xff]
    %v532 = vld [vmem:[#allocation8 + $0x80] sm:$0xff]
    %v533 = vld [vmem:[#allocation8 + $0x88] sm:$0xff]
    %v534 = vld [vmem:[#allocation8 + $0x90] sm:$0xff]
    %v535 = vld [vmem:[#allocation8 + $0x98] sm:$0xff]
    %v536 = vld [vmem:[#allocation8 + $0xa0] sm:$0xff]
    %v537 = vld [vmem:[#allocation8 + $0xa8] sm:$0xff]
    %v538 = vld [vmem:[#allocation8 + $0xb0] sm:$0xff]
    %v539 = vld [vmem:[#allocation8 + $0xb8] sm:$0xff]
    %v540 = vld [vmem:[#allocation8 + $0xc0] sm:$0xff]
    %v541 = vld [vmem:[#allocation8 + $0xc8] sm:$0xff]
    %v542 = vld [vmem:[#allocation8 + $0xd0] sm:$0xff]
    %v543 = vld [vmem:[#allocation8 + $0xd8] sm:$0xff]
    %v544 = vld [vmem:[#allocation8 + $0xe0] sm:$0xff]
    %v545 = vld [vmem:[#allocation8 + $0xe8] sm:$0xff]
    %v546 = vld [vmem:[#allocation8 + $0xf0] sm:$0xff]
    %v547 = vld [vmem:[#allocation8 + $0xf8] sm:$0xff]
    %v548 = vld [vmem:[#allocation8 + $0x100] sm:$0xff]
    %v549 = vld [vmem:[#allocation8 + $0x108] sm:$0xff]
    %v550 = vld [vmem:[#allocation8 + $0x110] sm:$0xff]
    %v551 = vld [vmem:[#allocation8 + $0x118] sm:$0xff]
    %v552 = vld [vmem:[#allocation8 + $0x120] sm:$0xff]
    %v553 = vld [vmem:[#allocation8 + $0x128] sm:$0xff]
    %v554 = vld [vmem:[#allocation8 + $0x130] sm:$0xff]
    %v555 = vld [vmem:[#allocation8 + $0x138] sm:$0xff]
    %v556 = vld [vmem:[#allocation8 + $0x140] sm:$0xff]
    %v557 = vld [vmem:[#allocation8 + $0x148] sm:$0xff]
    %v558 = vld [vmem:[#allocation8 + $0x150] sm:$0xff]
    %v559 = vld [vmem:[#allocation8 + $0x158] sm:$0xff]
    %v560 = vld [vmem:[#allocation8 + $0x160] sm:$0xff]
    %v561 = vld [vmem:[#allocation8 + $0x168] sm:$0xff]
    %v562 = vld [vmem:[#allocation8 + $0x170] sm:$0xff]
    %v563 = vld [vmem:[#allocation8 + $0x178] sm:$0xff]
    %v564 = vld [vmem:[#allocation8 + $0x180] sm:$0xff]
    %v565 = vld [vmem:[#allocation8 + $0x188] sm:$0xff]
    %v566 = vld [vmem:[#allocation8 + $0x190] sm:$0xff]
    %v567 = vld [vmem:[#allocation8 + $0x198] sm:$0xff]
    %v568 = vld [vmem:[#allocation8 + $0x1a0] sm:$0xff]
    %v569 = vld [vmem:[#allocation8 + $0x1a8] sm:$0xff]
    %v570 = vld [vmem:[#allocation8 + $0x1b0] sm:$0xff]
    %v571 = vld [vmem:[#allocation8 + $0x1b8] sm:$0xff]
    %v572 = vld [vmem:[#allocation8 + $0x1c0] sm:$0xff]
    %v573 = vld [vmem:[#allocation8 + $0x1c8] sm:$0xff]
    %v574 = vld [vmem:[#allocation8 + $0x1d0] sm:$0xff]
    %v575 = vld [vmem:[#allocation8 + $0x1d8] sm:$0xff]
    %v576 = vld [vmem:[#allocation8 + $0x1e0] sm:$0xff]
    %v577 = vld [vmem:[#allocation8 + $0x1e8] sm:$0xff]
    %v578 = vld [vmem:[#allocation8 + $0x1f0] sm:$0xff]
    %v579 = vld [vmem:[#allocation8 + $0x1f8] sm:$0xff]
    %v581 = vlaneseq
    %v582 = vshrl.u32 %v581, 7
    %v583 = vsub.s32 0, %v582
    %v584 = vrot.slane %v281, %v583
    %v585 = vlaneseq
    %v586 = vshrl.u32 %v585, 7
    %v587 = vsub.s32 1, %v586
    %v588 = vrot.slane %v281, %v587
    %v589 = vlaneseq
    %v590 = vshrl.u32 %v589, 7
    %v591 = vsub.s32 2, %v590
    %v592 = vrot.slane %v281, %v591
    %v593 = vlaneseq
    %v594 = vshrl.u32 %v593, 7
    %v595 = vsub.s32 3, %v594
    %v596 = vrot.slane %v281, %v595
    %601 = vmatprep.subr.mxu0 %v517
    %602 = vmatpush1.msra.mxu0 %v516
    %603 = vmatprep.subr.mxu0 %v521
    %604 = vmatpush1.msra.mxu0 %v520
    %605 = vmatprep.subr.mxu0 %v525
    %606 = vmatpush1.msra.mxu0 %v524
    %607 = vmatprep.subr.mxu0 %v529
    %608 = vmatpush1.msra.mxu0 %v528
    %609 = vmatprep.subr.mxu0 %v533
    %610 = vmatpush1.msra.mxu0 %v532
    %611 = vmatprep.subr.mxu0 %v537
    %612 = vmatpush1.msra.mxu0 %v536
    %613 = vmatprep.subr.mxu0 %v541
    %614 = vmatpush1.msra.mxu0 %v540
    %615 = vmatprep.subr.mxu0 %v545
    %616 = vmatpush1.msra.mxu0 %v544
    %617 = vmatprep.subr.mxu0 %v549
    %618 = vmatpush1.msra.mxu0 %v548
    %619 = vmatprep.subr.mxu0 %v553
    %620 = vmatpush1.msra.mxu0 %v552
    %621 = vmatprep.subr.mxu0 %v557
    %622 = vmatpush1.msra.mxu0 %v556
    %623 = vmatprep.subr.mxu0 %v561
    %624 = vmatpush1.msra.mxu0 %v560
    %625 = vmatprep.subr.mxu0 %v565
    %626 = vmatpush1.msra.mxu0 %v564
    %627 = vmatprep.subr.mxu0 %v569
    %628 = vmatpush1.msra.mxu0 %v568
    %629 = vmatprep.subr.mxu0 %v573
    %630 = vmatpush1.msra.mxu0 %v572
    %631 = vmatprep.subr.mxu0 %v577
    %632 = vmatpush1.msra.mxu0 %v576
    %633 = vmatprep.subr.mxu0 0.0
    %634 = vmatpush1.msra.mxu0 0.0
    %635 = vmatprep.subr.mxu0 0.0
    %636 = vmatpush1.msra.mxu0 0.0
    %637 = vmatprep.subr.mxu0 0.0
    %638 = vmatpush1.msra.mxu0 0.0
    %639 = vmatprep.subr.mxu0 0.0
    %640 = vmatpush1.msra.mxu0 0.0
    %641 = vmatprep.subr.mxu0 0.0
    %642 = vmatpush1.msra.mxu0 0.0
    %643 = vmatprep.subr.mxu0 0.0
    %644 = vmatpush1.msra.mxu0 0.0
    %645 = vmatprep.subr.mxu0 0.0
    %646 = vmatpush1.msra.mxu0 0.0
    %647 = vmatprep.subr.mxu0 0.0
    %648 = vmatpush1.msra.mxu0 0.0
    %649 = vmatprep.subr.mxu0 0.0
    %650 = vmatpush1.msra.mxu0 0.0
    %651 = vmatprep.subr.mxu0 0.0
    %652 = vmatpush1.msra.mxu0 0.0
    %653 = vmatprep.subr.mxu0 0.0
    %654 = vmatpush1.msra.mxu0 0.0
    %655 = vmatprep.subr.mxu0 0.0
    %656 = vmatpush1.msra.mxu0 0.0
    %657 = vmatprep.subr.mxu0 0.0
    %658 = vmatpush1.msra.mxu0 0.0
    %659 = vmatprep.subr.mxu0 0.0
    %660 = vmatpush1.msra.mxu0 0.0
    %661 = vmatprep.subr.mxu0 0.0
    %662 = vmatpush1.msra.mxu0 0.0
    %663 = vmatprep.subr.mxu0 0.0
    %664 = vmatpush1.msra.mxu0 0.0
    %665 = vmatprep.mubr.f32.mxu0 0.0
    %666 = vmatmul.mubr.f32.gmra.mrb[0].mxu0 %v515
    %v667 = vpop.f32.mrb[0].mxu0
    %v668 = vadd.f32 %v584, %v667
    %v669 = vpop.f32.mrb[0].mxu0
    %v670 = vadd.f32 %v588, %v669
    %671 = vdwg.mxu0
    %672 = vmatprep.subr.mxu0 %v519
    %673 = vmatpush1.msra.mxu0 %v518
    %674 = vmatprep.subr.mxu0 %v523
    %675 = vmatpush1.msra.mxu0 %v522
    %676 = vmatprep.subr.mxu0 %v527
    %677 = vmatpush1.msra.mxu0 %v526
    %678 = vmatprep.subr.mxu0 %v531
    %679 = vmatpush1.msra.mxu0 %v530
    %680 = vmatprep.subr.mxu0 %v535
    %681 = vmatpush1.msra.mxu0 %v534
    %682 = vmatprep.subr.mxu0 %v539
    %683 = vmatpush1.msra.mxu0 %v538
    %684 = vmatprep.subr.mxu0 %v543
    %685 = vmatpush1.msra.mxu0 %v542
    %686 = vmatprep.subr.mxu0 %v547
    %687 = vmatpush1.msra.mxu0 %v546
    %688 = vmatprep.subr.mxu0 %v551
    %689 = vmatpush1.msra.mxu0 %v550
    %690 = vmatprep.subr.mxu0 %v555
    %691 = vmatpush1.msra.mxu0 %v554
    %692 = vmatprep.subr.mxu0 %v559
    %693 = vmatpush1.msra.mxu0 %v558
    %694 = vmatprep.subr.mxu0 %v563
    %695 = vmatpush1.msra.mxu0 %v562
    %696 = vmatprep.subr.mxu0 %v567
    %697 = vmatpush1.msra.mxu0 %v566
    %698 = vmatprep.subr.mxu0 %v571
    %699 = vmatpush1.msra.mxu0 %v570
    %700 = vmatprep.subr.mxu0 %v575
    %701 = vmatpush1.msra.mxu0 %v574
    %702 = vmatprep.subr.mxu0 %v579
    %703 = vmatpush1.msra.mxu0 %v578
    %704 = vmatprep.subr.mxu0 0.0
    %705 = vmatpush1.msra.mxu0 0.0
    %706 = vmatprep.subr.mxu0 0.0
    %707 = vmatpush1.msra.mxu0 0.0
    %708 = vmatprep.subr.mxu0 0.0
    %709 = vmatpush1.msra.mxu0 0.0
    %710 = vmatprep.subr.mxu0 0.0
    %711 = vmatpush1.msra.mxu0 0.0
    %712 = vmatprep.subr.mxu0 0.0
    %713 = vmatpush1.msra.mxu0 0.0
    %714 = vmatprep.subr.mxu0 0.0
    %715 = vmatpush1.msra.mxu0 0.0
    %716 = vmatprep.subr.mxu0 0.0
    %717 = vmatpush1.msra.mxu0 0.0
    %718 = vmatprep.subr.mxu0 0.0
    %719 = vmatpush1.msra.mxu0 0.0
    %720 = vmatprep.subr.mxu0 0.0
    %721 = vmatpush1.msra.mxu0 0.0
    %722 = vmatprep.subr.mxu0 0.0
    %723 = vmatpush1.msra.mxu0 0.0
    %724 = vmatprep.subr.mxu0 0.0
    %725 = vmatpush1.msra.mxu0 0.0
    %726 = vmatprep.subr.mxu0 0.0
    %727 = vmatpush1.msra.mxu0 0.0
    %728 = vmatprep.subr.mxu0 0.0
    %729 = vmatpush1.msra.mxu0 0.0
    %730 = vmatprep.subr.mxu0 0.0
    %731 = vmatpush1.msra.mxu0 0.0
    %732 = vmatprep.subr.mxu0 0.0
    %733 = vmatpush1.msra.mxu0 0.0
    %734 = vmatprep.subr.mxu0 0.0
    %735 = vmatpush1.msra.mxu0 0.0
    %736 = vmatprep.mubr.f32.mxu0 0.0
    %737 = vmatmul.mubr.f32.gmra.mrb[0].mxu0 %v515
    %v738 = vpop.f32.mrb[0].mxu0
    %v739 = vadd.f32 %v592, %v738
    %v740 = vpop.f32.mrb[0].mxu0
    %v741 = vadd.f32 %v596, %v740
    %742 = vdwg.mxu0
    %v743 = vld [vmem:[#allocation9] sm:$0xff]
    %v744 = vld [vmem:[#allocation9 + $0x8] sm:$0xff]
    %v745 = vld [vmem:[#allocation9 + $0x10] sm:$0xff]
    %v746 = vld [vmem:[#allocation9 + $0x18] sm:$0xff]
    %v747 = vld [vmem:[#allocation9 + $0x20] sm:$0xff]
    %v748 = vld [vmem:[#allocation9 + $0x28] sm:$0xff]
    %v749 = vld [vmem:[#allocation9 + $0x30] sm:$0xff]
    %v750 = vld [vmem:[#allocation9 + $0x38] sm:$0xff]
    %v751 = vld [vmem:[#allocation9 + $0x40] sm:$0xff]
    %v752 = vld [vmem:[#allocation9 + $0x48] sm:$0xff]
    %v753 = vld [vmem:[#allocation9 + $0x50] sm:$0xff]
    %v754 = vld [vmem:[#allocation9 + $0x58] sm:$0xff]
    %v755 = vld [vmem:[#allocation9 + $0x60] sm:$0xff]
    %v756 = vld [vmem:[#allocation9 + $0x68] sm:$0xff]
    %v757 = vld [vmem:[#allocation9 + $0x70] sm:$0xff]
    %v758 = vld [vmem:[#allocation9 + $0x78] sm:$0xff]
    %v759 = vld [vmem:[#allocation9 + $0x80] sm:$0xff]
    %v760 = vld [vmem:[#allocation9 + $0x88] sm:$0xff]
    %v761 = vld [vmem:[#allocation9 + $0x90] sm:$0xff]
    %v762 = vld [vmem:[#allocation9 + $0x98] sm:$0xff]
    %v763 = vld [vmem:[#allocation9 + $0xa0] sm:$0xff]
    %v764 = vld [vmem:[#allocation9 + $0xa8] sm:$0xff]
    %v765 = vld [vmem:[#allocation9 + $0xb0] sm:$0xff]
    %v766 = vld [vmem:[#allocation9 + $0xb8] sm:$0xff]
    %v767 = vld [vmem:[#allocation9 + $0xc0] sm:$0xff]
    %v768 = vld [vmem:[#allocation9 + $0xc8] sm:$0xff]
    %v769 = vld [vmem:[#allocation9 + $0xd0] sm:$0xff]
    %v770 = vld [vmem:[#allocation9 + $0xd8] sm:$0xff]
    %v771 = vld [vmem:[#allocation9 + $0xe0] sm:$0xff]
    %v772 = vld [vmem:[#allocation9 + $0xe8] sm:$0xff]
    %v773 = vld [vmem:[#allocation9 + $0xf0] sm:$0xff]
    %v774 = vld [vmem:[#allocation9 + $0xf8] sm:$0xff]
    %v775 = vld [vmem:[#allocation9 + $0x100] sm:$0xff]
    %v776 = vld [vmem:[#allocation9 + $0x108] sm:$0xff]
    %v777 = vld [vmem:[#allocation9 + $0x110] sm:$0xff]
    %v778 = vld [vmem:[#allocation9 + $0x118] sm:$0xff]
    %v779 = vld [vmem:[#allocation9 + $0x120] sm:$0xff]
    %v780 = vld [vmem:[#allocation9 + $0x128] sm:$0xff]
    %v781 = vld [vmem:[#allocation9 + $0x130] sm:$0xff]
    %v782 = vld [vmem:[#allocation9 + $0x138] sm:$0xff]
    %v783 = vld [vmem:[#allocation9 + $0x140] sm:$0xff]
    %v784 = vld [vmem:[#allocation9 + $0x148] sm:$0xff]
    %v785 = vld [vmem:[#allocation9 + $0x150] sm:$0xff]
    %v786 = vld [vmem:[#allocation9 + $0x158] sm:$0xff]
    %v787 = vld [vmem:[#allocation9 + $0x160] sm:$0xff]
    %v788 = vld [vmem:[#allocation9 + $0x168] sm:$0xff]
    %v789 = vld [vmem:[#allocation9 + $0x170] sm:$0xff]
    %v790 = vld [vmem:[#allocation9 + $0x178] sm:$0xff]
    %v791 = vld [vmem:[#allocation9 + $0x180] sm:$0xff]
    %v792 = vld [vmem:[#allocation9 + $0x188] sm:$0xff]
    %v793 = vld [vmem:[#allocation9 + $0x190] sm:$0xff]
    %v794 = vld [vmem:[#allocation9 + $0x198] sm:$0xff]
    %v795 = vld [vmem:[#allocation9 + $0x1a0] sm:$0xff]
    %v796 = vld [vmem:[#allocation9 + $0x1a8] sm:$0xff]
    %v797 = vld [vmem:[#allocation9 + $0x1b0] sm:$0xff]
    %v798 = vld [vmem:[#allocation9 + $0x1b8] sm:$0xff]
    %v799 = vld [vmem:[#allocation9 + $0x1c0] sm:$0xff]
    %v800 = vld [vmem:[#allocation9 + $0x1c8] sm:$0xff]
    %v801 = vld [vmem:[#allocation9 + $0x1d0] sm:$0xff]
    %v802 = vld [vmem:[#allocation9 + $0x1d8] sm:$0xff]
    %v803 = vld [vmem:[#allocation9 + $0x1e0] sm:$0xff]
    %v804 = vld [vmem:[#allocation9 + $0x1e8] sm:$0xff]
    %v805 = vld [vmem:[#allocation9 + $0x1f0] sm:$0xff]
    %v806 = vld [vmem:[#allocation9 + $0x1f8] sm:$0xff]
    %807 = vmatprep.subr.mxu0 %v744
    %808 = vmatpush1.msra.mxu0 %v743
    %809 = vmatprep.subr.mxu0 %v748
    %810 = vmatpush1.msra.mxu0 %v747
    %811 = vmatprep.subr.mxu0 %v752
    %812 = vmatpush1.msra.mxu0 %v751
    %813 = vmatprep.subr.mxu0 %v756
    %814 = vmatpush1.msra.mxu0 %v755
    %815 = vmatprep.subr.mxu0 %v760
    %816 = vmatpush1.msra.mxu0 %v759
    %817 = vmatprep.subr.mxu0 %v764
    %818 = vmatpush1.msra.mxu0 %v763
    %819 = vmatprep.subr.mxu0 %v768
    %820 = vmatpush1.msra.mxu0 %v767
    %821 = vmatprep.subr.mxu0 %v772
    %822 = vmatpush1.msra.mxu0 %v771
    %823 = vmatprep.subr.mxu0 %v776
    %824 = vmatpush1.msra.mxu0 %v775
    %825 = vmatprep.subr.mxu0 %v780
    %826 = vmatpush1.msra.mxu0 %v779
    %827 = vmatprep.subr.mxu0 %v784
    %828 = vmatpush1.msra.mxu0 %v783
    %829 = vmatprep.subr.mxu0 %v788
    %830 = vmatpush1.msra.mxu0 %v787
    %831 = vmatprep.subr.mxu0 %v792
    %832 = vmatpush1.msra.mxu0 %v791
    %833 = vmatprep.subr.mxu0 %v796
    %834 = vmatpush1.msra.mxu0 %v795
    %835 = vmatprep.subr.mxu0 %v800
    %836 = vmatpush1.msra.mxu0 %v799
    %837 = vmatprep.subr.mxu0 %v804
    %838 = vmatpush1.msra.mxu0 %v803
    %839 = vmatprep.subr.mxu0 0.0
    %840 = vmatpush1.msra.mxu0 0.0
    %841 = vmatprep.subr.mxu0 0.0
    %842 = vmatpush1.msra.mxu0 0.0
    %843 = vmatprep.subr.mxu0 0.0
    %844 = vmatpush1.msra.mxu0 0.0
    %845 = vmatprep.subr.mxu0 0.0
    %846 = vmatpush1.msra.mxu0 0.0
    %847 = vmatprep.subr.mxu0 0.0
    %848 = vmatpush1.msra.mxu0 0.0
    %849 = vmatprep.subr.mxu0 0.0
    %850 = vmatpush1.msra.mxu0 0.0
    %851 = vmatprep.subr.mxu0 0.0
    %852 = vmatpush1.msra.mxu0 0.0
    %853 = vmatprep.subr.mxu0 0.0
    %854 = vmatpush1.msra.mxu0 0.0
    %855 = vmatprep.subr.mxu0 0.0
    %856 = vmatpush1.msra.mxu0 0.0
    %857 = vmatprep.subr.mxu0 0.0
    %858 = vmatpush1.msra.mxu0 0.0
    %859 = vmatprep.subr.mxu0 0.0
    %860 = vmatpush1.msra.mxu0 0.0
    %861 = vmatprep.subr.mxu0 0.0
    %862 = vmatpush1.msra.mxu0 0.0
    %863 = vmatprep.subr.mxu0 0.0
    %864 = vmatpush1.msra.mxu0 0.0
    %865 = vmatprep.subr.mxu0 0.0
    %866 = vmatpush1.msra.mxu0 0.0
    %867 = vmatprep.subr.mxu0 0.0
    %868 = vmatpush1.msra.mxu0 0.0
    %869 = vmatprep.subr.mxu0 0.0
    %870 = vmatpush1.msra.mxu0 0.0
    %871 = vmatprep.mubr.f32.mxu0 0.0
    %872 = vmatmul.mubr.f32.gmra.mrb[0].mxu0 0.0
    %v873 = vpop.f32.mrb[0].mxu0
    %v874 = vadd.f32 0.0, %v873
    %v875 = vpop.f32.mrb[0].mxu0
    %v876 = vadd.f32 0.0, %v875
    %877 = vdwg.mxu0
    %878 = vmatprep.subr.mxu0 %v746
    %879 = vmatpush1.msra.mxu0 %v745
    %880 = vmatprep.subr.mxu0 %v750
    %881 = vmatpush1.msra.mxu0 %v749
    %882 = vmatprep.subr.mxu0 %v754
    %883 = vmatpush1.msra.mxu0 %v753
    %884 = vmatprep.subr.mxu0 %v758
    %885 = vmatpush1.msra.mxu0 %v757
    %886 = vmatprep.subr.mxu0 %v762
    %887 = vmatpush1.msra.mxu0 %v761
    %888 = vmatprep.subr.mxu0 %v766
    %889 = vmatpush1.msra.mxu0 %v765
    %890 = vmatprep.subr.mxu0 %v770
    %891 = vmatpush1.msra.mxu0 %v769
    %892 = vmatprep.subr.mxu0 %v774
    %893 = vmatpush1.msra.mxu0 %v773
    %894 = vmatprep.subr.mxu0 %v778
    %895 = vmatpush1.msra.mxu0 %v777
    %896 = vmatprep.subr.mxu0 %v782
    %897 = vmatpush1.msra.mxu0 %v781
    %898 = vmatprep.subr.mxu0 %v786
    %899 = vmatpush1.msra.mxu0 %v785
    %900 = vmatprep.subr.mxu0 %v790
    %901 = vmatpush1.msra.mxu0 %v789
    %902 = vmatprep.subr.mxu0 %v794
    %903 = vmatpush1.msra.mxu0 %v793
    %904 = vmatprep.subr.mxu0 %v798
    %905 = vmatpush1.msra.mxu0 %v797
    %906 = vmatprep.subr.mxu0 %v802
    %907 = vmatpush1.msra.mxu0 %v801
    %908 = vmatprep.subr.mxu0 %v806
    %909 = vmatpush1.msra.mxu0 %v805
    %910 = vmatprep.subr.mxu0 0.0
    %911 = vmatpush1.msra.mxu0 0.0
    %912 = vmatprep.subr.mxu0 0.0
    %913 = vmatpush1.msra.mxu0 0.0
    %914 = vmatprep.subr.mxu0 0.0
    %915 = vmatpush1.msra.mxu0 0.0
    %916 = vmatprep.subr.mxu0 0.0
    %917 = vmatpush1.msra.mxu0 0.0
    %918 = vmatprep.subr.mxu0 0.0
    %919 = vmatpush1.msra.mxu0 0.0
    %920 = vmatprep.subr.mxu0 0.0
    %921 = vmatpush1.msra.mxu0 0.0
    %922 = vmatprep.subr.mxu0 0.0
    %923 = vmatpush1.msra.mxu0 0.0
    %924 = vmatprep.subr.mxu0 0.0
    %925 = vmatpush1.msra.mxu0 0.0
    %926 = vmatprep.subr.mxu0 0.0
    %927 = vmatpush1.msra.mxu0 0.0
    %928 = vmatprep.subr.mxu0 0.0
    %929 = vmatpush1.msra.mxu0 0.0
    %930 = vmatprep.subr.mxu0 0.0
    %931 = vmatpush1.msra.mxu0 0.0
    %932 = vmatprep.subr.mxu0 0.0
    %933 = vmatpush1.msra.mxu0 0.0
    %934 = vmatprep.subr.mxu0 0.0
    %935 = vmatpush1.msra.mxu0 0.0
    %936 = vmatprep.subr.mxu0 0.0
    %937 = vmatpush1.msra.mxu0 0.0
    %938 = vmatprep.subr.mxu0 0.0
    %939 = vmatpush1.msra.mxu0 0.0
    %940 = vmatprep.subr.mxu0 0.0
    %941 = vmatpush1.msra.mxu0 0.0
    %942 = vmatprep.mubr.f32.mxu0 0.0
    %943 = vmatmul.mubr.f32.gmra.mrb[0].mxu0 0.0
    %v944 = vpop.f32.mrb[0].mxu0
    %v945 = vadd.f32 0.0, %v944
    %v946 = vpop.f32.mrb[0].mxu0
    %v947 = vadd.f32 0.0, %v946
    %948 = vdwg.mxu0
    %v949 = vadd.f32 %v668, %v874
    %v950 = vadd.f32 %v670, %v876
    %v951 = vadd.f32 %v739, %v945
    %v952 = vadd.f32 %v741, %v947
    %v953 = vxor.u32 %v949, 2147483648
    %v954 = vmul.f32 %v953, 1.442695
    %v955 = vpow.pop %v954
    %v956 = vadd.f32 %v955, 1.0
    %v957 = vrcp.pop %v956
    %v958 = vmul.f32 1.0, %v957
    %v959 = vxor.u32 %v950, 2147483648
    %v960 = vmul.f32 %v959, 1.442695
    %v961 = vpow.pop %v960
    %v962 = vadd.f32 %v961, 1.0
    %v963 = vrcp.pop %v962
    %v964 = vmul.f32 1.0, %v963
    %v965 = vtanh.pop %v951
    %v966 = vxor.u32 %v952, 2147483648
    %v967 = vmul.f32 %v966, 1.442695
    %v968 = vpow.pop %v967
    %v969 = vadd.f32 %v968, 1.0
    %v970 = vrcp.pop %v969
    %v971 = vmul.f32 1.0, %v970
    %v972 = vmul.f32 %v964, 0.0
    %v973 = vmul.f32 %v958, %v965
    %v974 = vadd.f32 %v972, %v973
    %v975 = vtanh.pop %v974
    %v976 = vmul.f32 %v971, %v975
    %977 = vmatprep.subr.mxu0 %v283
    %978 = vmatpush1.msra.mxu0 %v282
    %979 = vmatprep.subr.mxu0 %v287
    %980 = vmatpush1.msra.mxu0 %v286
    %981 = vmatprep.subr.mxu0 %v291
    %982 = vmatpush1.msra.mxu0 %v290
    %983 = vmatprep.subr.mxu0 %v295
    %984 = vmatpush1.msra.mxu0 %v294
    %985 = vmatprep.subr.mxu0 %v299
    %986 = vmatpush1.msra.mxu0 %v298
    %987 = vmatprep.subr.mxu0 %v303
    %988 = vmatpush1.msra.mxu0 %v302
    %989 = vmatprep.subr.mxu0 %v307
    %990 = vmatpush1.msra.mxu0 %v306
    %991 = vmatprep.subr.mxu0 %v311
    %992 = vmatpush1.msra.mxu0 %v310
    %993 = vmatprep.subr.mxu0 %v315
    %994 = vmatpush1.msra.mxu0 %v314
    %995 = vmatprep.subr.mxu0 %v319
    %996 = vmatpush1.msra.mxu0 %v318
    %997 = vmatprep.subr.mxu0 %v323
    %998 = vmatpush1.msra.mxu0 %v322
    %999 = vmatprep.subr.mxu0 %v327
    %1000 = vmatpush1.msra.mxu0 %v326
    %1001 = vmatprep.subr.mxu0 %v331
    %1002 = vmatpush1.msra.mxu0 %v330
    %1003 = vmatprep.subr.mxu0 %v335
    %1004 = vmatpush1.msra.mxu0 %v334
    %1005 = vmatprep.subr.mxu0 %v339
    %1006 = vmatpush1.msra.mxu0 %v338
    %1007 = vmatprep.subr.mxu0 %v343
    %1008 = vmatpush1.msra.mxu0 %v342
    %1009 = vmatprep.subr.mxu0 0.0
    %1010 = vmatpush1.msra.mxu0 0.0
    %1011 = vmatprep.subr.mxu0 0.0
    %1012 = vmatpush1.msra.mxu0 0.0
    %1013 = vmatprep.subr.mxu0 0.0
    %1014 = vmatpush1.msra.mxu0 0.0
    %1015 = vmatprep.subr.mxu0 0.0
    %1016 = vmatpush1.msra.mxu0 0.0
    %1017 = vmatprep.subr.mxu0 0.0
    %1018 = vmatpush1.msra.mxu0 0.0
    %1019 = vmatprep.subr.mxu0 0.0
    %1020 = vmatpush1.msra.mxu0 0.0
    %1021 = vmatprep.subr.mxu0 0.0
    %1022 = vmatpush1.msra.mxu0 0.0
    %1023 = vmatprep.subr.mxu0 0.0
    %1024 = vmatpush1.msra.mxu0 0.0
    %1025 = vmatprep.subr.mxu0 0.0
    %1026 = vmatpush1.msra.mxu0 0.0
    %1027 = vmatprep.subr.mxu0 0.0
    %1028 = vmatpush1.msra.mxu0 0.0
    %1029 = vmatprep.subr.mxu0 0.0
    %1030 = vmatpush1.msra.mxu0 0.0
    %1031 = vmatprep.subr.mxu0 0.0
    %1032 = vmatpush1.msra.mxu0 0.0
    %1033 = vmatprep.subr.mxu0 0.0
    %1034 = vmatpush1.msra.mxu0 0.0
    %1035 = vmatprep.subr.mxu0 0.0
    %1036 = vmatpush1.msra.mxu0 0.0
    %1037 = vmatprep.subr.mxu0 0.0
    %1038 = vmatpush1.msra.mxu0 0.0
    %1039 = vmatprep.subr.mxu0 0.0
    %1040 = vmatpush1.msra.mxu0 0.0
    %1041 = vmatprep.mubr.f32.mxu0 0.0
    %1042 = vmatmul.mubr.f32.gmra.mrb[0].mxu0 %v515
    %v1043 = vpop.f32.mrb[0].mxu0
    %v1044 = vadd.f32 0.0, %v1043
    %v1045 = vpop.f32.mrb[0].mxu0
    %v1046 = vadd.f32 0.0, %v1045
    %1047 = vdwg.mxu0
    %1048 = vmatprep.subr.mxu0 %v285
    %1049 = vmatpush1.msra.mxu0 %v284
    %1050 = vmatprep.subr.mxu0 %v289
    %1051 = vmatpush1.msra.mxu0 %v288
    %1052 = vmatprep.subr.mxu0 %v293
    %1053 = vmatpush1.msra.mxu0 %v292
    %1054 = vmatprep.subr.mxu0 %v297
    %1055 = vmatpush1.msra.mxu0 %v296
    %1056 = vmatprep.subr.mxu0 %v301
    %1057 = vmatpush1.msra.mxu0 %v300
    %1058 = vmatprep.subr.mxu0 %v305
    %1059 = vmatpush1.msra.mxu0 %v304
    %1060 = vmatprep.subr.mxu0 %v309
    %1061 = vmatpush1.msra.mxu0 %v308
    %1062 = vmatprep.subr.mxu0 %v313
    %1063 = vmatpush1.msra.mxu0 %v312
    %1064 = vmatprep.subr.mxu0 %v317
    %1065 = vmatpush1.msra.mxu0 %v316
    %1066 = vmatprep.subr.mxu0 %v321
    %1067 = vmatpush1.msra.mxu0 %v320
    %1068 = vmatprep.subr.mxu0 %v325
    %1069 = vmatpush1.msra.mxu0 %v324
    %1070 = vmatprep.subr.mxu0 %v329
    %1071 = vmatpush1.msra.mxu0 %v328
    %1072 = vmatprep.subr.mxu0 %v333
    %1073 = vmatpush1.msra.mxu0 %v332
    %1074 = vmatprep.subr.mxu0 %v337
    %1075 = vmatpush1.msra.mxu0 %v336
    %1076 = vmatprep.subr.mxu0 %v341
    %1077 = vmatpush1.msra.mxu0 %v340
    %1078 = vmatprep.subr.mxu0 %v345
    %1079 = vmatpush1.msra.mxu0 %v344
    %1080 = vmatprep.subr.mxu0 0.0
    %1081 = vmatpush1.msra.mxu0 0.0
    %1082 = vmatprep.subr.mxu0 0.0
    %1083 = vmatpush1.msra.mxu0 0.0
    %1084 = vmatprep.subr.mxu0 0.0
    %1085 = vmatpush1.msra.mxu0 0.0
    %1086 = vmatprep.subr.mxu0 0.0
    %1087 = vmatpush1.msra.mxu0 0.0
    %1088 = vmatprep.subr.mxu0 0.0
    %1089 = vmatpush1.msra.mxu0 0.0
    %1090 = vmatprep.subr.mxu0 0.0
    %1091 = vmatpush1.msra.mxu0 0.0
    %1092 = vmatprep.subr.mxu0 0.0
    %1093 = vmatpush1.msra.mxu0 0.0
    %1094 = vmatprep.subr.mxu0 0.0
    %1095 = vmatpush1.msra.mxu0 0.0
    %1096 = vmatprep.subr.mxu0 0.0
    %1097 = vmatpush1.msra.mxu0 0.0
    %1098 = vmatprep.subr.mxu0 0.0
    %1099 = vmatpush1.msra.mxu0 0.0
    %1100 = vmatprep.subr.mxu0 0.0
    %1101 = vmatpush1.msra.mxu0 0.0
    %1102 = vmatprep.subr.mxu0 0.0
    %1103 = vmatpush1.msra.mxu0 0.0
    %1104 = vmatprep.subr.mxu0 0.0
    %1105 = vmatpush1.msra.mxu0 0.0
    %1106 = vmatprep.subr.mxu0 0.0
    %1107 = vmatpush1.msra.mxu0 0.0
    %1108 = vmatprep.subr.mxu0 0.0
    %1109 = vmatpush1.msra.mxu0 0.0
    %1110 = vmatprep.subr.mxu0 0.0
    %1111 = vmatpush1.msra.mxu0 0.0
    %1112 = vmatprep.mubr.f32.mxu0 0.0
    %1113 = vmatmul.mubr.f32.gmra.mrb[0].mxu0 %v515
    %v1114 = vpop.f32.mrb[0].mxu0
    %v1115 = vadd.f32 0.0, %v1114
    %v1116 = vpop.f32.mrb[0].mxu0
    %v1117 = vadd.f32 0.0, %v1116
    %1118 = vdwg.mxu0
    %v1123 = vrot.slane %v1044, 7
    %v1124 = vrot.slane %v1046, 7
    %v1125 = vrot.slane %v1115, 7
    %v1126 = vrot.slane %v1117, 7
    %v1131 = vadd.f32 %v206, %v1123
    %v1132 = vadd.f32 %v208, %v1124
    %v1133 = vadd.f32 %v277, %v1125
    %v1134 = vadd.f32 %v279, %v1126
    %v1135 = vxor.u32 %v1131, 2147483648
    %v1136 = vmul.f32 %v1135, 1.442695
    %v1137 = vpow.pop %v1136
    %v1138 = vadd.f32 %v1137, 1.0
    %v1139 = vrcp.pop %v1138
    %v1140 = vmul.f32 1.0, %v1139
    %v1141 = vxor.u32 %v1132, 2147483648
    %v1142 = vmul.f32 %v1141, 1.442695
    %v1143 = vpow.pop %v1142
    %v1144 = vadd.f32 %v1143, 1.0
    %v1145 = vrcp.pop %v1144
    %v1146 = vmul.f32 1.0, %v1145
    %v1147 = vtanh.pop %v1133
    %v1148 = vxor.u32 %v1134, 2147483648
    %v1149 = vmul.f32 %v1148, 1.442695
    %v1150 = vpow.pop %v1149
    %v1151 = vadd.f32 %v1150, 1.0
    %v1152 = vrcp.pop %v1151
    %v1153 = vmul.f32 1.0, %v1152
    %v1155 = vrot.slane %v513, 7
    %v1157 = vmul.f32 %v1146, %v1155
    %v1158 = vmul.f32 %v1140, %v1147
    %v1159 = vadd.f32 %v1157, %v1158
    %v1160 = vtanh.pop %v1159
    %v1161 = vmul.f32 %v1153, %v1160
    %v1163 = vrot.slane %v1161, 1
    %1165 = vmatprep.subr.mxu0 %v517
    %1166 = vmatpush1.msra.mxu0 %v516
    %1167 = vmatprep.subr.mxu0 %v521
    %1168 = vmatpush1.msra.mxu0 %v520
    %1169 = vmatprep.subr.mxu0 %v525
    %1170 = vmatpush1.msra.mxu0 %v524
    %1171 = vmatprep.subr.mxu0 %v529
    %1172 = vmatpush1.msra.mxu0 %v528
    %1173 = vmatprep.subr.mxu0 %v533
    %1174 = vmatpush1.msra.mxu0 %v532
    %1175 = vmatprep.subr.mxu0 %v537
    %1176 = vmatpush1.msra.mxu0 %v536
    %1177 = vmatprep.subr.mxu0 %v541
    %1178 = vmatpush1.msra.mxu0 %v540
    %1179 = vmatprep.subr.mxu0 %v545
    %1180 = vmatpush1.msra.mxu0 %v544
    %1181 = vmatprep.subr.mxu0 %v549
    %1182 = vmatpush1.msra.mxu0 %v548
    %1183 = vmatprep.subr.mxu0 %v553
    %1184 = vmatpush1.msra.mxu0 %v552
    %1185 = vmatprep.subr.mxu0 %v557
    %1186 = vmatpush1.msra.mxu0 %v556
    %1187 = vmatprep.subr.mxu0 %v561
    %1188 = vmatpush1.msra.mxu0 %v560
    %1189 = vmatprep.subr.mxu0 %v565
    %1190 = vmatpush1.msra.mxu0 %v564
    %1191 = vmatprep.subr.mxu0 %v569
    %1192 = vmatpush1.msra.mxu0 %v568
    %1193 = vmatprep.subr.mxu0 %v573
    %1194 = vmatpush1.msra.mxu0 %v572
    %1195 = vmatprep.subr.mxu0 %v577
    %1196 = vmatpush1.msra.mxu0 %v576
    %1197 = vmatprep.subr.mxu0 0.0
    %1198 = vmatpush1.msra.mxu0 0.0
    %1199 = vmatprep.subr.mxu0 0.0
    %1200 = vmatpush1.msra.mxu0 0.0
    %1201 = vmatprep.subr.mxu0 0.0
    %1202 = vmatpush1.msra.mxu0 0.0
    %1203 = vmatprep.subr.mxu0 0.0
    %1204 = vmatpush1.msra.mxu0 0.0
    %1205 = vmatprep.subr.mxu0 0.0
    %1206 = vmatpush1.msra.mxu0 0.0
    %1207 = vmatprep.subr.mxu0 0.0
    %1208 = vmatpush1.msra.mxu0 0.0
    %1209 = vmatprep.subr.mxu0 0.0
    %1210 = vmatpush1.msra.mxu0 0.0
    %1211 = vmatprep.subr.mxu0 0.0
    %1212 = vmatpush1.msra.mxu0 0.0
    %1213 = vmatprep.subr.mxu0 0.0
    %1214 = vmatpush1.msra.mxu0 0.0
    %1215 = vmatprep.subr.mxu0 0.0
    %1216 = vmatpush1.msra.mxu0 0.0
    %1217 = vmatprep.subr.mxu0 0.0
    %1218 = vmatpush1.msra.mxu0 0.0
    %1219 = vmatprep.subr.mxu0 0.0
    %1220 = vmatpush1.msra.mxu0 0.0
    %1221 = vmatprep.subr.mxu0 0.0
    %1222 = vmatpush1.msra.mxu0 0.0
    %1223 = vmatprep.subr.mxu0 0.0
    %1224 = vmatpush1.msra.mxu0 0.0
    %1225 = vmatprep.subr.mxu0 0.0
    %1226 = vmatpush1.msra.mxu0 0.0
    %1227 = vmatprep.subr.mxu0 0.0
    %1228 = vmatpush1.msra.mxu0 0.0
    %1229 = vmatprep.mubr.f32.mxu0 0.0
    %1230 = vmatmul.mubr.f32.gmra.mrb[0].mxu0 %v1163
    %v1231 = vpop.f32.mrb[0].mxu0
    %v1232 = vadd.f32 %v584, %v1231
    %v1233 = vpop.f32.mrb[0].mxu0
    %v1234 = vadd.f32 %v588, %v1233
    %1235 = vdwg.mxu0
    %1236 = vmatprep.subr.mxu0 %v519
    %1237 = vmatpush1.msra.mxu0 %v518
    %1238 = vmatprep.subr.mxu0 %v523
    %1239 = vmatpush1.msra.mxu0 %v522
    %1240 = vmatprep.subr.mxu0 %v527
    %1241 = vmatpush1.msra.mxu0 %v526
    %1242 = vmatprep.subr.mxu0 %v531
    %1243 = vmatpush1.msra.mxu0 %v530
    %1244 = vmatprep.subr.mxu0 %v535
    %1245 = vmatpush1.msra.mxu0 %v534
    %1246 = vmatprep.subr.mxu0 %v539
    %1247 = vmatpush1.msra.mxu0 %v538
    %1248 = vmatprep.subr.mxu0 %v543
    %1249 = vmatpush1.msra.mxu0 %v542
    %1250 = vmatprep.subr.mxu0 %v547
    %1251 = vmatpush1.msra.mxu0 %v546
    %1252 = vmatprep.subr.mxu0 %v551
    %1253 = vmatpush1.msra.mxu0 %v550
    %1254 = vmatprep.subr.mxu0 %v555
    %1255 = vmatpush1.msra.mxu0 %v554
    %1256 = vmatprep.subr.mxu0 %v559
    %1257 = vmatpush1.msra.mxu0 %v558
    %1258 = vmatprep.subr.mxu0 %v563
    %1259 = vmatpush1.msra.mxu0 %v562
    %1260 = vmatprep.subr.mxu0 %v567
    %1261 = vmatpush1.msra.mxu0 %v566
    %1262 = vmatprep.subr.mxu0 %v571
    %1263 = vmatpush1.msra.mxu0 %v570
    %1264 = vmatprep.subr.mxu0 %v575
    %1265 = vmatpush1.msra.mxu0 %v574
    %1266 = vmatprep.subr.mxu0 %v579
    %1267 = vmatpush1.msra.mxu0 %v578
    %1268 = vmatprep.subr.mxu0 0.0
    %1269 = vmatpush1.msra.mxu0 0.0
    %1270 = vmatprep.subr.mxu0 0.0
    %1271 = vmatpush1.msra.mxu0 0.0
    %1272 = vmatprep.subr.mxu0 0.0
    %1273 = vmatpush1.msra.mxu0 0.0
    %1274 = vmatprep.subr.mxu0 0.0
    %1275 = vmatpush1.msra.mxu0 0.0
    %1276 = vmatprep.subr.mxu0 0.0
    %1277 = vmatpush1.msra.mxu0 0.0
    %1278 = vmatprep.subr.mxu0 0.0
    %1279 = vmatpush1.msra.mxu0 0.0
    %1280 = vmatprep.subr.mxu0 0.0
    %1281 = vmatpush1.msra.mxu0 0.0
    %1282 = vmatprep.subr.mxu0 0.0
    %1283 = vmatpush1.msra.mxu0 0.0
    %1284 = vmatprep.subr.mxu0 0.0
    %1285 = vmatpush1.msra.mxu0 0.0
    %1286 = vmatprep.subr.mxu0 0.0
    %1287 = vmatpush1.msra.mxu0 0.0
    %1288 = vmatprep.subr.mxu0 0.0
    %1289 = vmatpush1.msra.mxu0 0.0
    %1290 = vmatprep.subr.mxu0 0.0
    %1291 = vmatpush1.msra.mxu0 0.0
    %1292 = vmatprep.subr.mxu0 0.0
    %1293 = vmatpush1.msra.mxu0 0.0
    %1294 = vmatprep.subr.mxu0 0.0
    %1295 = vmatpush1.msra.mxu0 0.0
    %1296 = vmatprep.subr.mxu0 0.0
    %1297 = vmatpush1.msra.mxu0 0.0
    %1298 = vmatprep.subr.mxu0 0.0
    %1299 = vmatpush1.msra.mxu0 0.0
    %1300 = vmatprep.mubr.f32.mxu0 0.0
    %1301 = vmatmul.mubr.f32.gmra.mrb[0].mxu0 %v1163
    %v1302 = vpop.f32.mrb[0].mxu0
    %v1303 = vadd.f32 %v592, %v1302
    %v1304 = vpop.f32.mrb[0].mxu0
    %v1305 = vadd.f32 %v596, %v1304
    %1306 = vdwg.mxu0
    %1307 = vmatprep.subr.mxu0 %v744
    %1308 = vmatpush1.msra.mxu0 %v743
    %1309 = vmatprep.subr.mxu0 %v748
    %1310 = vmatpush1.msra.mxu0 %v747
    %1311 = vmatprep.subr.mxu0 %v752
    %1312 = vmatpush1.msra.mxu0 %v751
    %1313 = vmatprep.subr.mxu0 %v756
    %1314 = vmatpush1.msra.mxu0 %v755
    %1315 = vmatprep.subr.mxu0 %v760
    %1316 = vmatpush1.msra.mxu0 %v759
    %1317 = vmatprep.subr.mxu0 %v764
    %1318 = vmatpush1.msra.mxu0 %v763
    %1319 = vmatprep.subr.mxu0 %v768
    %1320 = vmatpush1.msra.mxu0 %v767
    %1321 = vmatprep.subr.mxu0 %v772
    %1322 = vmatpush1.msra.mxu0 %v771
    %1323 = vmatprep.subr.mxu0 %v776
    %1324 = vmatpush1.msra.mxu0 %v775
    %1325 = vmatprep.subr.mxu0 %v780
    %1326 = vmatpush1.msra.mxu0 %v779
    %1327 = vmatprep.subr.mxu0 %v784
    %1328 = vmatpush1.msra.mxu0 %v783
    %1329 = vmatprep.subr.mxu0 %v788
    %1330 = vmatpush1.msra.mxu0 %v787
    %1331 = vmatprep.subr.mxu0 %v792
    %1332 = vmatpush1.msra.mxu0 %v791
    %1333 = vmatprep.subr.mxu0 %v796
    %1334 = vmatpush1.msra.mxu0 %v795
    %1335 = vmatprep.subr.mxu0 %v800
    %1336 = vmatpush1.msra.mxu0 %v799
    %1337 = vmatprep.subr.mxu0 %v804
    %1338 = vmatpush1.msra.mxu0 %v803
    %1339 = vmatprep.subr.mxu0 0.0
    %1340 = vmatpush1.msra.mxu0 0.0
    %1341 = vmatprep.subr.mxu0 0.0
    %1342 = vmatpush1.msra.mxu0 0.0
    %1343 = vmatprep.subr.mxu0 0.0
    %1344 = vmatpush1.msra.mxu0 0.0
    %1345 = vmatprep.subr.mxu0 0.0
    %1346 = vmatpush1.msra.mxu0 0.0
    %1347 = vmatprep.subr.mxu0 0.0
    %1348 = vmatpush1.msra.mxu0 0.0
    %1349 = vmatprep.subr.mxu0 0.0
    %1350 = vmatpush1.msra.mxu0 0.0
    %1351 = vmatprep.subr.mxu0 0.0
    %1352 = vmatpush1.msra.mxu0 0.0
    %1353 = vmatprep.subr.mxu0 0.0
    %1354 = vmatpush1.msra.mxu0 0.0
    %1355 = vmatprep.subr.mxu0 0.0
    %1356 = vmatpush1.msra.mxu0 0.0
    %1357 = vmatprep.subr.mxu0 0.0
    %1358 = vmatpush1.msra.mxu0 0.0
    %1359 = vmatprep.subr.mxu0 0.0
    %1360 = vmatpush1.msra.mxu0 0.0
    %1361 = vmatprep.subr.mxu0 0.0
    %1362 = vmatpush1.msra.mxu0 0.0
    %1363 = vmatprep.subr.mxu0 0.0
    %1364 = vmatpush1.msra.mxu0 0.0
    %1365 = vmatprep.subr.mxu0 0.0
    %1366 = vmatpush1.msra.mxu0 0.0
    %1367 = vmatprep.subr.mxu0 0.0
    %1368 = vmatpush1.msra.mxu0 0.0
    %1369 = vmatprep.subr.mxu0 0.0
    %1370 = vmatpush1.msra.mxu0 0.0
    %1371 = vmatprep.mubr.f32.mxu0 0.0
    %1372 = vmatmul.mubr.f32.gmra.mrb[0].mxu0 %v976
    %v1373 = vpop.f32.mrb[0].mxu0
    %v1374 = vadd.f32 0.0, %v1373
    %v1375 = vpop.f32.mrb[0].mxu0
    %v1376 = vadd.f32 0.0, %v1375
    %1377 = vdwg.mxu0
    %1378 = vmatprep.subr.mxu0 %v746
    %1379 = vmatpush1.msra.mxu0 %v745
    %1380 = vmatprep.subr.mxu0 %v750
    %1381 = vmatpush1.msra.mxu0 %v749
    %1382 = vmatprep.subr.mxu0 %v754
    %1383 = vmatpush1.msra.mxu0 %v753
    %1384 = vmatprep.subr.mxu0 %v758
    %1385 = vmatpush1.msra.mxu0 %v757
    %1386 = vmatprep.subr.mxu0 %v762
    %1387 = vmatpush1.msra.mxu0 %v761
    %1388 = vmatprep.subr.mxu0 %v766
    %1389 = vmatpush1.msra.mxu0 %v765
    %1390 = vmatprep.subr.mxu0 %v770
    %1391 = vmatpush1.msra.mxu0 %v769
    %1392 = vmatprep.subr.mxu0 %v774
    %1393 = vmatpush1.msra.mxu0 %v773
    %1394 = vmatprep.subr.mxu0 %v778
    %1395 = vmatpush1.msra.mxu0 %v777
    %1396 = vmatprep.subr.mxu0 %v782
    %1397 = vmatpush1.msra.mxu0 %v781
    %1398 = vmatprep.subr.mxu0 %v786
    %1399 = vmatpush1.msra.mxu0 %v785
    %1400 = vmatprep.subr.mxu0 %v790
    %1401 = vmatpush1.msra.mxu0 %v789
    %1402 = vmatprep.subr.mxu0 %v794
    %1403 = vmatpush1.msra.mxu0 %v793
    %1404 = vmatprep.subr.mxu0 %v798
    %1405 = vmatpush1.msra.mxu0 %v797
    %1406 = vmatprep.subr.mxu0 %v802
    %1407 = vmatpush1.msra.mxu0 %v801
    %1408 = vmatprep.subr.mxu0 %v806
    %1409 = vmatpush1.msra.mxu0 %v805
    %1410 = vmatprep.subr.mxu0 0.0
    %1411 = vmatpush1.msra.mxu0 0.0
    %1412 = vmatprep.subr.mxu0 0.0
    %1413 = vmatpush1.msra.mxu0 0.0
    %1414 = vmatprep.subr.mxu0 0.0
    %1415 = vmatpush1.msra.mxu0 0.0
    %1416 = vmatprep.subr.mxu0 0.0
    %1417 = vmatpush1.msra.mxu0 0.0
    %1418 = vmatprep.subr.mxu0 0.0
    %1419 = vmatpush1.msra.mxu0 0.0
    %1420 = vmatprep.subr.mxu0 0.0
    %1421 = vmatpush1.msra.mxu0 0.0
    %1422 = vmatprep.subr.mxu0 0.0
    %1423 = vmatpush1.msra.mxu0 0.0
    %1424 = vmatprep.subr.mxu0 0.0
    %1425 = vmatpush1.msra.mxu0 0.0
    %1426 = vmatprep.subr.mxu0 0.0
    %1427 = vmatpush1.msra.mxu0 0.0
    %1428 = vmatprep.subr.mxu0 0.0
    %1429 = vmatpush1.msra.mxu0 0.0
    %1430 = vmatprep.subr.mxu0 0.0
    %1431 = vmatpush1.msra.mxu0 0.0
    %1432 = vmatprep.subr.mxu0 0.0
    %1433 = vmatpush1.msra.mxu0 0.0
    %1434 = vmatprep.subr.mxu0 0.0
    %1435 = vmatpush1.msra.mxu0 0.0
    %1436 = vmatprep.subr.mxu0 0.0
    %1437 = vmatpush1.msra.mxu0 0.0
    %1438 = vmatprep.subr.mxu0 0.0
    %1439 = vmatpush1.msra.mxu0 0.0
    %1440 = vmatprep.subr.mxu0 0.0
    %1441 = vmatpush1.msra.mxu0 0.0
    %1442 = vmatprep.mubr.f32.mxu0 0.0
    %1443 = vmatmul.mubr.f32.gmra.mrb[0].mxu0 %v976
    %v1444 = vpop.f32.mrb[0].mxu0
    %v1445 = vadd.f32 0.0, %v1444
    %v1446 = vpop.f32.mrb[0].mxu0
    %v1447 = vadd.f32 0.0, %v1446
    %1448 = vdwg.mxu0
    %v1449 = vadd.f32 %v1232, %v1374
    %v1450 = vadd.f32 %v1234, %v1376
    %v1451 = vadd.f32 %v1303, %v1445
    %v1452 = vadd.f32 %v1305, %v1447
    %v1453 = vxor.u32 %v1449, 2147483648
    %v1454 = vmul.f32 %v1453, 1.442695
    %v1455 = vpow.pop %v1454
    %v1456 = vadd.f32 %v1455, 1.0
    %v1457 = vrcp.pop %v1456
    %v1458 = vmul.f32 1.0, %v1457
    %v1459 = vxor.u32 %v1450, 2147483648
    %v1460 = vmul.f32 %v1459, 1.442695
    %v1461 = vpow.pop %v1460
    %v1462 = vadd.f32 %v1461, 1.0
    %v1463 = vrcp.pop %v1462
    %v1464 = vmul.f32 1.0, %v1463
    %v1465 = vtanh.pop %v1451
    %v1466 = vxor.u32 %v1452, 2147483648
    %v1467 = vmul.f32 %v1466, 1.442695
    %v1468 = vpow.pop %v1467
    %v1469 = vadd.f32 %v1468, 1.0
    %v1470 = vrcp.pop %v1469
    %v1471 = vmul.f32 1.0, %v1470
    %v1472 = vmul.f32 %v1464, %v974
    %v1473 = vmul.f32 %v1458, %v1465
    %v1474 = vadd.f32 %v1472, %v1473
    %v1475 = vtanh.pop %v1474
    %v1476 = vmul.f32 %v1471, %v1475
    %1477 = vmatprep.subr.mxu0 %v283
    %1478 = vmatpush1.msra.mxu0 %v282
    %1479 = vmatprep.subr.mxu0 %v287
    %1480 = vmatpush1.msra.mxu0 %v286
    %1481 = vmatprep.subr.mxu0 %v291
    %1482 = vmatpush1.msra.mxu0 %v290
    %1483 = vmatprep.subr.mxu0 %v295
    %1484 = vmatpush1.msra.mxu0 %v294
    %1485 = vmatprep.subr.mxu0 %v299
    %1486 = vmatpush1.msra.mxu0 %v298
    %1487 = vmatprep.subr.mxu0 %v303
    %1488 = vmatpush1.msra.mxu0 %v302
    %1489 = vmatprep.subr.mxu0 %v307
    %1490 = vmatpush1.msra.mxu0 %v306
    %1491 = vmatprep.subr.mxu0 %v311
    %1492 = vmatpush1.msra.mxu0 %v310
    %1493 = vmatprep.subr.mxu0 %v315
    %1494 = vmatpush1.msra.mxu0 %v314
    %1495 = vmatprep.subr.mxu0 %v319
    %1496 = vmatpush1.msra.mxu0 %v318
    %1497 = vmatprep.subr.mxu0 %v323
    %1498 = vmatpush1.msra.mxu0 %v322
    %1499 = vmatprep.subr.mxu0 %v327
    %1500 = vmatpush1.msra.mxu0 %v326
    %1501 = vmatprep.subr.mxu0 %v331
    %1502 = vmatpush1.msra.mxu0 %v330
    %1503 = vmatprep.subr.mxu0 %v335
    %1504 = vmatpush1.msra.mxu0 %v334
    %1505 = vmatprep.subr.mxu0 %v339
    %1506 = vmatpush1.msra.mxu0 %v338
    %1507 = vmatprep.subr.mxu0 %v343
    %1508 = vmatpush1.msra.mxu0 %v342
    %1509 = vmatprep.subr.mxu0 0.0
    %1510 = vmatpush1.msra.mxu0 0.0
    %1511 = vmatprep.subr.mxu0 0.0
    %1512 = vmatpush1.msra.mxu0 0.0
    %1513 = vmatprep.subr.mxu0 0.0
    %1514 = vmatpush1.msra.mxu0 0.0
    %1515 = vmatprep.subr.mxu0 0.0
    %1516 = vmatpush1.msra.mxu0 0.0
    %1517 = vmatprep.subr.mxu0 0.0
    %1518 = vmatpush1.msra.mxu0 0.0
    %1519 = vmatprep.subr.mxu0 0.0
    %1520 = vmatpush1.msra.mxu0 0.0
    %1521 = vmatprep.subr.mxu0 0.0
    %1522 = vmatpush1.msra.mxu0 0.0
    %1523 = vmatprep.subr.mxu0 0.0
    %1524 = vmatpush1.msra.mxu0 0.0
    %1525 = vmatprep.subr.mxu0 0.0
    %1526 = vmatpush1.msra.mxu0 0.0
    %1527 = vmatprep.subr.mxu0 0.0
    %1528 = vmatpush1.msra.mxu0 0.0
    %1529 = vmatprep.subr.mxu0 0.0
    %1530 = vmatpush1.msra.mxu0 0.0
    %1531 = vmatprep.subr.mxu0 0.0
    %1532 = vmatpush1.msra.mxu0 0.0
    %1533 = vmatprep.subr.mxu0 0.0
    %1534 = vmatpush1.msra.mxu0 0.0
    %1535 = vmatprep.subr.mxu0 0.0
    %1536 = vmatpush1.msra.mxu0 0.0
    %1537 = vmatprep.subr.mxu0 0.0
    %1538 = vmatpush1.msra.mxu0 0.0
    %1539 = vmatprep.subr.mxu0 0.0
    %1540 = vmatpush1.msra.mxu0 0.0
    %1541 = vmatprep.mubr.f32.mxu0 0.0
    %1542 = vmatmul.mubr.f32.gmra.mrb[0].mxu0 %v1163
    %v1543 = vpop.f32.mrb[0].mxu0
    %v1544 = vadd.f32 0.0, %v1543
    %v1545 = vpop.f32.mrb[0].mxu0
    %v1546 = vadd.f32 0.0, %v1545
    %1547 = vdwg.mxu0
    %1548 = vmatprep.subr.mxu0 %v285
    %1549 = vmatpush1.msra.mxu0 %v284
    %1550 = vmatprep.subr.mxu0 %v289
    %1551 = vmatpush1.msra.mxu0 %v288
    %1552 = vmatprep.subr.mxu0 %v293
    %1553 = vmatpush1.msra.mxu0 %v292
    %1554 = vmatprep.subr.mxu0 %v297
    %1555 = vmatpush1.msra.mxu0 %v296
    %1556 = vmatprep.subr.mxu0 %v301
    %1557 = vmatpush1.msra.mxu0 %v300
    %1558 = vmatprep.subr.mxu0 %v305
    %1559 = vmatpush1.msra.mxu0 %v304
    %1560 = vmatprep.subr.mxu0 %v309
    %1561 = vmatpush1.msra.mxu0 %v308
    %1562 = vmatprep.subr.mxu0 %v313
    %1563 = vmatpush1.msra.mxu0 %v312
    %1564 = vmatprep.subr.mxu0 %v317
    %1565 = vmatpush1.msra.mxu0 %v316
    %1566 = vmatprep.subr.mxu0 %v321
    %1567 = vmatpush1.msra.mxu0 %v320
    %1568 = vmatprep.subr.mxu0 %v325
    %1569 = vmatpush1.msra.mxu0 %v324
    %1570 = vmatprep.subr.mxu0 %v329
    %1571 = vmatpush1.msra.mxu0 %v328
    %1572 = vmatprep.subr.mxu0 %v333
    %1573 = vmatpush1.msra.mxu0 %v332
    %1574 = vmatprep.subr.mxu0 %v337
    %1575 = vmatpush1.msra.mxu0 %v336
    %1576 = vmatprep.subr.mxu0 %v341
    %1577 = vmatpush1.msra.mxu0 %v340
    %1578 = vmatprep.subr.mxu0 %v345
    %1579 = vmatpush1.msra.mxu0 %v344
    %1580 = vmatprep.subr.mxu0 0.0
    %1581 = vmatpush1.msra.mxu0 0.0
    %1582 = vmatprep.subr.mxu0 0.0
    %1583 = vmatpush1.msra.mxu0 0.0
    %1584 = vmatprep.subr.mxu0 0.0
    %1585 = vmatpush1.msra.mxu0 0.0
    %1586 = vmatprep.subr.mxu0 0.0
    %1587 = vmatpush1.msra.mxu0 0.0
    %1588 = vmatprep.subr.mxu0 0.0
    %1589 = vmatpush1.msra.mxu0 0.0
    %1590 = vmatprep.subr.mxu0 0.0
    %1591 = vmatpush1.msra.mxu0 0.0
    %1592 = vmatprep.subr.mxu0 0.0
    %1593 = vmatpush1.msra.mxu0 0.0
    %1594 = vmatprep.subr.mxu0 0.0
    %1595 = vmatpush1.msra.mxu0 0.0
    %1596 = vmatprep.subr.mxu0 0.0
    %1597 = vmatpush1.msra.mxu0 0.0
    %1598 = vmatprep.subr.mxu0 0.0
    %1599 = vmatpush1.msra.mxu0 0.0
    %1600 = vmatprep.subr.mxu0 0.0
    %1601 = vmatpush1.msra.mxu0 0.0
    %1602 = vmatprep.subr.mxu0 0.0
    %1603 = vmatpush1.msra.mxu0 0.0
    %1604 = vmatprep.subr.mxu0 0.0
    %1605 = vmatpush1.msra.mxu0 0.0
    %1606 = vmatprep.subr.mxu0 0.0
    %1607 = vmatpush1.msra.mxu0 0.0
    %1608 = vmatprep.subr.mxu0 0.0
    %1609 = vmatpush1.msra.mxu0 0.0
    %1610 = vmatprep.subr.mxu0 0.0
    %1611 = vmatpush1.msra.mxu0 0.0
    %1612 = vmatprep.mubr.f32.mxu0 0.0
    %1613 = vmatmul.mubr.f32.gmra.mrb[0].mxu0 %v1163
    %v1614 = vpop.f32.mrb[0].mxu0
    %v1615 = vadd.f32 0.0, %v1614
    %v1616 = vpop.f32.mrb[0].mxu0
    %v1617 = vadd.f32 0.0, %v1616
    %1618 = vdwg.mxu0
    %v1623 = vrot.slane %v1544, 6
    %v1624 = vrot.slane %v1546, 6
    %v1625 = vrot.slane %v1615, 6
    %v1626 = vrot.slane %v1617, 6
    %v1631 = vadd.f32 %v206, %v1623
    %v1632 = vadd.f32 %v208, %v1624
    %v1633 = vadd.f32 %v277, %v1625
    %v1634 = vadd.f32 %v279, %v1626
    %v1635 = vxor.u32 %v1631, 2147483648
    %v1636 = vmul.f32 %v1635, 1.442695
    %v1637 = vpow.pop %v1636
    %v1638 = vadd.f32 %v1637, 1.0
    %v1639 = vrcp.pop %v1638
    %v1640 = vmul.f32 1.0, %v1639
    %v1641 = vxor.u32 %v1632, 2147483648
    %v1642 = vmul.f32 %v1641, 1.442695
    %v1643 = vpow.pop %v1642
    %v1644 = vadd.f32 %v1643, 1.0
    %v1645 = vrcp.pop %v1644
    %v1646 = vmul.f32 1.0, %v1645
    %v1647 = vtanh.pop %v1633
    %v1648 = vxor.u32 %v1634, 2147483648
    %v1649 = vmul.f32 %v1648, 1.442695
    %v1650 = vpow.pop %v1649
    %v1651 = vadd.f32 %v1650, 1.0
    %v1652 = vrcp.pop %v1651
    %v1653 = vmul.f32 1.0, %v1652
    %v1655 = vrot.slane %v1159, 7
    %v1657 = vmul.f32 %v1646, %v1655
    %v1658 = vmul.f32 %v1640, %v1647
    %v1659 = vadd.f32 %v1657, %v1658
    %v1660 = vtanh.pop %v1659
    %v1661 = vmul.f32 %v1653, %v1660
    %v1663 = vrot.slane %v1661, 2
    %1665 = vmatprep.subr.mxu0 %v517
    %1666 = vmatpush1.msra.mxu0 %v516
    %1667 = vmatprep.subr.mxu0 %v521
    %1668 = vmatpush1.msra.mxu0 %v520
    %1669 = vmatprep.subr.mxu0 %v525
    %1670 = vmatpush1.msra.mxu0 %v524
    %1671 = vmatprep.subr.mxu0 %v529
    %1672 = vmatpush1.msra.mxu0 %v528
    %1673 = vmatprep.subr.mxu0 %v533
    %1674 = vmatpush1.msra.mxu0 %v532
    %1675 = vmatprep.subr.mxu0 %v537
    %1676 = vmatpush1.msra.mxu0 %v536
    %1677 = vmatprep.subr.mxu0 %v541
    %1678 = vmatpush1.msra.mxu0 %v540
    %1679 = vmatprep.subr.mxu0 %v545
    %1680 = vmatpush1.msra.mxu0 %v544
    %1681 = vmatprep.subr.mxu0 %v549
    %1682 = vmatpush1.msra.mxu0 %v548
    %1683 = vmatprep.subr.mxu0 %v553
    %1684 = vmatpush1.msra.mxu0 %v552
    %1685 = vmatprep.subr.mxu0 %v557
    %1686 = vmatpush1.msra.mxu0 %v556
    %1687 = vmatprep.subr.mxu0 %v561
    %1688 = vmatpush1.msra.mxu0 %v560
    %1689 = vmatprep.subr.mxu0 %v565
    %1690 = vmatpush1.msra.mxu0 %v564
    %1691 = vmatprep.subr.mxu0 %v569
    %1692 = vmatpush1.msra.mxu0 %v568
    %1693 = vmatprep.subr.mxu0 %v573
    %1694 = vmatpush1.msra.mxu0 %v572
    %1695 = vmatprep.subr.mxu0 %v577
    %1696 = vmatpush1.msra.mxu0 %v576
    %1697 = vmatprep.subr.mxu0 0.0
    %1698 = vmatpush1.msra.mxu0 0.0
    %1699 = vmatprep.subr.mxu0 0.0
    %1700 = vmatpush1.msra.mxu0 0.0
    %1701 = vmatprep.subr.mxu0 0.0
    %1702 = vmatpush1.msra.mxu0 0.0
    %1703 = vmatprep.subr.mxu0 0.0
    %1704 = vmatpush1.msra.mxu0 0.0
    %1705 = vmatprep.subr.mxu0 0.0
    %1706 = vmatpush1.msra.mxu0 0.0
    %1707 = vmatprep.subr.mxu0 0.0
    %1708 = vmatpush1.msra.mxu0 0.0
    %1709 = vmatprep.subr.mxu0 0.0
    %1710 = vmatpush1.msra.mxu0 0.0
    %1711 = vmatprep.subr.mxu0 0.0
    %1712 = vmatpush1.msra.mxu0 0.0
    %1713 = vmatprep.subr.mxu0 0.0
    %1714 = vmatpush1.msra.mxu0 0.0
    %1715 = vmatprep.subr.mxu0 0.0
    %1716 = vmatpush1.msra.mxu0 0.0
    %1717 = vmatprep.subr.mxu0 0.0
    %1718 = vmatpush1.msra.mxu0 0.0
    %1719 = vmatprep.subr.mxu0 0.0
    %1720 = vmatpush1.msra.mxu0 0.0
    %1721 = vmatprep.subr.mxu0 0.0
    %1722 = vmatpush1.msra.mxu0 0.0
    %1723 = vmatprep.subr.mxu0 0.0
    %1724 = vmatpush1.msra.mxu0 0.0
    %1725 = vmatprep.subr.mxu0 0.0
    %1726 = vmatpush1.msra.mxu0 0.0
    %1727 = vmatprep.subr.mxu0 0.0
    %1728 = vmatpush1.msra.mxu0 0.0
    %1729 = vmatprep.mubr.f32.mxu0 0.0
    %1730 = vmatmul.mubr.f32.gmra.mrb[0].mxu0 %v1663
    %v1731 = vpop.f32.mrb[0].mxu0
    %v1732 = vadd.f32 %v584, %v1731
    %v1733 = vpop.f32.mrb[0].mxu0
    %v1734 = vadd.f32 %v588, %v1733
    %1735 = vdwg.mxu0
    %1736 = vmatprep.subr.mxu0 %v519
    %1737 = vmatpush1.msra.mxu0 %v518
    %1738 = vmatprep.subr.mxu0 %v523
    %1739 = vmatpush1.msra.mxu0 %v522
    %1740 = vmatprep.subr.mxu0 %v527
    %1741 = vmatpush1.msra.mxu0 %v526
    %1742 = vmatprep.subr.mxu0 %v531
    %1743 = vmatpush1.msra.mxu0 %v530
    %1744 = vmatprep.subr.mxu0 %v535
    %1745 = vmatpush1.msra.mxu0 %v534
    %1746 = vmatprep.subr.mxu0 %v539
    %1747 = vmatpush1.msra.mxu0 %v538
    %1748 = vmatprep.subr.mxu0 %v543
    %1749 = vmatpush1.msra.mxu0 %v542
    %1750 = vmatprep.subr.mxu0 %v547
    %1751 = vmatpush1.msra.mxu0 %v546
    %1752 = vmatprep.subr.mxu0 %v551
    %1753 = vmatpush1.msra.mxu0 %v550
    %1754 = vmatprep.subr.mxu0 %v555
    %1755 = vmatpush1.msra.mxu0 %v554
    %1756 = vmatprep.subr.mxu0 %v559
    %1757 = vmatpush1.msra.mxu0 %v558
    %1758 = vmatprep.subr.mxu0 %v563
    %1759 = vmatpush1.msra.mxu0 %v562
    %1760 = vmatprep.subr.mxu0 %v567
    %1761 = vmatpush1.msra.mxu0 %v566
    %1762 = vmatprep.subr.mxu0 %v571
    %1763 = vmatpush1.msra.mxu0 %v570
    %1764 = vmatprep.subr.mxu0 %v575
    %1765 = vmatpush1.msra.mxu0 %v574
    %1766 = vmatprep.subr.mxu0 %v579
    %1767 = vmatpush1.msra.mxu0 %v578
    %1768 = vmatprep.subr.mxu0 0.0
    %1769 = vmatpush1.msra.mxu0 0.0
    %1770 = vmatprep.subr.mxu0 0.0
    %1771 = vmatpush1.msra.mxu0 0.0
    %1772 = vmatprep.subr.mxu0 0.0
    %1773 = vmatpush1.msra.mxu0 0.0
    %1774 = vmatprep.subr.mxu0 0.0
    %1775 = vmatpush1.msra.mxu0 0.0
    %1776 = vmatprep.subr.mxu0 0.0
    %1777 = vmatpush1.msra.mxu0 0.0
    %1778 = vmatprep.subr.mxu0 0.0
    %1779 = vmatpush1.msra.mxu0 0.0
    %1780 = vmatprep.subr.mxu0 0.0
    %1781 = vmatpush1.msra.mxu0 0.0
    %1782 = vmatprep.subr.mxu0 0.0
    %1783 = vmatpush1.msra.mxu0 0.0
    %1784 = vmatprep.subr.mxu0 0.0
    %1785 = vmatpush1.msra.mxu0 0.0
    %1786 = vmatprep.subr.mxu0 0.0
    %1787 = vmatpush1.msra.mxu0 0.0
    %1788 = vmatprep.subr.mxu0 0.0
    %1789 = vmatpush1.msra.mxu0 0.0
    %1790 = vmatprep.subr.mxu0 0.0
    %1791 = vmatpush1.msra.mxu0 0.0
    %1792 = vmatprep.subr.mxu0 0.0
    %1793 = vmatpush1.msra.mxu0 0.0
    %1794 = vmatprep.subr.mxu0 0.0
    %1795 = vmatpush1.msra.mxu0 0.0
    %1796 = vmatprep.subr.mxu0 0.0
    %1797 = vmatpush1.msra.mxu0 0.0
    %1798 = vmatprep.subr.mxu0 0.0
    %1799 = vmatpush1.msra.mxu0 0.0
    %1800 = vmatprep.mubr.f32.mxu0 0.0
    %1801 = vmatmul.mubr.f32.gmra.mrb[0].mxu0 %v1663
    %v1802 = vpop.f32.mrb[0].mxu0
    %v1803 = vadd.f32 %v592, %v1802
    %v1804 = vpop.f32.mrb[0].mxu0
    %v1805 = vadd.f32 %v596, %v1804
    %1806 = vdwg.mxu0
    %1807 = vmatprep.subr.mxu0 %v744
    %1808 = vmatpush1.msra.mxu0 %v743
    %1809 = vmatprep.subr.mxu0 %v748
    %1810 = vmatpush1.msra.mxu0 %v747
    %1811 = vmatprep.subr.mxu0 %v752
    %1812 = vmatpush1.msra.mxu0 %v751
    %1813 = vmatprep.subr.mxu0 %v756
    %1814 = vmatpush1.msra.mxu0 %v755
    %1815 = vmatprep.subr.mxu0 %v760
    %1816 = vmatpush1.msra.mxu0 %v759
    %1817 = vmatprep.subr.mxu0 %v764
    %1818 = vmatpush1.msra.mxu0 %v763
    %1819 = vmatprep.subr.mxu0 %v768
    %1820 = vmatpush1.msra.mxu0 %v767
    %1821 = vmatprep.subr.mxu0 %v772
    %1822 = vmatpush1.msra.mxu0 %v771
    %1823 = vmatprep.subr.mxu0 %v776
    %1824 = vmatpush1.msra.mxu0 %v775
    %1825 = vmatprep.subr.mxu0 %v780
    %1826 = vmatpush1.msra.mxu0 %v779
    %1827 = vmatprep.subr.mxu0 %v784
    %1828 = vmatpush1.msra.mxu0 %v783
    %1829 = vmatprep.subr.mxu0 %v788
    %1830 = vmatpush1.msra.mxu0 %v787
    %1831 = vmatprep.subr.mxu0 %v792
    %1832 = vmatpush1.msra.mxu0 %v791
    %1833 = vmatprep.subr.mxu0 %v796
    %1834 = vmatpush1.msra.mxu0 %v795
    %1835 = vmatprep.subr.mxu0 %v800
    %1836 = vmatpush1.msra.mxu0 %v799
    %1837 = vmatprep.subr.mxu0 %v804
    %1838 = vmatpush1.msra.mxu0 %v803
    %1839 = vmatprep.subr.mxu0 0.0
    %1840 = vmatpush1.msra.mxu0 0.0
    %1841 = vmatprep.subr.mxu0 0.0
    %1842 = vmatpush1.msra.mxu0 0.0
    %1843 = vmatprep.subr.mxu0 0.0
    %1844 = vmatpush1.msra.mxu0 0.0
    %1845 = vmatprep.subr.mxu0 0.0
    %1846 = vmatpush1.msra.mxu0 0.0
    %1847 = vmatprep.subr.mxu0 0.0
    %1848 = vmatpush1.msra.mxu0 0.0
    %1849 = vmatprep.subr.mxu0 0.0
    %1850 = vmatpush1.msra.mxu0 0.0
    %1851 = vmatprep.subr.mxu0 0.0
    %1852 = vmatpush1.msra.mxu0 0.0
    %1853 = vmatprep.subr.mxu0 0.0
    %1854 = vmatpush1.msra.mxu0 0.0
    %1855 = vmatprep.subr.mxu0 0.0
    %1856 = vmatpush1.msra.mxu0 0.0
    %1857 = vmatprep.subr.mxu0 0.0
    %1858 = vmatpush1.msra.mxu0 0.0
    %1859 = vmatprep.subr.mxu0 0.0
    %1860 = vmatpush1.msra.mxu0 0.0
    %1861 = vmatprep.subr.mxu0 0.0
    %1862 = vmatpush1.msra.mxu0 0.0
    %1863 = vmatprep.subr.mxu0 0.0
    %1864 = vmatpush1.msra.mxu0 0.0
    %1865 = vmatprep.subr.mxu0 0.0
    %1866 = vmatpush1.msra.mxu0 0.0
    %1867 = vmatprep.subr.mxu0 0.0
    %1868 = vmatpush1.msra.mxu0 0.0
    %1869 = vmatprep.subr.mxu0 0.0
    %1870 = vmatpush1.msra.mxu0 0.0
    %1871 = vmatprep.mubr.f32.mxu0 0.0
    %1872 = vmatmul.mubr.f32.gmra.mrb[0].mxu0 %v1476
    %v1873 = vpop.f32.mrb[0].mxu0
    %v1874 = vadd.f32 0.0, %v1873
    %v1875 = vpop.f32.mrb[0].mxu0
    %v1876 = vadd.f32 0.0, %v1875
    %1877 = vdwg.mxu0
    %1878 = vmatprep.subr.mxu0 %v746
    %1879 = vmatpush1.msra.mxu0 %v745
    %1880 = vmatprep.subr.mxu0 %v750
    %1881 = vmatpush1.msra.mxu0 %v749
    %1882 = vmatprep.subr.mxu0 %v754
    %1883 = vmatpush1.msra.mxu0 %v753
    %1884 = vmatprep.subr.mxu0 %v758
    %1885 = vmatpush1.msra.mxu0 %v757
    %1886 = vmatprep.subr.mxu0 %v762
    %1887 = vmatpush1.msra.mxu0 %v761
    %1888 = vmatprep.subr.mxu0 %v766
    %1889 = vmatpush1.msra.mxu0 %v765
    %1890 = vmatprep.subr.mxu0 %v770
    %1891 = vmatpush1.msra.mxu0 %v769
    %1892 = vmatprep.subr.mxu0 %v774
    %1893 = vmatpush1.msra.mxu0 %v773
    %1894 = vmatprep.subr.mxu0 %v778
    %1895 = vmatpush1.msra.mxu0 %v777
    %1896 = vmatprep.subr.mxu0 %v782
    %1897 = vmatpush1.msra.mxu0 %v781
    %1898 = vmatprep.subr.mxu0 %v786
    %1899 = vmatpush1.msra.mxu0 %v785
    %1900 = vmatprep.subr.mxu0 %v790
    %1901 = vmatpush1.msra.mxu0 %v789
    %1902 = vmatprep.subr.mxu0 %v794
    %1903 = vmatpush1.msra.mxu0 %v793
    %1904 = vmatprep.subr.mxu0 %v798
    %1905 = vmatpush1.msra.mxu0 %v797
    %1906 = vmatprep.subr.mxu0 %v802
    %1907 = vmatpush1.msra.mxu0 %v801
    %1908 = vmatprep.subr.mxu0 %v806
    %1909 = vmatpush1.msra.mxu0 %v805
    %1910 = vmatprep.subr.mxu0 0.0
    %1911 = vmatpush1.msra.mxu0 0.0
    %1912 = vmatprep.subr.mxu0 0.0
    %1913 = vmatpush1.msra.mxu0 0.0
    %1914 = vmatprep.subr.mxu0 0.0
    %1915 = vmatpush1.msra.mxu0 0.0
    %1916 = vmatprep.subr.mxu0 0.0
    %1917 = vmatpush1.msra.mxu0 0.0
    %1918 = vmatprep.subr.mxu0 0.0
    %1919 = vmatpush1.msra.mxu0 0.0
    %1920 = vmatprep.subr.mxu0 0.0
    %1921 = vmatpush1.msra.mxu0 0.0
    %1922 = vmatprep.subr.mxu0 0.0
    %1923 = vmatpush1.msra.mxu0 0.0
    %1924 = vmatprep.subr.mxu0 0.0
    %1925 = vmatpush1.msra.mxu0 0.0
    %1926 = vmatprep.subr.mxu0 0.0
    %1927 = vmatpush1.msra.mxu0 0.0
    %1928 = vmatprep.subr.mxu0 0.0
    %1929 = vmatpush1.msra.mxu0 0.0
    %1930 = vmatprep.subr.mxu0 0.0
    %1931 = vmatpush1.msra.mxu0 0.0
    %1932 = vmatprep.subr.mxu0 0.0
    %1933 = vmatpush1.msra.mxu0 0.0
    %1934 = vmatprep.subr.mxu0 0.0
    %1935 = vmatpush1.msra.mxu0 0.0
    %1936 = vmatprep.subr.mxu0 0.0
    %1937 = vmatpush1.msra.mxu0 0.0
    %1938 = vmatprep.subr.mxu0 0.0
    %1939 = vmatpush1.msra.mxu0 0.0
    %1940 = vmatprep.subr.mxu0 0.0
    %1941 = vmatpush1.msra.mxu0 0.0
    %1942 = vmatprep.mubr.f32.mxu0 0.0
    %1943 = vmatmul.mubr.f32.gmra.mrb[0].mxu0 %v1476
    %v1944 = vpop.f32.mrb[0].mxu0
    %v1945 = vadd.f32 0.0, %v1944
    %v1946 = vpop.f32.mrb[0].mxu0
    %v1947 = vadd.f32 0.0, %v1946
    %1948 = vdwg.mxu0
    %v1949 = vadd.f32 %v1732, %v1874
    %v1950 = vadd.f32 %v1734, %v1876
    %v1951 = vadd.f32 %v1803, %v1945
    %v1952 = vadd.f32 %v1805, %v1947
    %v1953 = vxor.u32 %v1949, 2147483648
    %v1954 = vmul.f32 %v1953, 1.442695
    %v1955 = vpow.pop %v1954
    %v1956 = vadd.f32 %v1955, 1.0
    %v1957 = vrcp.pop %v1956
    %v1958 = vmul.f32 1.0, %v1957
    %v1959 = vxor.u32 %v1950, 2147483648
    %v1960 = vmul.f32 %v1959, 1.442695
    %v1961 = vpow.pop %v1960
    %v1962 = vadd.f32 %v1961, 1.0
    %v1963 = vrcp.pop %v1962
    %v1964 = vmul.f32 1.0, %v1963
    %v1965 = vtanh.pop %v1951
    %v1966 = vxor.u32 %v1952, 2147483648
    %v1967 = vmul.f32 %v1966, 1.442695
    %v1968 = vpow.pop %v1967
    %v1969 = vadd.f32 %v1968, 1.0
    %v1970 = vrcp.pop %v1969
    %v1971 = vmul.f32 1.0, %v1970
    %v1972 = vmul.f32 %v1964, %v1474
    %v1973 = vmul.f32 %v1958, %v1965
    %v1974 = vadd.f32 %v1972, %v1973
    %v1975 = vtanh.pop %v1974
    %v1976 = vmul.f32 %v1971, %v1975
    %1977 = vmatprep.subr.mxu0 %v283
    %1978 = vmatpush1.msra.mxu0 %v282
    %1979 = vmatprep.subr.mxu0 %v287
    %1980 = vmatpush1.msra.mxu0 %v286
    %1981 = vmatprep.subr.mxu0 %v291
    %1982 = vmatpush1.msra.mxu0 %v290
    %1983 = vmatprep.subr.mxu0 %v295
    %1984 = vmatpush1.msra.mxu0 %v294
    %1985 = vmatprep.subr.mxu0 %v299
    %1986 = vmatpush1.msra.mxu0 %v298
    %1987 = vmatprep.subr.mxu0 %v303
    %1988 = vmatpush1.msra.mxu0 %v302
    %1989 = vmatprep.subr.mxu0 %v307
    %1990 = vmatpush1.msra.mxu0 %v306
    %1991 = vmatprep.subr.mxu0 %v311
    %1992 = vmatpush1.msra.mxu0 %v310
    %1993 = vmatprep.subr.mxu0 %v315
    %1994 = vmatpush1.msra.mxu0 %v314
    %1995 = vmatprep.subr.mxu0 %v319
    %1996 = vmatpush1.msra.mxu0 %v318
    %1997 = vmatprep.subr.mxu0 %v323
    %1998 = vmatpush1.msra.mxu0 %v322
    %1999 = vmatprep.subr.mxu0 %v327
    %2000 = vmatpush1.msra.mxu0 %v326
    %2001 = vmatprep.subr.mxu0 %v331
    %2002 = vmatpush1.msra.mxu0 %v330
    %2003 = vmatprep.subr.mxu0 %v335
    %2004 = vmatpush1.msra.mxu0 %v334
    %2005 = vmatprep.subr.mxu0 %v339
    %2006 = vmatpush1.msra.mxu0 %v338
    %2007 = vmatprep.subr.mxu0 %v343
    %2008 = vmatpush1.msra.mxu0 %v342
    %2009 = vmatprep.subr.mxu0 0.0
    %2010 = vmatpush1.msra.mxu0 0.0
    %2011 = vmatprep.subr.mxu0 0.0
    %2012 = vmatpush1.msra.mxu0 0.0
    %2013 = vmatprep.subr.mxu0 0.0
    %2014 = vmatpush1.msra.mxu0 0.0
    %2015 = vmatprep.subr.mxu0 0.0
    %2016 = vmatpush1.msra.mxu0 0.0
    %2017 = vmatprep.subr.mxu0 0.0
    %2018 = vmatpush1.msra.mxu0 0.0
    %2019 = vmatprep.subr.mxu0 0.0
    %2020 = vmatpush1.msra.mxu0 0.0
    %2021 = vmatprep.subr.mxu0 0.0
    %2022 = vmatpush1.msra.mxu0 0.0
    %2023 = vmatprep.subr.mxu0 0.0
    %2024 = vmatpush1.msra.mxu0 0.0
    %2025 = vmatprep.subr.mxu0 0.0
    %2026 = vmatpush1.msra.mxu0 0.0
    %2027 = vmatprep.subr.mxu0 0.0
    %2028 = vmatpush1.msra.mxu0 0.0
    %2029 = vmatprep.subr.mxu0 0.0
    %2030 = vmatpush1.msra.mxu0 0.0
    %2031 = vmatprep.subr.mxu0 0.0
    %2032 = vmatpush1.msra.mxu0 0.0
    %2033 = vmatprep.subr.mxu0 0.0
    %2034 = vmatpush1.msra.mxu0 0.0
    %2035 = vmatprep.subr.mxu0 0.0
    %2036 = vmatpush1.msra.mxu0 0.0
    %2037 = vmatprep.subr.mxu0 0.0
    %2038 = vmatpush1.msra.mxu0 0.0
    %2039 = vmatprep.subr.mxu0 0.0
    %2040 = vmatpush1.msra.mxu0 0.0
    %2041 = vmatprep.mubr.f32.mxu0 0.0
    %2042 = vmatmul.mubr.f32.gmra.mrb[0].mxu0 %v1663
    %v2043 = vpop.f32.mrb[0].mxu0
    %v2044 = vadd.f32 0.0, %v2043
    %v2045 = vpop.f32.mrb[0].mxu0
    %v2046 = vadd.f32 0.0, %v2045
    %2047 = vdwg.mxu0
    %2048 = vmatprep.subr.mxu0 %v285
    %2049 = vmatpush1.msra.mxu0 %v284
    %2050 = vmatprep.subr.mxu0 %v289
    %2051 = vmatpush1.msra.mxu0 %v288
    %2052 = vmatprep.subr.mxu0 %v293
    %2053 = vmatpush1.msra.mxu0 %v292
    %2054 = vmatprep.subr.mxu0 %v297
    %2055 = vmatpush1.msra.mxu0 %v296
    %2056 = vmatprep.subr.mxu0 %v301
    %2057 = vmatpush1.msra.mxu0 %v300
    %2058 = vmatprep.subr.mxu0 %v305
    %2059 = vmatpush1.msra.mxu0 %v304
    %2060 = vmatprep.subr.mxu0 %v309
    %2061 = vmatpush1.msra.mxu0 %v308
    %2062 = vmatprep.subr.mxu0 %v313
    %2063 = vmatpush1.msra.mxu0 %v312
    %2064 = vmatprep.subr.mxu0 %v317
    %2065 = vmatpush1.msra.mxu0 %v316
    %2066 = vmatprep.subr.mxu0 %v321
    %2067 = vmatpush1.msra.mxu0 %v320
    %2068 = vmatprep.subr.mxu0 %v325
    %2069 = vmatpush1.msra.mxu0 %v324
    %2070 = vmatprep.subr.mxu0 %v329
    %2071 = vmatpush1.msra.mxu0 %v328
    %2072 = vmatprep.subr.mxu0 %v333
    %2073 = vmatpush1.msra.mxu0 %v332
    %2074 = vmatprep.subr.mxu0 %v337
    %2075 = vmatpush1.msra.mxu0 %v336
    %2076 = vmatprep.subr.mxu0 %v341
    %2077 = vmatpush1.msra.mxu0 %v340
    %2078 = vmatprep.subr.mxu0 %v345
    %2079 = vmatpush1.msra.mxu0 %v344
    %2080 = vmatprep.subr.mxu0 0.0
    %2081 = vmatpush1.msra.mxu0 0.0
    %2082 = vmatprep.subr.mxu0 0.0
    %2083 = vmatpush1.msra.mxu0 0.0
    %2084 = vmatprep.subr.mxu0 0.0
    %2085 = vmatpush1.msra.mxu0 0.0
    %2086 = vmatprep.subr.mxu0 0.0
    %2087 = vmatpush1.msra.mxu0 0.0
    %2088 = vmatprep.subr.mxu0 0.0
    %2089 = vmatpush1.msra.mxu0 0.0
    %2090 = vmatprep.subr.mxu0 0.0
    %2091 = vmatpush1.msra.mxu0 0.0
    %2092 = vmatprep.subr.mxu0 0.0
    %2093 = vmatpush1.msra.mxu0 0.0
    %2094 = vmatprep.subr.mxu0 0.0
    %2095 = vmatpush1.msra.mxu0 0.0
    %2096 = vmatprep.subr.mxu0 0.0
    %2097 = vmatpush1.msra.mxu0 0.0
    %2098 = vmatprep.subr.mxu0 0.0
    %2099 = vmatpush1.msra.mxu0 0.0
    %2100 = vmatprep.subr.mxu0 0.0
    %2101 = vmatpush1.msra.mxu0 0.0
    %2102 = vmatprep.subr.mxu0 0.0
    %2103 = vmatpush1.msra.mxu0 0.0
    %2104 = vmatprep.subr.mxu0 0.0
    %2105 = vmatpush1.msra.mxu0 0.0
    %2106 = vmatprep.subr.mxu0 0.0
    %2107 = vmatpush1.msra.mxu0 0.0
    %2108 = vmatprep.subr.mxu0 0.0
    %2109 = vmatpush1.msra.mxu0 0.0
    %2110 = vmatprep.subr.mxu0 0.0
    %2111 = vmatpush1.msra.mxu0 0.0
    %2112 = vmatprep.mubr.f32.mxu0 0.0
    %2113 = vmatmul.mubr.f32.gmra.mrb[0].mxu0 %v1663
    %v2114 = vpop.f32.mrb[0].mxu0
    %v2115 = vadd.f32 0.0, %v2114
    %v2116 = vpop.f32.mrb[0].mxu0
    %v2117 = vadd.f32 0.0, %v2116
    %2118 = vdwg.mxu0
    %v2123 = vrot.slane %v2044, 5
    %v2124 = vrot.slane %v2046, 5
    %v2125 = vrot.slane %v2115, 5
    %v2126 = vrot.slane %v2117, 5
    %v2131 = vadd.f32 %v206, %v2123
    %v2132 = vadd.f32 %v208, %v2124
    %v2133 = vadd.f32 %v277, %v2125
    %v2134 = vadd.f32 %v279, %v2126
    %v2135 = vxor.u32 %v2131, 2147483648
    %v2136 = vmul.f32 %v2135, 1.442695
    %v2137 = vpow.pop %v2136
    %v2138 = vadd.f32 %v2137, 1.0
    %v2139 = vrcp.pop %v2138
    %v2140 = vmul.f32 1.0, %v2139
    %v2141 = vxor.u32 %v2132, 2147483648
    %v2142 = vmul.f32 %v2141, 1.442695
    %v2143 = vpow.pop %v2142
    %v2144 = vadd.f32 %v2143, 1.0
    %v2145 = vrcp.pop %v2144
    %v2146 = vmul.f32 1.0, %v2145
    %v2147 = vtanh.pop %v2133
    %v2148 = vxor.u32 %v2134, 2147483648
    %v2149 = vmul.f32 %v2148, 1.442695
    %v2150 = vpow.pop %v2149
    %v2151 = vadd.f32 %v2150, 1.0
    %v2152 = vrcp.pop %v2151
    %v2153 = vmul.f32 1.0, %v2152
    %v2155 = vrot.slane %v1659, 7
    %v2157 = vmul.f32 %v2146, %v2155
    %v2158 = vmul.f32 %v2140, %v2147
    %v2159 = vadd.f32 %v2157, %v2158
    %v2160 = vtanh.pop %v2159
    %v2161 = vmul.f32 %v2153, %v2160
    %v2163 = vrot.slane %v2161, 3
    %2165 = vmatprep.subr.mxu0 %v517
    %2166 = vmatpush1.msra.mxu0 %v516
    %2167 = vmatprep.subr.mxu0 %v521
    %2168 = vmatpush1.msra.mxu0 %v520
    %2169 = vmatprep.subr.mxu0 %v525
    %2170 = vmatpush1.msra.mxu0 %v524
    %2171 = vmatprep.subr.mxu0 %v529
    %2172 = vmatpush1.msra.mxu0 %v528
    %2173 = vmatprep.subr.mxu0 %v533
    %2174 = vmatpush1.msra.mxu0 %v532
    %2175 = vmatprep.subr.mxu0 %v537
    %2176 = vmatpush1.msra.mxu0 %v536
    %2177 = vmatprep.subr.mxu0 %v541
    %2178 = vmatpush1.msra.mxu0 %v540
    %2179 = vmatprep.subr.mxu0 %v545
    %2180 = vmatpush1.msra.mxu0 %v544
    %2181 = vmatprep.subr.mxu0 %v549
    %2182 = vmatpush1.msra.mxu0 %v548
    %2183 = vmatprep.subr.mxu0 %v553
    %2184 = vmatpush1.msra.mxu0 %v552
    %2185 = vmatprep.subr.mxu0 %v557
    %2186 = vmatpush1.msra.mxu0 %v556
    %2187 = vmatprep.subr.mxu0 %v561
    %2188 = vmatpush1.msra.mxu0 %v560
    %2189 = vmatprep.subr.mxu0 %v565
    %2190 = vmatpush1.msra.mxu0 %v564
    %2191 = vmatprep.subr.mxu0 %v569
    %2192 = vmatpush1.msra.mxu0 %v568
    %2193 = vmatprep.subr.mxu0 %v573
    %2194 = vmatpush1.msra.mxu0 %v572
    %2195 = vmatprep.subr.mxu0 %v577
    %2196 = vmatpush1.msra.mxu0 %v576
    %2197 = vmatprep.subr.mxu0 0.0
    %2198 = vmatpush1.msra.mxu0 0.0
    %2199 = vmatprep.subr.mxu0 0.0
    %2200 = vmatpush1.msra.mxu0 0.0
    %2201 = vmatprep.subr.mxu0 0.0
    %2202 = vmatpush1.msra.mxu0 0.0
    %2203 = vmatprep.subr.mxu0 0.0
    %2204 = vmatpush1.msra.mxu0 0.0
    %2205 = vmatprep.subr.mxu0 0.0
    %2206 = vmatpush1.msra.mxu0 0.0
    %2207 = vmatprep.subr.mxu0 0.0
    %2208 = vmatpush1.msra.mxu0 0.0
    %2209 = vmatprep.subr.mxu0 0.0
    %2210 = vmatpush1.msra.mxu0 0.0
    %2211 = vmatprep.subr.mxu0 0.0
    %2212 = vmatpush1.msra.mxu0 0.0
    %2213 = vmatprep.subr.mxu0 0.0
    %2214 = vmatpush1.msra.mxu0 0.0
    %2215 = vmatprep.subr.mxu0 0.0
    %2216 = vmatpush1.msra.mxu0 0.0
    %2217 = vmatprep.subr.mxu0 0.0
    %2218 = vmatpush1.msra.mxu0 0.0
    %2219 = vmatprep.subr.mxu0 0.0
    %2220 = vmatpush1.msra.mxu0 0.0
    %2221 = vmatprep.subr.mxu0 0.0
    %2222 = vmatpush1.msra.mxu0 0.0
    %2223 = vmatprep.subr.mxu0 0.0
    %2224 = vmatpush1.msra.mxu0 0.0
    %2225 = vmatprep.subr.mxu0 0.0
    %2226 = vmatpush1.msra.mxu0 0.0
    %2227 = vmatprep.subr.mxu0 0.0
    %2228 = vmatpush1.msra.mxu0 0.0
    %2229 = vmatprep.mubr.f32.mxu0 0.0
    %2230 = vmatmul.mubr.f32.gmra.mrb[0].mxu0 %v2163
    %v2231 = vpop.f32.mrb[0].mxu0
    %v2232 = vadd.f32 %v584, %v2231
    %v2233 = vpop.f32.mrb[0].mxu0
    %v2234 = vadd.f32 %v588, %v2233
    %2235 = vdwg.mxu0
    %2236 = vmatprep.subr.mxu0 %v519
    %2237 = vmatpush1.msra.mxu0 %v518
    %2238 = vmatprep.subr.mxu0 %v523
    %2239 = vmatpush1.msra.mxu0 %v522
    %2240 = vmatprep.subr.mxu0 %v527
    %2241 = vmatpush1.msra.mxu0 %v526
    %2242 = vmatprep.subr.mxu0 %v531
    %2243 = vmatpush1.msra.mxu0 %v530
    %2244 = vmatprep.subr.mxu0 %v535
    %2245 = vmatpush1.msra.mxu0 %v534
    %2246 = vmatprep.subr.mxu0 %v539
    %2247 = vmatpush1.msra.mxu0 %v538
    %2248 = vmatprep.subr.mxu0 %v543
    %2249 = vmatpush1.msra.mxu0 %v542
    %2250 = vmatprep.subr.mxu0 %v547
    %2251 = vmatpush1.msra.mxu0 %v546
    %2252 = vmatprep.subr.mxu0 %v551
    %2253 = vmatpush1.msra.mxu0 %v550
    %2254 = vmatprep.subr.mxu0 %v555
    %2255 = vmatpush1.msra.mxu0 %v554
    %2256 = vmatprep.subr.mxu0 %v559
    %2257 = vmatpush1.msra.mxu0 %v558
    %2258 = vmatprep.subr.mxu0 %v563
    %2259 = vmatpush1.msra.mxu0 %v562
    %2260 = vmatprep.subr.mxu0 %v567
    %2261 = vmatpush1.msra.mxu0 %v566
    %2262 = vmatprep.subr.mxu0 %v571
    %2263 = vmatpush1.msra.mxu0 %v570
    %2264 = vmatprep.subr.mxu0 %v575
    %2265 = vmatpush1.msra.mxu0 %v574
    %2266 = vmatprep.subr.mxu0 %v579
    %2267 = vmatpush1.msra.mxu0 %v578
    %2268 = vmatprep.subr.mxu0 0.0
    %2269 = vmatpush1.msra.mxu0 0.0
    %2270 = vmatprep.subr.mxu0 0.0
    %2271 = vmatpush1.msra.mxu0 0.0
    %2272 = vmatprep.subr.mxu0 0.0
    %2273 = vmatpush1.msra.mxu0 0.0
    %2274 = vmatprep.subr.mxu0 0.0
    %2275 = vmatpush1.msra.mxu0 0.0
    %2276 = vmatprep.subr.mxu0 0.0
    %2277 = vmatpush1.msra.mxu0 0.0
    %2278 = vmatprep.subr.mxu0 0.0
    %2279 = vmatpush1.msra.mxu0 0.0
    %2280 = vmatprep.subr.mxu0 0.0
    %2281 = vmatpush1.msra.mxu0 0.0
    %2282 = vmatprep.subr.mxu0 0.0
    %2283 = vmatpush1.msra.mxu0 0.0
    %2284 = vmatprep.subr.mxu0 0.0
    %2285 = vmatpush1.msra.mxu0 0.0
    %2286 = vmatprep.subr.mxu0 0.0
    %2287 = vmatpush1.msra.mxu0 0.0
    %2288 = vmatprep.subr.mxu0 0.0
    %2289 = vmatpush1.msra.mxu0 0.0
    %2290 = vmatprep.subr.mxu0 0.0
    %2291 = vmatpush1.msra.mxu0 0.0
    %2292 = vmatprep.subr.mxu0 0.0
    %2293 = vmatpush1.msra.mxu0 0.0
    %2294 = vmatprep.subr.mxu0 0.0
    %2295 = vmatpush1.msra.mxu0 0.0
    %2296 = vmatprep.subr.mxu0 0.0
    %2297 = vmatpush1.msra.mxu0 0.0
    %2298 = vmatprep.subr.mxu0 0.0
    %2299 = vmatpush1.msra.mxu0 0.0
    %2300 = vmatprep.mubr.f32.mxu0 0.0
    %2301 = vmatmul.mubr.f32.gmra.mrb[0].mxu0 %v2163
    %v2302 = vpop.f32.mrb[0].mxu0
    %v2303 = vadd.f32 %v592, %v2302
    %v2304 = vpop.f32.mrb[0].mxu0
    %v2305 = vadd.f32 %v596, %v2304
    %2306 = vdwg.mxu0
    %2307 = vmatprep.subr.mxu0 %v744
    %2308 = vmatpush1.msra.mxu0 %v743
    %2309 = vmatprep.subr.mxu0 %v748
    %2310 = vmatpush1.msra.mxu0 %v747
    %2311 = vmatprep.subr.mxu0 %v752
    %2312 = vmatpush1.msra.mxu0 %v751
    %2313 = vmatprep.subr.mxu0 %v756
    %2314 = vmatpush1.msra.mxu0 %v755
    %2315 = vmatprep.subr.mxu0 %v760
    %2316 = vmatpush1.msra.mxu0 %v759
    %2317 = vmatprep.subr.mxu0 %v764
    %2318 = vmatpush1.msra.mxu0 %v763
    %2319 = vmatprep.subr.mxu0 %v768
    %2320 = vmatpush1.msra.mxu0 %v767
    %2321 = vmatprep.subr.mxu0 %v772
    %2322 = vmatpush1.msra.mxu0 %v771
    %2323 = vmatprep.subr.mxu0 %v776
    %2324 = vmatpush1.msra.mxu0 %v775
    %2325 = vmatprep.subr.mxu0 %v780
    %2326 = vmatpush1.msra.mxu0 %v779
    %2327 = vmatprep.subr.mxu0 %v784
    %2328 = vmatpush1.msra.mxu0 %v783
    %2329 = vmatprep.subr.mxu0 %v788
    %2330 = vmatpush1.msra.mxu0 %v787
    %2331 = vmatprep.subr.mxu0 %v792
    %2332 = vmatpush1.msra.mxu0 %v791
    %2333 = vmatprep.subr.mxu0 %v796
    %2334 = vmatpush1.msra.mxu0 %v795
    %2335 = vmatprep.subr.mxu0 %v800
    %2336 = vmatpush1.msra.mxu0 %v799
    %2337 = vmatprep.subr.mxu0 %v804
    %2338 = vmatpush1.msra.mxu0 %v803
    %2339 = vmatprep.subr.mxu0 0.0
    %2340 = vmatpush1.msra.mxu0 0.0
    %2341 = vmatprep.subr.mxu0 0.0
    %2342 = vmatpush1.msra.mxu0 0.0
    %2343 = vmatprep.subr.mxu0 0.0
    %2344 = vmatpush1.msra.mxu0 0.0
    %2345 = vmatprep.subr.mxu0 0.0
    %2346 = vmatpush1.msra.mxu0 0.0
    %2347 = vmatprep.subr.mxu0 0.0
    %2348 = vmatpush1.msra.mxu0 0.0
    %2349 = vmatprep.subr.mxu0 0.0
    %2350 = vmatpush1.msra.mxu0 0.0
    %2351 = vmatprep.subr.mxu0 0.0
    %2352 = vmatpush1.msra.mxu0 0.0
    %2353 = vmatprep.subr.mxu0 0.0
    %2354 = vmatpush1.msra.mxu0 0.0
    %2355 = vmatprep.subr.mxu0 0.0
    %2356 = vmatpush1.msra.mxu0 0.0
    %2357 = vmatprep.subr.mxu0 0.0
    %2358 = vmatpush1.msra.mxu0 0.0
    %2359 = vmatprep.subr.mxu0 0.0
    %2360 = vmatpush1.msra.mxu0 0.0
    %2361 = vmatprep.subr.mxu0 0.0
    %2362 = vmatpush1.msra.mxu0 0.0
    %2363 = vmatprep.subr.mxu0 0.0
    %2364 = vmatpush1.msra.mxu0 0.0
    %2365 = vmatprep.subr.mxu0 0.0
    %2366 = vmatpush1.msra.mxu0 0.0
    %2367 = vmatprep.subr.mxu0 0.0
    %2368 = vmatpush1.msra.mxu0 0.0
    %2369 = vmatprep.subr.mxu0 0.0
    %2370 = vmatpush1.msra.mxu0 0.0
    %2371 = vmatprep.mubr.f32.mxu0 0.0
    %2372 = vmatmul.mubr.f32.gmra.mrb[0].mxu0 %v1976
    %v2373 = vpop.f32.mrb[0].mxu0
    %v2374 = vadd.f32 0.0, %v2373
    %v2375 = vpop.f32.mrb[0].mxu0
    %v2376 = vadd.f32 0.0, %v2375
    %2377 = vdwg.mxu0
    %2378 = vmatprep.subr.mxu0 %v746
    %2379 = vmatpush1.msra.mxu0 %v745
    %2380 = vmatprep.subr.mxu0 %v750
    %2381 = vmatpush1.msra.mxu0 %v749
    %2382 = vmatprep.subr.mxu0 %v754
    %2383 = vmatpush1.msra.mxu0 %v753
    %2384 = vmatprep.subr.mxu0 %v758
    %2385 = vmatpush1.msra.mxu0 %v757
    %2386 = vmatprep.subr.mxu0 %v762
    %2387 = vmatpush1.msra.mxu0 %v761
    %2388 = vmatprep.subr.mxu0 %v766
    %2389 = vmatpush1.msra.mxu0 %v765
    %2390 = vmatprep.subr.mxu0 %v770
    %2391 = vmatpush1.msra.mxu0 %v769
    %2392 = vmatprep.subr.mxu0 %v774
    %2393 = vmatpush1.msra.mxu0 %v773
    %2394 = vmatprep.subr.mxu0 %v778
    %2395 = vmatpush1.msra.mxu0 %v777
    %2396 = vmatprep.subr.mxu0 %v782
    %2397 = vmatpush1.msra.mxu0 %v781
    %2398 = vmatprep.subr.mxu0 %v786
    %2399 = vmatpush1.msra.mxu0 %v785
    %2400 = vmatprep.subr.mxu0 %v790
    %2401 = vmatpush1.msra.mxu0 %v789
    %2402 = vmatprep.subr.mxu0 %v794
    %2403 = vmatpush1.msra.mxu0 %v793
    %2404 = vmatprep.subr.mxu0 %v798
    %2405 = vmatpush1.msra.mxu0 %v797
    %2406 = vmatprep.subr.mxu0 %v802
    %2407 = vmatpush1.msra.mxu0 %v801
    %2408 = vmatprep.subr.mxu0 %v806
    %2409 = vmatpush1.msra.mxu0 %v805
    %2410 = vmatprep.subr.mxu0 0.0
    %2411 = vmatpush1.msra.mxu0 0.0
    %2412 = vmatprep.subr.mxu0 0.0
    %2413 = vmatpush1.msra.mxu0 0.0
    %2414 = vmatprep.subr.mxu0 0.0
    %2415 = vmatpush1.msra.mxu0 0.0
    %2416 = vmatprep.subr.mxu0 0.0
    %2417 = vmatpush1.msra.mxu0 0.0
    %2418 = vmatprep.subr.mxu0 0.0
    %2419 = vmatpush1.msra.mxu0 0.0
    %2420 = vmatprep.subr.mxu0 0.0
    %2421 = vmatpush1.msra.mxu0 0.0
    %2422 = vmatprep.subr.mxu0 0.0
    %2423 = vmatpush1.msra.mxu0 0.0
    %2424 = vmatprep.subr.mxu0 0.0
    %2425 = vmatpush1.msra.mxu0 0.0
    %2426 = vmatprep.subr.mxu0 0.0
    %2427 = vmatpush1.msra.mxu0 0.0
    %2428 = vmatprep.subr.mxu0 0.0
    %2429 = vmatpush1.msra.mxu0 0.0
    %2430 = vmatprep.subr.mxu0 0.0
    %2431 = vmatpush1.msra.mxu0 0.0
    %2432 = vmatprep.subr.mxu0 0.0
    %2433 = vmatpush1.msra.mxu0 0.0
    %2434 = vmatprep.subr.mxu0 0.0
    %2435 = vmatpush1.msra.mxu0 0.0
    %2436 = vmatprep.subr.mxu0 0.0
    %2437 = vmatpush1.msra.mxu0 0.0
    %2438 = vmatprep.subr.mxu0 0.0
    %2439 = vmatpush1.msra.mxu0 0.0
    %2440 = vmatprep.subr.mxu0 0.0
    %2441 = vmatpush1.msra.mxu0 0.0
    %2442 = vmatprep.mubr.f32.mxu0 0.0
    %2443 = vmatmul.mubr.f32.gmra.mrb[0].mxu0 %v1976
    %v2444 = vpop.f32.mrb[0].mxu0
    %v2445 = vadd.f32 0.0, %v2444
    %v2446 = vpop.f32.mrb[0].mxu0
    %v2447 = vadd.f32 0.0, %v2446
    %2448 = vdwg.mxu0
    %v2449 = vadd.f32 %v2232, %v2374
    %v2450 = vadd.f32 %v2234, %v2376
    %v2451 = vadd.f32 %v2303, %v2445
    %v2452 = vadd.f32 %v2305, %v2447
    %v2453 = vxor.u32 %v2449, 2147483648
    %v2454 = vmul.f32 %v2453, 1.442695
    %v2455 = vpow.pop %v2454
    %v2456 = vadd.f32 %v2455, 1.0
    %v2457 = vrcp.pop %v2456
    %v2458 = vmul.f32 1.0, %v2457
    %v2459 = vxor.u32 %v2450, 2147483648
    %v2460 = vmul.f32 %v2459, 1.442695
    %v2461 = vpow.pop %v2460
    %v2462 = vadd.f32 %v2461, 1.0
    %v2463 = vrcp.pop %v2462
    %v2464 = vmul.f32 1.0, %v2463
    %v2465 = vtanh.pop %v2451
    %v2466 = vxor.u32 %v2452, 2147483648
    %v2467 = vmul.f32 %v2466, 1.442695
    %v2468 = vpow.pop %v2467
    %v2469 = vadd.f32 %v2468, 1.0
    %v2470 = vrcp.pop %v2469
    %v2471 = vmul.f32 1.0, %v2470
    %v2472 = vmul.f32 %v2464, %v1974
    %v2473 = vmul.f32 %v2458, %v2465
    %v2474 = vadd.f32 %v2472, %v2473
    %v2475 = vtanh.pop %v2474
    %v2476 = vmul.f32 %v2471, %v2475
    %2477 = vmatprep.subr.mxu0 %v283
    %2478 = vmatpush1.msra.mxu0 %v282
    %2479 = vmatprep.subr.mxu0 %v287
    %2480 = vmatpush1.msra.mxu0 %v286
    %2481 = vmatprep.subr.mxu0 %v291
    %2482 = vmatpush1.msra.mxu0 %v290
    %2483 = vmatprep.subr.mxu0 %v295
    %2484 = vmatpush1.msra.mxu0 %v294
    %2485 = vmatprep.subr.mxu0 %v299
    %2486 = vmatpush1.msra.mxu0 %v298
    %2487 = vmatprep.subr.mxu0 %v303
    %2488 = vmatpush1.msra.mxu0 %v302
    %2489 = vmatprep.subr.mxu0 %v307
    %2490 = vmatpush1.msra.mxu0 %v306
    %2491 = vmatprep.subr.mxu0 %v311
    %2492 = vmatpush1.msra.mxu0 %v310
    %2493 = vmatprep.subr.mxu0 %v315
    %2494 = vmatpush1.msra.mxu0 %v314
    %2495 = vmatprep.subr.mxu0 %v319
    %2496 = vmatpush1.msra.mxu0 %v318
    %2497 = vmatprep.subr.mxu0 %v323
    %2498 = vmatpush1.msra.mxu0 %v322
    %2499 = vmatprep.subr.mxu0 %v327
    %2500 = vmatpush1.msra.mxu0 %v326
    %2501 = vmatprep.subr.mxu0 %v331
    %2502 = vmatpush1.msra.mxu0 %v330
    %2503 = vmatprep.subr.mxu0 %v335
    %2504 = vmatpush1.msra.mxu0 %v334
    %2505 = vmatprep.subr.mxu0 %v339
    %2506 = vmatpush1.msra.mxu0 %v338
    %2507 = vmatprep.subr.mxu0 %v343
    %2508 = vmatpush1.msra.mxu0 %v342
    %2509 = vmatprep.subr.mxu0 0.0
    %2510 = vmatpush1.msra.mxu0 0.0
    %2511 = vmatprep.subr.mxu0 0.0
    %2512 = vmatpush1.msra.mxu0 0.0
    %2513 = vmatprep.subr.mxu0 0.0
    %2514 = vmatpush1.msra.mxu0 0.0
    %2515 = vmatprep.subr.mxu0 0.0
    %2516 = vmatpush1.msra.mxu0 0.0
    %2517 = vmatprep.subr.mxu0 0.0
    %2518 = vmatpush1.msra.mxu0 0.0
    %2519 = vmatprep.subr.mxu0 0.0
    %2520 = vmatpush1.msra.mxu0 0.0
    %2521 = vmatprep.subr.mxu0 0.0
    %2522 = vmatpush1.msra.mxu0 0.0
    %2523 = vmatprep.subr.mxu0 0.0
    %2524 = vmatpush1.msra.mxu0 0.0
    %2525 = vmatprep.subr.mxu0 0.0
    %2526 = vmatpush1.msra.mxu0 0.0
    %2527 = vmatprep.subr.mxu0 0.0
    %2528 = vmatpush1.msra.mxu0 0.0
    %2529 = vmatprep.subr.mxu0 0.0
    %2530 = vmatpush1.msra.mxu0 0.0
    %2531 = vmatprep.subr.mxu0 0.0
    %2532 = vmatpush1.msra.mxu0 0.0
    %2533 = vmatprep.subr.mxu0 0.0
    %2534 = vmatpush1.msra.mxu0 0.0
    %2535 = vmatprep.subr.mxu0 0.0
    %2536 = vmatpush1.msra.mxu0 0.0
    %2537 = vmatprep.subr.mxu0 0.0
    %2538 = vmatpush1.msra.mxu0 0.0
    %2539 = vmatprep.subr.mxu0 0.0
    %2540 = vmatpush1.msra.mxu0 0.0
    %2541 = vmatprep.mubr.f32.mxu0 0.0
    %2542 = vmatmul.mubr.f32.gmra.mrb[0].mxu0 %v2163
    %v2543 = vpop.f32.mrb[0].mxu0
    %v2544 = vadd.f32 0.0, %v2543
    %v2545 = vpop.f32.mrb[0].mxu0
    %v2546 = vadd.f32 0.0, %v2545
    %2547 = vdwg.mxu0
    %2548 = vmatprep.subr.mxu0 %v285
    %2549 = vmatpush1.msra.mxu0 %v284
    %2550 = vmatprep.subr.mxu0 %v289
    %2551 = vmatpush1.msra.mxu0 %v288
    %2552 = vmatprep.subr.mxu0 %v293
    %2553 = vmatpush1.msra.mxu0 %v292
    %2554 = vmatprep.subr.mxu0 %v297
    %2555 = vmatpush1.msra.mxu0 %v296
    %2556 = vmatprep.subr.mxu0 %v301
    %2557 = vmatpush1.msra.mxu0 %v300
    %2558 = vmatprep.subr.mxu0 %v305
    %2559 = vmatpush1.msra.mxu0 %v304
    %2560 = vmatprep.subr.mxu0 %v309
    %2561 = vmatpush1.msra.mxu0 %v308
    %2562 = vmatprep.subr.mxu0 %v313
    %2563 = vmatpush1.msra.mxu0 %v312
    %2564 = vmatprep.subr.mxu0 %v317
    %2565 = vmatpush1.msra.mxu0 %v316
    %2566 = vmatprep.subr.mxu0 %v321
    %2567 = vmatpush1.msra.mxu0 %v320
    %2568 = vmatprep.subr.mxu0 %v325
    %2569 = vmatpush1.msra.mxu0 %v324
    %2570 = vmatprep.subr.mxu0 %v329
    %2571 = vmatpush1.msra.mxu0 %v328
    %2572 = vmatprep.subr.mxu0 %v333
    %2573 = vmatpush1.msra.mxu0 %v332
    %2574 = vmatprep.subr.mxu0 %v337
    %2575 = vmatpush1.msra.mxu0 %v336
    %2576 = vmatprep.subr.mxu0 %v341
    %2577 = vmatpush1.msra.mxu0 %v340
    %2578 = vmatprep.subr.mxu0 %v345
    %2579 = vmatpush1.msra.mxu0 %v344
    %2580 = vmatprep.subr.mxu0 0.0
    %2581 = vmatpush1.msra.mxu0 0.0
    %2582 = vmatprep.subr.mxu0 0.0
    %2583 = vmatpush1.msra.mxu0 0.0
    %2584 = vmatprep.subr.mxu0 0.0
    %2585 = vmatpush1.msra.mxu0 0.0
    %2586 = vmatprep.subr.mxu0 0.0
    %2587 = vmatpush1.msra.mxu0 0.0
    %2588 = vmatprep.subr.mxu0 0.0
    %2589 = vmatpush1.msra.mxu0 0.0
    %2590 = vmatprep.subr.mxu0 0.0
    %2591 = vmatpush1.msra.mxu0 0.0
    %2592 = vmatprep.subr.mxu0 0.0
    %2593 = vmatpush1.msra.mxu0 0.0
    %2594 = vmatprep.subr.mxu0 0.0
    %2595 = vmatpush1.msra.mxu0 0.0
    %2596 = vmatprep.subr.mxu0 0.0
    %2597 = vmatpush1.msra.mxu0 0.0
    %2598 = vmatprep.subr.mxu0 0.0
    %2599 = vmatpush1.msra.mxu0 0.0
    %2600 = vmatprep.subr.mxu0 0.0
    %2601 = vmatpush1.msra.mxu0 0.0
    %2602 = vmatprep.subr.mxu0 0.0
    %2603 = vmatpush1.msra.mxu0 0.0
    %2604 = vmatprep.subr.mxu0 0.0
    %2605 = vmatpush1.msra.mxu0 0.0
    %2606 = vmatprep.subr.mxu0 0.0
    %2607 = vmatpush1.msra.mxu0 0.0
    %2608 = vmatprep.subr.mxu0 0.0
    %2609 = vmatpush1.msra.mxu0 0.0
    %2610 = vmatprep.subr.mxu0 0.0
    %2611 = vmatpush1.msra.mxu0 0.0
    %2612 = vmatprep.mubr.f32.mxu0 0.0
    %2613 = vmatmul.mubr.f32.gmra.mrb[0].mxu0 %v2163
    %v2614 = vpop.f32.mrb[0].mxu0
    %v2615 = vadd.f32 0.0, %v2614
    %v2616 = vpop.f32.mrb[0].mxu0
    %v2617 = vadd.f32 0.0, %v2616
    %2618 = vdwg.mxu0
    %v2623 = vrot.slane %v2544, 4
    %v2624 = vrot.slane %v2546, 4
    %v2625 = vrot.slane %v2615, 4
    %v2626 = vrot.slane %v2617, 4
    %v2631 = vadd.f32 %v206, %v2623
    %v2632 = vadd.f32 %v208, %v2624
    %v2633 = vadd.f32 %v277, %v2625
    %v2634 = vadd.f32 %v279, %v2626
    %v2635 = vxor.u32 %v2631, 2147483648
    %v2636 = vmul.f32 %v2635, 1.442695
    %v2637 = vpow.pop %v2636
    %v2638 = vadd.f32 %v2637, 1.0
    %v2639 = vrcp.pop %v2638
    %v2640 = vmul.f32 1.0, %v2639
    %v2641 = vxor.u32 %v2632, 2147483648
    %v2642 = vmul.f32 %v2641, 1.442695
    %v2643 = vpow.pop %v2642
    %v2644 = vadd.f32 %v2643, 1.0
    %v2645 = vrcp.pop %v2644
    %v2646 = vmul.f32 1.0, %v2645
    %v2647 = vtanh.pop %v2633
    %v2648 = vxor.u32 %v2634, 2147483648
    %v2649 = vmul.f32 %v2648, 1.442695
    %v2650 = vpow.pop %v2649
    %v2651 = vadd.f32 %v2650, 1.0
    %v2652 = vrcp.pop %v2651
    %v2653 = vmul.f32 1.0, %v2652
    %v2655 = vrot.slane %v2159, 7
    %v2657 = vmul.f32 %v2646, %v2655
    %v2658 = vmul.f32 %v2640, %v2647
    %v2659 = vadd.f32 %v2657, %v2658
    %v2660 = vtanh.pop %v2659
    %v2661 = vmul.f32 %v2653, %v2660
    %v2663 = vrot.slane %v2661, 4
    %2665 = vmatprep.subr.mxu0 %v517
    %2666 = vmatpush1.msra.mxu0 %v516
    %2667 = vmatprep.subr.mxu0 %v521
    %2668 = vmatpush1.msra.mxu0 %v520
    %2669 = vmatprep.subr.mxu0 %v525
    %2670 = vmatpush1.msra.mxu0 %v524
    %2671 = vmatprep.subr.mxu0 %v529
    %2672 = vmatpush1.msra.mxu0 %v528
    %2673 = vmatprep.subr.mxu0 %v533
    %2674 = vmatpush1.msra.mxu0 %v532
    %2675 = vmatprep.subr.mxu0 %v537
    %2676 = vmatpush1.msra.mxu0 %v536
    %2677 = vmatprep.subr.mxu0 %v541
    %2678 = vmatpush1.msra.mxu0 %v540
    %2679 = vmatprep.subr.mxu0 %v545
    %2680 = vmatpush1.msra.mxu0 %v544
    %2681 = vmatprep.subr.mxu0 %v549
    %2682 = vmatpush1.msra.mxu0 %v548
    %2683 = vmatprep.subr.mxu0 %v553
    %2684 = vmatpush1.msra.mxu0 %v552
    %2685 = vmatprep.subr.mxu0 %v557
    %2686 = vmatpush1.msra.mxu0 %v556
    %2687 = vmatprep.subr.mxu0 %v561
    %2688 = vmatpush1.msra.mxu0 %v560
    %2689 = vmatprep.subr.mxu0 %v565
    %2690 = vmatpush1.msra.mxu0 %v564
    %2691 = vmatprep.subr.mxu0 %v569
    %2692 = vmatpush1.msra.mxu0 %v568
    %2693 = vmatprep.subr.mxu0 %v573
    %2694 = vmatpush1.msra.mxu0 %v572
    %2695 = vmatprep.subr.mxu0 %v577
    %2696 = vmatpush1.msra.mxu0 %v576
    %2697 = vmatprep.subr.mxu0 0.0
    %2698 = vmatpush1.msra.mxu0 0.0
    %2699 = vmatprep.subr.mxu0 0.0
    %2700 = vmatpush1.msra.mxu0 0.0
    %2701 = vmatprep.subr.mxu0 0.0
    %2702 = vmatpush1.msra.mxu0 0.0
    %2703 = vmatprep.subr.mxu0 0.0
    %2704 = vmatpush1.msra.mxu0 0.0
    %2705 = vmatprep.subr.mxu0 0.0
    %2706 = vmatpush1.msra.mxu0 0.0
    %2707 = vmatprep.subr.mxu0 0.0
    %2708 = vmatpush1.msra.mxu0 0.0
    %2709 = vmatprep.subr.mxu0 0.0
    %2710 = vmatpush1.msra.mxu0 0.0
    %2711 = vmatprep.subr.mxu0 0.0
    %2712 = vmatpush1.msra.mxu0 0.0
    %2713 = vmatprep.subr.mxu0 0.0
    %2714 = vmatpush1.msra.mxu0 0.0
    %2715 = vmatprep.subr.mxu0 0.0
    %2716 = vmatpush1.msra.mxu0 0.0
    %2717 = vmatprep.subr.mxu0 0.0
    %2718 = vmatpush1.msra.mxu0 0.0
    %2719 = vmatprep.subr.mxu0 0.0
    %2720 = vmatpush1.msra.mxu0 0.0
    %2721 = vmatprep.subr.mxu0 0.0
    %2722 = vmatpush1.msra.mxu0 0.0
    %2723 = vmatprep.subr.mxu0 0.0
    %2724 = vmatpush1.msra.mxu0 0.0
    %2725 = vmatprep.subr.mxu0 0.0
    %2726 = vmatpush1.msra.mxu0 0.0
    %2727 = vmatprep.subr.mxu0 0.0
    %2728 = vmatpush1.msra.mxu0 0.0
    %2729 = vmatprep.mubr.f32.mxu0 0.0
    %2730 = vmatmul.mubr.f32.gmra.mrb[0].mxu0 %v2663
    %v2731 = vpop.f32.mrb[0].mxu0
    %v2732 = vadd.f32 %v584, %v2731
    %v2733 = vpop.f32.mrb[0].mxu0
    %v2734 = vadd.f32 %v588, %v2733
    %2735 = vdwg.mxu0
    %2736 = vmatprep.subr.mxu0 %v519
    %2737 = vmatpush1.msra.mxu0 %v518
    %2738 = vmatprep.subr.mxu0 %v523
    %2739 = vmatpush1.msra.mxu0 %v522
    %2740 = vmatprep.subr.mxu0 %v527
    %2741 = vmatpush1.msra.mxu0 %v526
    %2742 = vmatprep.subr.mxu0 %v531
    %2743 = vmatpush1.msra.mxu0 %v530
    %2744 = vmatprep.subr.mxu0 %v535
    %2745 = vmatpush1.msra.mxu0 %v534
    %2746 = vmatprep.subr.mxu0 %v539
    %2747 = vmatpush1.msra.mxu0 %v538
    %2748 = vmatprep.subr.mxu0 %v543
    %2749 = vmatpush1.msra.mxu0 %v542
    %2750 = vmatprep.subr.mxu0 %v547
    %2751 = vmatpush1.msra.mxu0 %v546
    %2752 = vmatprep.subr.mxu0 %v551
    %2753 = vmatpush1.msra.mxu0 %v550
    %2754 = vmatprep.subr.mxu0 %v555
    %2755 = vmatpush1.msra.mxu0 %v554
    %2756 = vmatprep.subr.mxu0 %v559
    %2757 = vmatpush1.msra.mxu0 %v558
    %2758 = vmatprep.subr.mxu0 %v563
    %2759 = vmatpush1.msra.mxu0 %v562
    %2760 = vmatprep.subr.mxu0 %v567
    %2761 = vmatpush1.msra.mxu0 %v566
    %2762 = vmatprep.subr.mxu0 %v571
    %2763 = vmatpush1.msra.mxu0 %v570
    %2764 = vmatprep.subr.mxu0 %v575
    %2765 = vmatpush1.msra.mxu0 %v574
    %2766 = vmatprep.subr.mxu0 %v579
    %2767 = vmatpush1.msra.mxu0 %v578
    %2768 = vmatprep.subr.mxu0 0.0
    %2769 = vmatpush1.msra.mxu0 0.0
    %2770 = vmatprep.subr.mxu0 0.0
    %2771 = vmatpush1.msra.mxu0 0.0
    %2772 = vmatprep.subr.mxu0 0.0
    %2773 = vmatpush1.msra.mxu0 0.0
    %2774 = vmatprep.subr.mxu0 0.0
    %2775 = vmatpush1.msra.mxu0 0.0
    %2776 = vmatprep.subr.mxu0 0.0
    %2777 = vmatpush1.msra.mxu0 0.0
    %2778 = vmatprep.subr.mxu0 0.0
    %2779 = vmatpush1.msra.mxu0 0.0
    %2780 = vmatprep.subr.mxu0 0.0
    %2781 = vmatpush1.msra.mxu0 0.0
    %2782 = vmatprep.subr.mxu0 0.0
    %2783 = vmatpush1.msra.mxu0 0.0
    %2784 = vmatprep.subr.mxu0 0.0
    %2785 = vmatpush1.msra.mxu0 0.0
    %2786 = vmatprep.subr.mxu0 0.0
    %2787 = vmatpush1.msra.mxu0 0.0
    %2788 = vmatprep.subr.mxu0 0.0
    %2789 = vmatpush1.msra.mxu0 0.0
    %2790 = vmatprep.subr.mxu0 0.0
    %2791 = vmatpush1.msra.mxu0 0.0
    %2792 = vmatprep.subr.mxu0 0.0
    %2793 = vmatpush1.msra.mxu0 0.0
    %2794 = vmatprep.subr.mxu0 0.0
    %2795 = vmatpush1.msra.mxu0 0.0
    %2796 = vmatprep.subr.mxu0 0.0
    %2797 = vmatpush1.msra.mxu0 0.0
    %2798 = vmatprep.subr.mxu0 0.0
    %2799 = vmatpush1.msra.mxu0 0.0
    %2800 = vmatprep.mubr.f32.mxu0 0.0
    %2801 = vmatmul.mubr.f32.gmra.mrb[0].mxu0 %v2663
    %v2802 = vpop.f32.mrb[0].mxu0
    %v2803 = vadd.f32 %v592, %v2802
    %v2804 = vpop.f32.mrb[0].mxu0
    %v2805 = vadd.f32 %v596, %v2804
    %2806 = vdwg.mxu0
    %2807 = vmatprep.subr.mxu0 %v744
    %2808 = vmatpush1.msra.mxu0 %v743
    %2809 = vmatprep.subr.mxu0 %v748
    %2810 = vmatpush1.msra.mxu0 %v747
    %2811 = vmatprep.subr.mxu0 %v752
    %2812 = vmatpush1.msra.mxu0 %v751
    %2813 = vmatprep.subr.mxu0 %v756
    %2814 = vmatpush1.msra.mxu0 %v755
    %2815 = vmatprep.subr.mxu0 %v760
    %2816 = vmatpush1.msra.mxu0 %v759
    %2817 = vmatprep.subr.mxu0 %v764
    %2818 = vmatpush1.msra.mxu0 %v763
    %2819 = vmatprep.subr.mxu0 %v768
    %2820 = vmatpush1.msra.mxu0 %v767
    %2821 = vmatprep.subr.mxu0 %v772
    %2822 = vmatpush1.msra.mxu0 %v771
    %2823 = vmatprep.subr.mxu0 %v776
    %2824 = vmatpush1.msra.mxu0 %v775
    %2825 = vmatprep.subr.mxu0 %v780
    %2826 = vmatpush1.msra.mxu0 %v779
    %2827 = vmatprep.subr.mxu0 %v784
    %2828 = vmatpush1.msra.mxu0 %v783
    %2829 = vmatprep.subr.mxu0 %v788
    %2830 = vmatpush1.msra.mxu0 %v787
    %2831 = vmatprep.subr.mxu0 %v792
    %2832 = vmatpush1.msra.mxu0 %v791
    %2833 = vmatprep.subr.mxu0 %v796
    %2834 = vmatpush1.msra.mxu0 %v795
    %2835 = vmatprep.subr.mxu0 %v800
    %2836 = vmatpush1.msra.mxu0 %v799
    %2837 = vmatprep.subr.mxu0 %v804
    %2838 = vmatpush1.msra.mxu0 %v803
    %2839 = vmatprep.subr.mxu0 0.0
    %2840 = vmatpush1.msra.mxu0 0.0
    %2841 = vmatprep.subr.mxu0 0.0
    %2842 = vmatpush1.msra.mxu0 0.0
    %2843 = vmatprep.subr.mxu0 0.0
    %2844 = vmatpush1.msra.mxu0 0.0
    %2845 = vmatprep.subr.mxu0 0.0
    %2846 = vmatpush1.msra.mxu0 0.0
    %2847 = vmatprep.subr.mxu0 0.0
    %2848 = vmatpush1.msra.mxu0 0.0
    %2849 = vmatprep.subr.mxu0 0.0
    %2850 = vmatpush1.msra.mxu0 0.0
    %2851 = vmatprep.subr.mxu0 0.0
    %2852 = vmatpush1.msra.mxu0 0.0
    %2853 = vmatprep.subr.mxu0 0.0
    %2854 = vmatpush1.msra.mxu0 0.0
    %2855 = vmatprep.subr.mxu0 0.0
    %2856 = vmatpush1.msra.mxu0 0.0
    %2857 = vmatprep.subr.mxu0 0.0
    %2858 = vmatpush1.msra.mxu0 0.0
    %2859 = vmatprep.subr.mxu0 0.0
    %2860 = vmatpush1.msra.mxu0 0.0
    %2861 = vmatprep.subr.mxu0 0.0
    %2862 = vmatpush1.msra.mxu0 0.0
    %2863 = vmatprep.subr.mxu0 0.0
    %2864 = vmatpush1.msra.mxu0 0.0
    %2865 = vmatprep.subr.mxu0 0.0
    %2866 = vmatpush1.msra.mxu0 0.0
    %2867 = vmatprep.subr.mxu0 0.0
    %2868 = vmatpush1.msra.mxu0 0.0
    %2869 = vmatprep.subr.mxu0 0.0
    %2870 = vmatpush1.msra.mxu0 0.0
    %2871 = vmatprep.mubr.f32.mxu0 0.0
    %2872 = vmatmul.mubr.f32.gmra.mrb[0].mxu0 %v2476
    %v2873 = vpop.f32.mrb[0].mxu0
    %v2874 = vadd.f32 0.0, %v2873
    %v2875 = vpop.f32.mrb[0].mxu0
    %v2876 = vadd.f32 0.0, %v2875
    %2877 = vdwg.mxu0
    %2878 = vmatprep.subr.mxu0 %v746
    %2879 = vmatpush1.msra.mxu0 %v745
    %2880 = vmatprep.subr.mxu0 %v750
    %2881 = vmatpush1.msra.mxu0 %v749
    %2882 = vmatprep.subr.mxu0 %v754
    %2883 = vmatpush1.msra.mxu0 %v753
    %2884 = vmatprep.subr.mxu0 %v758
    %2885 = vmatpush1.msra.mxu0 %v757
    %2886 = vmatprep.subr.mxu0 %v762
    %2887 = vmatpush1.msra.mxu0 %v761
    %2888 = vmatprep.subr.mxu0 %v766
    %2889 = vmatpush1.msra.mxu0 %v765
    %2890 = vmatprep.subr.mxu0 %v770
    %2891 = vmatpush1.msra.mxu0 %v769
    %2892 = vmatprep.subr.mxu0 %v774
    %2893 = vmatpush1.msra.mxu0 %v773
    %2894 = vmatprep.subr.mxu0 %v778
    %2895 = vmatpush1.msra.mxu0 %v777
    %2896 = vmatprep.subr.mxu0 %v782
    %2897 = vmatpush1.msra.mxu0 %v781
    %2898 = vmatprep.subr.mxu0 %v786
    %2899 = vmatpush1.msra.mxu0 %v785
    %2900 = vmatprep.subr.mxu0 %v790
    %2901 = vmatpush1.msra.mxu0 %v789
    %2902 = vmatprep.subr.mxu0 %v794
    %2903 = vmatpush1.msra.mxu0 %v793
    %2904 = vmatprep.subr.mxu0 %v798
    %2905 = vmatpush1.msra.mxu0 %v797
    %2906 = vmatprep.subr.mxu0 %v802
    %2907 = vmatpush1.msra.mxu0 %v801
    %2908 = vmatprep.subr.mxu0 %v806
    %2909 = vmatpush1.msra.mxu0 %v805
    %2910 = vmatprep.subr.mxu0 0.0
    %2911 = vmatpush1.msra.mxu0 0.0
    %2912 = vmatprep.subr.mxu0 0.0
    %2913 = vmatpush1.msra.mxu0 0.0
    %2914 = vmatprep.subr.mxu0 0.0
    %2915 = vmatpush1.msra.mxu0 0.0
    %2916 = vmatprep.subr.mxu0 0.0
    %2917 = vmatpush1.msra.mxu0 0.0
    %2918 = vmatprep.subr.mxu0 0.0
    %2919 = vmatpush1.msra.mxu0 0.0
    %2920 = vmatprep.subr.mxu0 0.0
    %2921 = vmatpush1.msra.mxu0 0.0
    %2922 = vmatprep.subr.mxu0 0.0
    %2923 = vmatpush1.msra.mxu0 0.0
    %2924 = vmatprep.subr.mxu0 0.0
    %2925 = vmatpush1.msra.mxu0 0.0
    %2926 = vmatprep.subr.mxu0 0.0
    %2927 = vmatpush1.msra.mxu0 0.0
    %2928 = vmatprep.subr.mxu0 0.0
    %2929 = vmatpush1.msra.mxu0 0.0
    %2930 = vmatprep.subr.mxu0 0.0
    %2931 = vmatpush1.msra.mxu0 0.0
    %2932 = vmatprep.subr.mxu0 0.0
    %2933 = vmatpush1.msra.mxu0 0.0
    %2934 = vmatprep.subr.mxu0 0.0
    %2935 = vmatpush1.msra.mxu0 0.0
    %2936 = vmatprep.subr.mxu0 0.0
    %2937 = vmatpush1.msra.mxu0 0.0
    %2938 = vmatprep.subr.mxu0 0.0
    %2939 = vmatpush1.msra.mxu0 0.0
    %2940 = vmatprep.subr.mxu0 0.0
    %2941 = vmatpush1.msra.mxu0 0.0
    %2942 = vmatprep.mubr.f32.mxu0 0.0
    %2943 = vmatmul.mubr.f32.gmra.mrb[0].mxu0 %v2476
    %v2944 = vpop.f32.mrb[0].mxu0
    %v2945 = vadd.f32 0.0, %v2944
    %v2946 = vpop.f32.mrb[0].mxu0
    %v2947 = vadd.f32 0.0, %v2946
    %2948 = vdwg.mxu0
    %v2949 = vadd.f32 %v2732, %v2874
    %v2950 = vadd.f32 %v2734, %v2876
    %v2951 = vadd.f32 %v2803, %v2945
    %v2952 = vadd.f32 %v2805, %v2947
    %v2953 = vxor.u32 %v2949, 2147483648
    %v2954 = vmul.f32 %v2953, 1.442695
    %v2955 = vpow.pop %v2954
    %v2956 = vadd.f32 %v2955, 1.0
    %v2957 = vrcp.pop %v2956
    %v2958 = vmul.f32 1.0, %v2957
    %v2959 = vxor.u32 %v2950, 2147483648
    %v2960 = vmul.f32 %v2959, 1.442695
    %v2961 = vpow.pop %v2960
    %v2962 = vadd.f32 %v2961, 1.0
    %v2963 = vrcp.pop %v2962
    %v2964 = vmul.f32 1.0, %v2963
    %v2965 = vtanh.pop %v2951
    %v2966 = vxor.u32 %v2952, 2147483648
    %v2967 = vmul.f32 %v2966, 1.442695
    %v2968 = vpow.pop %v2967
    %v2969 = vadd.f32 %v2968, 1.0
    %v2970 = vrcp.pop %v2969
    %v2971 = vmul.f32 1.0, %v2970
    %v2972 = vmul.f32 %v2964, %v2474
    %v2973 = vmul.f32 %v2958, %v2965
    %v2974 = vadd.f32 %v2972, %v2973
    %v2975 = vtanh.pop %v2974
    %v2976 = vmul.f32 %v2971, %v2975
    %2977 = vmatprep.subr.mxu0 %v283
    %2978 = vmatpush1.msra.mxu0 %v282
    %2979 = vmatprep.subr.mxu0 %v287
    %2980 = vmatpush1.msra.mxu0 %v286
    %2981 = vmatprep.subr.mxu0 %v291
    %2982 = vmatpush1.msra.mxu0 %v290
    %2983 = vmatprep.subr.mxu0 %v295
    %2984 = vmatpush1.msra.mxu0 %v294
    %2985 = vmatprep.subr.mxu0 %v299
    %2986 = vmatpush1.msra.mxu0 %v298
    %2987 = vmatprep.subr.mxu0 %v303
    %2988 = vmatpush1.msra.mxu0 %v302
    %2989 = vmatprep.subr.mxu0 %v307
    %2990 = vmatpush1.msra.mxu0 %v306
    %2991 = vmatprep.subr.mxu0 %v311
    %2992 = vmatpush1.msra.mxu0 %v310
    %2993 = vmatprep.subr.mxu0 %v315
    %2994 = vmatpush1.msra.mxu0 %v314
    %2995 = vmatprep.subr.mxu0 %v319
    %2996 = vmatpush1.msra.mxu0 %v318
    %2997 = vmatprep.subr.mxu0 %v323
    %2998 = vmatpush1.msra.mxu0 %v322
    %2999 = vmatprep.subr.mxu0 %v327
    %3000 = vmatpush1.msra.mxu0 %v326
    %3001 = vmatprep.subr.mxu0 %v331
    %3002 = vmatpush1.msra.mxu0 %v330
    %3003 = vmatprep.subr.mxu0 %v335
    %3004 = vmatpush1.msra.mxu0 %v334
    %3005 = vmatprep.subr.mxu0 %v339
    %3006 = vmatpush1.msra.mxu0 %v338
    %3007 = vmatprep.subr.mxu0 %v343
    %3008 = vmatpush1.msra.mxu0 %v342
    %3009 = vmatprep.subr.mxu0 0.0
    %3010 = vmatpush1.msra.mxu0 0.0
    %3011 = vmatprep.subr.mxu0 0.0
    %3012 = vmatpush1.msra.mxu0 0.0
    %3013 = vmatprep.subr.mxu0 0.0
    %3014 = vmatpush1.msra.mxu0 0.0
    %3015 = vmatprep.subr.mxu0 0.0
    %3016 = vmatpush1.msra.mxu0 0.0
    %3017 = vmatprep.subr.mxu0 0.0
    %3018 = vmatpush1.msra.mxu0 0.0
    %3019 = vmatprep.subr.mxu0 0.0
    %3020 = vmatpush1.msra.mxu0 0.0
    %3021 = vmatprep.subr.mxu0 0.0
    %3022 = vmatpush1.msra.mxu0 0.0
    %3023 = vmatprep.subr.mxu0 0.0
    %3024 = vmatpush1.msra.mxu0 0.0
    %3025 = vmatprep.subr.mxu0 0.0
    %3026 = vmatpush1.msra.mxu0 0.0
    %3027 = vmatprep.subr.mxu0 0.0
    %3028 = vmatpush1.msra.mxu0 0.0
    %3029 = vmatprep.subr.mxu0 0.0
    %3030 = vmatpush1.msra.mxu0 0.0
    %3031 = vmatprep.subr.mxu0 0.0
    %3032 = vmatpush1.msra.mxu0 0.0
    %3033 = vmatprep.subr.mxu0 0.0
    %3034 = vmatpush1.msra.mxu0 0.0
    %3035 = vmatprep.subr.mxu0 0.0
    %3036 = vmatpush1.msra.mxu0 0.0
    %3037 = vmatprep.subr.mxu0 0.0
    %3038 = vmatpush1.msra.mxu0 0.0
    %3039 = vmatprep.subr.mxu0 0.0
    %3040 = vmatpush1.msra.mxu0 0.0
    %3041 = vmatprep.mubr.f32.mxu0 0.0
    %3042 = vmatmul.mubr.f32.gmra.mrb[0].mxu0 %v2663
    %v3043 = vpop.f32.mrb[0].mxu0
    %v3044 = vadd.f32 0.0, %v3043
    %v3045 = vpop.f32.mrb[0].mxu0
    %v3046 = vadd.f32 0.0, %v3045
    %3047 = vdwg.mxu0
    %3048 = vmatprep.subr.mxu0 %v285
    %3049 = vmatpush1.msra.mxu0 %v284
    %3050 = vmatprep.subr.mxu0 %v289
    %3051 = vmatpush1.msra.mxu0 %v288
    %3052 = vmatprep.subr.mxu0 %v293
    %3053 = vmatpush1.msra.mxu0 %v292
    %3054 = vmatprep.subr.mxu0 %v297
    %3055 = vmatpush1.msra.mxu0 %v296
    %3056 = vmatprep.subr.mxu0 %v301
    %3057 = vmatpush1.msra.mxu0 %v300
    %3058 = vmatprep.subr.mxu0 %v305
    %3059 = vmatpush1.msra.mxu0 %v304
    %3060 = vmatprep.subr.mxu0 %v309
    %3061 = vmatpush1.msra.mxu0 %v308
    %3062 = vmatprep.subr.mxu0 %v313
    %3063 = vmatpush1.msra.mxu0 %v312
    %3064 = vmatprep.subr.mxu0 %v317
    %3065 = vmatpush1.msra.mxu0 %v316
    %3066 = vmatprep.subr.mxu0 %v321
    %3067 = vmatpush1.msra.mxu0 %v320
    %3068 = vmatprep.subr.mxu0 %v325
    %3069 = vmatpush1.msra.mxu0 %v324
    %3070 = vmatprep.subr.mxu0 %v329
    %3071 = vmatpush1.msra.mxu0 %v328
    %3072 = vmatprep.subr.mxu0 %v333
    %3073 = vmatpush1.msra.mxu0 %v332
    %3074 = vmatprep.subr.mxu0 %v337
    %3075 = vmatpush1.msra.mxu0 %v336
    %3076 = vmatprep.subr.mxu0 %v341
    %3077 = vmatpush1.msra.mxu0 %v340
    %3078 = vmatprep.subr.mxu0 %v345
    %3079 = vmatpush1.msra.mxu0 %v344
    %3080 = vmatprep.subr.mxu0 0.0
    %3081 = vmatpush1.msra.mxu0 0.0
    %3082 = vmatprep.subr.mxu0 0.0
    %3083 = vmatpush1.msra.mxu0 0.0
    %3084 = vmatprep.subr.mxu0 0.0
    %3085 = vmatpush1.msra.mxu0 0.0
    %3086 = vmatprep.subr.mxu0 0.0
    %3087 = vmatpush1.msra.mxu0 0.0
    %3088 = vmatprep.subr.mxu0 0.0
    %3089 = vmatpush1.msra.mxu0 0.0
    %3090 = vmatprep.subr.mxu0 0.0
    %3091 = vmatpush1.msra.mxu0 0.0
    %3092 = vmatprep.subr.mxu0 0.0
    %3093 = vmatpush1.msra.mxu0 0.0
    %3094 = vmatprep.subr.mxu0 0.0
    %3095 = vmatpush1.msra.mxu0 0.0
    %3096 = vmatprep.subr.mxu0 0.0
    %3097 = vmatpush1.msra.mxu0 0.0
    %3098 = vmatprep.subr.mxu0 0.0
    %3099 = vmatpush1.msra.mxu0 0.0
    %3100 = vmatprep.subr.mxu0 0.0
    %3101 = vmatpush1.msra.mxu0 0.0
    %3102 = vmatprep.subr.mxu0 0.0
    %3103 = vmatpush1.msra.mxu0 0.0
    %3104 = vmatprep.subr.mxu0 0.0
    %3105 = vmatpush1.msra.mxu0 0.0
    %3106 = vmatprep.subr.mxu0 0.0
    %3107 = vmatpush1.msra.mxu0 0.0
    %3108 = vmatprep.subr.mxu0 0.0
    %3109 = vmatpush1.msra.mxu0 0.0
    %3110 = vmatprep.subr.mxu0 0.0
    %3111 = vmatpush1.msra.mxu0 0.0
    %3112 = vmatprep.mubr.f32.mxu0 0.0
    %3113 = vmatmul.mubr.f32.gmra.mrb[0].mxu0 %v2663
    %v3114 = vpop.f32.mrb[0].mxu0
    %v3115 = vadd.f32 0.0, %v3114
    %v3116 = vpop.f32.mrb[0].mxu0
    %v3117 = vadd.f32 0.0, %v3116
    %3118 = vdwg.mxu0
    %v3123 = vrot.slane %v3044, 3
    %v3124 = vrot.slane %v3046, 3
    %v3125 = vrot.slane %v3115, 3
    %v3126 = vrot.slane %v3117, 3
    %v3131 = vadd.f32 %v206, %v3123
    %v3132 = vadd.f32 %v208, %v3124
    %v3133 = vadd.f32 %v277, %v3125
    %v3134 = vadd.f32 %v279, %v3126
    %v3135 = vxor.u32 %v3131, 2147483648
    %v3136 = vmul.f32 %v3135, 1.442695
    %v3137 = vpow.pop %v3136
    %v3138 = vadd.f32 %v3137, 1.0
    %v3139 = vrcp.pop %v3138
    %v3140 = vmul.f32 1.0, %v3139
    %v3141 = vxor.u32 %v3132, 2147483648
    %v3142 = vmul.f32 %v3141, 1.442695
    %v3143 = vpow.pop %v3142
    %v3144 = vadd.f32 %v3143, 1.0
    %v3145 = vrcp.pop %v3144
    %v3146 = vmul.f32 1.0, %v3145
    %v3147 = vtanh.pop %v3133
    %v3148 = vxor.u32 %v3134, 2147483648
    %v3149 = vmul.f32 %v3148, 1.442695
    %v3150 = vpow.pop %v3149
    %v3151 = vadd.f32 %v3150, 1.0
    %v3152 = vrcp.pop %v3151
    %v3153 = vmul.f32 1.0, %v3152
    %v3155 = vrot.slane %v2659, 7
    %v3157 = vmul.f32 %v3146, %v3155
    %v3158 = vmul.f32 %v3140, %v3147
    %v3159 = vadd.f32 %v3157, %v3158
    %v3160 = vtanh.pop %v3159
    %v3161 = vmul.f32 %v3153, %v3160
    %v3163 = vrot.slane %v3161, 5
    %3165 = vmatprep.subr.mxu0 %v517
    %3166 = vmatpush1.msra.mxu0 %v516
    %3167 = vmatprep.subr.mxu0 %v521
    %3168 = vmatpush1.msra.mxu0 %v520
    %3169 = vmatprep.subr.mxu0 %v525
    %3170 = vmatpush1.msra.mxu0 %v524
    %3171 = vmatprep.subr.mxu0 %v529
    %3172 = vmatpush1.msra.mxu0 %v528
    %3173 = vmatprep.subr.mxu0 %v533
    %3174 = vmatpush1.msra.mxu0 %v532
    %3175 = vmatprep.subr.mxu0 %v537
    %3176 = vmatpush1.msra.mxu0 %v536
    %3177 = vmatprep.subr.mxu0 %v541
    %3178 = vmatpush1.msra.mxu0 %v540
    %3179 = vmatprep.subr.mxu0 %v545
    %3180 = vmatpush1.msra.mxu0 %v544
    %3181 = vmatprep.subr.mxu0 %v549
    %3182 = vmatpush1.msra.mxu0 %v548
    %3183 = vmatprep.subr.mxu0 %v553
    %3184 = vmatpush1.msra.mxu0 %v552
    %3185 = vmatprep.subr.mxu0 %v557
    %3186 = vmatpush1.msra.mxu0 %v556
    %3187 = vmatprep.subr.mxu0 %v561
    %3188 = vmatpush1.msra.mxu0 %v560
    %3189 = vmatprep.subr.mxu0 %v565
    %3190 = vmatpush1.msra.mxu0 %v564
    %3191 = vmatprep.subr.mxu0 %v569
    %3192 = vmatpush1.msra.mxu0 %v568
    %3193 = vmatprep.subr.mxu0 %v573
    %3194 = vmatpush1.msra.mxu0 %v572
    %3195 = vmatprep.subr.mxu0 %v577
    %3196 = vmatpush1.msra.mxu0 %v576
    %3197 = vmatprep.subr.mxu0 0.0
    %3198 = vmatpush1.msra.mxu0 0.0
    %3199 = vmatprep.subr.mxu0 0.0
    %3200 = vmatpush1.msra.mxu0 0.0
    %3201 = vmatprep.subr.mxu0 0.0
    %3202 = vmatpush1.msra.mxu0 0.0
    %3203 = vmatprep.subr.mxu0 0.0
    %3204 = vmatpush1.msra.mxu0 0.0
    %3205 = vmatprep.subr.mxu0 0.0
    %3206 = vmatpush1.msra.mxu0 0.0
    %3207 = vmatprep.subr.mxu0 0.0
    %3208 = vmatpush1.msra.mxu0 0.0
    %3209 = vmatprep.subr.mxu0 0.0
    %3210 = vmatpush1.msra.mxu0 0.0
    %3211 = vmatprep.subr.mxu0 0.0
    %3212 = vmatpush1.msra.mxu0 0.0
    %3213 = vmatprep.subr.mxu0 0.0
    %3214 = vmatpush1.msra.mxu0 0.0
    %3215 = vmatprep.subr.mxu0 0.0
    %3216 = vmatpush1.msra.mxu0 0.0
    %3217 = vmatprep.subr.mxu0 0.0
    %3218 = vmatpush1.msra.mxu0 0.0
    %3219 = vmatprep.subr.mxu0 0.0
    %3220 = vmatpush1.msra.mxu0 0.0
    %3221 = vmatprep.subr.mxu0 0.0
    %3222 = vmatpush1.msra.mxu0 0.0
    %3223 = vmatprep.subr.mxu0 0.0
    %3224 = vmatpush1.msra.mxu0 0.0
    %3225 = vmatprep.subr.mxu0 0.0
    %3226 = vmatpush1.msra.mxu0 0.0
    %3227 = vmatprep.subr.mxu0 0.0
    %3228 = vmatpush1.msra.mxu0 0.0
    %3229 = vmatprep.mubr.f32.mxu0 0.0
    %3230 = vmatmul.mubr.f32.gmra.mrb[0].mxu0 %v3163
    %v3231 = vpop.f32.mrb[0].mxu0
    %v3232 = vadd.f32 %v584, %v3231
    %v3233 = vpop.f32.mrb[0].mxu0
    %v3234 = vadd.f32 %v588, %v3233
    %3235 = vdwg.mxu0
    %3236 = vmatprep.subr.mxu0 %v519
    %3237 = vmatpush1.msra.mxu0 %v518
    %3238 = vmatprep.subr.mxu0 %v523
    %3239 = vmatpush1.msra.mxu0 %v522
    %3240 = vmatprep.subr.mxu0 %v527
    %3241 = vmatpush1.msra.mxu0 %v526
    %3242 = vmatprep.subr.mxu0 %v531
    %3243 = vmatpush1.msra.mxu0 %v530
    %3244 = vmatprep.subr.mxu0 %v535
    %3245 = vmatpush1.msra.mxu0 %v534
    %3246 = vmatprep.subr.mxu0 %v539
    %3247 = vmatpush1.msra.mxu0 %v538
    %3248 = vmatprep.subr.mxu0 %v543
    %3249 = vmatpush1.msra.mxu0 %v542
    %3250 = vmatprep.subr.mxu0 %v547
    %3251 = vmatpush1.msra.mxu0 %v546
    %3252 = vmatprep.subr.mxu0 %v551
    %3253 = vmatpush1.msra.mxu0 %v550
    %3254 = vmatprep.subr.mxu0 %v555
    %3255 = vmatpush1.msra.mxu0 %v554
    %3256 = vmatprep.subr.mxu0 %v559
    %3257 = vmatpush1.msra.mxu0 %v558
    %3258 = vmatprep.subr.mxu0 %v563
    %3259 = vmatpush1.msra.mxu0 %v562
    %3260 = vmatprep.subr.mxu0 %v567
    %3261 = vmatpush1.msra.mxu0 %v566
    %3262 = vmatprep.subr.mxu0 %v571
    %3263 = vmatpush1.msra.mxu0 %v570
    %3264 = vmatprep.subr.mxu0 %v575
    %3265 = vmatpush1.msra.mxu0 %v574
    %3266 = vmatprep.subr.mxu0 %v579
    %3267 = vmatpush1.msra.mxu0 %v578
    %3268 = vmatprep.subr.mxu0 0.0
    %3269 = vmatpush1.msra.mxu0 0.0
    %3270 = vmatprep.subr.mxu0 0.0
    %3271 = vmatpush1.msra.mxu0 0.0
    %3272 = vmatprep.subr.mxu0 0.0
    %3273 = vmatpush1.msra.mxu0 0.0
    %3274 = vmatprep.subr.mxu0 0.0
    %3275 = vmatpush1.msra.mxu0 0.0
    %3276 = vmatprep.subr.mxu0 0.0
    %3277 = vmatpush1.msra.mxu0 0.0
    %3278 = vmatprep.subr.mxu0 0.0
    %3279 = vmatpush1.msra.mxu0 0.0
    %3280 = vmatprep.subr.mxu0 0.0
    %3281 = vmatpush1.msra.mxu0 0.0
    %3282 = vmatprep.subr.mxu0 0.0
    %3283 = vmatpush1.msra.mxu0 0.0
    %3284 = vmatprep.subr.mxu0 0.0
    %3285 = vmatpush1.msra.mxu0 0.0
    %3286 = vmatprep.subr.mxu0 0.0
    %3287 = vmatpush1.msra.mxu0 0.0
    %3288 = vmatprep.subr.mxu0 0.0
    %3289 = vmatpush1.msra.mxu0 0.0
    %3290 = vmatprep.subr.mxu0 0.0
    %3291 = vmatpush1.msra.mxu0 0.0
    %3292 = vmatprep.subr.mxu0 0.0
    %3293 = vmatpush1.msra.mxu0 0.0
    %3294 = vmatprep.subr.mxu0 0.0
    %3295 = vmatpush1.msra.mxu0 0.0
    %3296 = vmatprep.subr.mxu0 0.0
    %3297 = vmatpush1.msra.mxu0 0.0
    %3298 = vmatprep.subr.mxu0 0.0
    %3299 = vmatpush1.msra.mxu0 0.0
    %3300 = vmatprep.mubr.f32.mxu0 0.0
    %3301 = vmatmul.mubr.f32.gmra.mrb[0].mxu0 %v3163
    %v3302 = vpop.f32.mrb[0].mxu0
    %v3303 = vadd.f32 %v592, %v3302
    %v3304 = vpop.f32.mrb[0].mxu0
    %v3305 = vadd.f32 %v596, %v3304
    %3306 = vdwg.mxu0
    %3307 = vmatprep.subr.mxu0 %v744
    %3308 = vmatpush1.msra.mxu0 %v743
    %3309 = vmatprep.subr.mxu0 %v748
    %3310 = vmatpush1.msra.mxu0 %v747
    %3311 = vmatprep.subr.mxu0 %v752
    %3312 = vmatpush1.msra.mxu0 %v751
    %3313 = vmatprep.subr.mxu0 %v756
    %3314 = vmatpush1.msra.mxu0 %v755
    %3315 = vmatprep.subr.mxu0 %v760
    %3316 = vmatpush1.msra.mxu0 %v759
    %3317 = vmatprep.subr.mxu0 %v764
    %3318 = vmatpush1.msra.mxu0 %v763
    %3319 = vmatprep.subr.mxu0 %v768
    %3320 = vmatpush1.msra.mxu0 %v767
    %3321 = vmatprep.subr.mxu0 %v772
    %3322 = vmatpush1.msra.mxu0 %v771
    %3323 = vmatprep.subr.mxu0 %v776
    %3324 = vmatpush1.msra.mxu0 %v775
    %3325 = vmatprep.subr.mxu0 %v780
    %3326 = vmatpush1.msra.mxu0 %v779
    %3327 = vmatprep.subr.mxu0 %v784
    %3328 = vmatpush1.msra.mxu0 %v783
    %3329 = vmatprep.subr.mxu0 %v788
    %3330 = vmatpush1.msra.mxu0 %v787
    %3331 = vmatprep.subr.mxu0 %v792
    %3332 = vmatpush1.msra.mxu0 %v791
    %3333 = vmatprep.subr.mxu0 %v796
    %3334 = vmatpush1.msra.mxu0 %v795
    %3335 = vmatprep.subr.mxu0 %v800
    %3336 = vmatpush1.msra.mxu0 %v799
    %3337 = vmatprep.subr.mxu0 %v804
    %3338 = vmatpush1.msra.mxu0 %v803
    %3339 = vmatprep.subr.mxu0 0.0
    %3340 = vmatpush1.msra.mxu0 0.0
    %3341 = vmatprep.subr.mxu0 0.0
    %3342 = vmatpush1.msra.mxu0 0.0
    %3343 = vmatprep.subr.mxu0 0.0
    %3344 = vmatpush1.msra.mxu0 0.0
    %3345 = vmatprep.subr.mxu0 0.0
    %3346 = vmatpush1.msra.mxu0 0.0
    %3347 = vmatprep.subr.mxu0 0.0
    %3348 = vmatpush1.msra.mxu0 0.0
    %3349 = vmatprep.subr.mxu0 0.0
    %3350 = vmatpush1.msra.mxu0 0.0
    %3351 = vmatprep.subr.mxu0 0.0
    %3352 = vmatpush1.msra.mxu0 0.0
    %3353 = vmatprep.subr.mxu0 0.0
    %3354 = vmatpush1.msra.mxu0 0.0
    %3355 = vmatprep.subr.mxu0 0.0
    %3356 = vmatpush1.msra.mxu0 0.0
    %3357 = vmatprep.subr.mxu0 0.0
    %3358 = vmatpush1.msra.mxu0 0.0
    %3359 = vmatprep.subr.mxu0 0.0
    %3360 = vmatpush1.msra.mxu0 0.0
    %3361 = vmatprep.subr.mxu0 0.0
    %3362 = vmatpush1.msra.mxu0 0.0
    %3363 = vmatprep.subr.mxu0 0.0
    %3364 = vmatpush1.msra.mxu0 0.0
    %3365 = vmatprep.subr.mxu0 0.0
    %3366 = vmatpush1.msra.mxu0 0.0
    %3367 = vmatprep.subr.mxu0 0.0
    %3368 = vmatpush1.msra.mxu0 0.0
    %3369 = vmatprep.subr.mxu0 0.0
    %3370 = vmatpush1.msra.mxu0 0.0
    %3371 = vmatprep.mubr.f32.mxu0 0.0
    %3372 = vmatmul.mubr.f32.gmra.mrb[0].mxu0 %v2976
    %v3373 = vpop.f32.mrb[0].mxu0
    %v3374 = vadd.f32 0.0, %v3373
    %v3375 = vpop.f32.mrb[0].mxu0
    %v3376 = vadd.f32 0.0, %v3375
    %3377 = vdwg.mxu0
    %3378 = vmatprep.subr.mxu0 %v746
    %3379 = vmatpush1.msra.mxu0 %v745
    %3380 = vmatprep.subr.mxu0 %v750
    %3381 = vmatpush1.msra.mxu0 %v749
    %3382 = vmatprep.subr.mxu0 %v754
    %3383 = vmatpush1.msra.mxu0 %v753
    %3384 = vmatprep.subr.mxu0 %v758
    %3385 = vmatpush1.msra.mxu0 %v757
    %3386 = vmatprep.subr.mxu0 %v762
    %3387 = vmatpush1.msra.mxu0 %v761
    %3388 = vmatprep.subr.mxu0 %v766
    %3389 = vmatpush1.msra.mxu0 %v765
    %3390 = vmatprep.subr.mxu0 %v770
    %3391 = vmatpush1.msra.mxu0 %v769
    %3392 = vmatprep.subr.mxu0 %v774
    %3393 = vmatpush1.msra.mxu0 %v773
    %3394 = vmatprep.subr.mxu0 %v778
    %3395 = vmatpush1.msra.mxu0 %v777
    %3396 = vmatprep.subr.mxu0 %v782
    %3397 = vmatpush1.msra.mxu0 %v781
    %3398 = vmatprep.subr.mxu0 %v786
    %3399 = vmatpush1.msra.mxu0 %v785
    %3400 = vmatprep.subr.mxu0 %v790
    %3401 = vmatpush1.msra.mxu0 %v789
    %3402 = vmatprep.subr.mxu0 %v794
    %3403 = vmatpush1.msra.mxu0 %v793
    %3404 = vmatprep.subr.mxu0 %v798
    %3405 = vmatpush1.msra.mxu0 %v797
    %3406 = vmatprep.subr.mxu0 %v802
    %3407 = vmatpush1.msra.mxu0 %v801
    %3408 = vmatprep.subr.mxu0 %v806
    %3409 = vmatpush1.msra.mxu0 %v805
    %3410 = vmatprep.subr.mxu0 0.0
    %3411 = vmatpush1.msra.mxu0 0.0
    %3412 = vmatprep.subr.mxu0 0.0
    %3413 = vmatpush1.msra.mxu0 0.0
    %3414 = vmatprep.subr.mxu0 0.0
    %3415 = vmatpush1.msra.mxu0 0.0
    %3416 = vmatprep.subr.mxu0 0.0
    %3417 = vmatpush1.msra.mxu0 0.0
    %3418 = vmatprep.subr.mxu0 0.0
    %3419 = vmatpush1.msra.mxu0 0.0
    %3420 = vmatprep.subr.mxu0 0.0
    %3421 = vmatpush1.msra.mxu0 0.0
    %3422 = vmatprep.subr.mxu0 0.0
    %3423 = vmatpush1.msra.mxu0 0.0
    %3424 = vmatprep.subr.mxu0 0.0
    %3425 = vmatpush1.msra.mxu0 0.0
    %3426 = vmatprep.subr.mxu0 0.0
    %3427 = vmatpush1.msra.mxu0 0.0
    %3428 = vmatprep.subr.mxu0 0.0
    %3429 = vmatpush1.msra.mxu0 0.0
    %3430 = vmatprep.subr.mxu0 0.0
    %3431 = vmatpush1.msra.mxu0 0.0
    %3432 = vmatprep.subr.mxu0 0.0
    %3433 = vmatpush1.msra.mxu0 0.0
    %3434 = vmatprep.subr.mxu0 0.0
    %3435 = vmatpush1.msra.mxu0 0.0
    %3436 = vmatprep.subr.mxu0 0.0
    %3437 = vmatpush1.msra.mxu0 0.0
    %3438 = vmatprep.subr.mxu0 0.0
    %3439 = vmatpush1.msra.mxu0 0.0
    %3440 = vmatprep.subr.mxu0 0.0
    %3441 = vmatpush1.msra.mxu0 0.0
    %3442 = vmatprep.mubr.f32.mxu0 0.0
    %3443 = vmatmul.mubr.f32.gmra.mrb[0].mxu0 %v2976
    %v3444 = vpop.f32.mrb[0].mxu0
    %v3445 = vadd.f32 0.0, %v3444
    %v3446 = vpop.f32.mrb[0].mxu0
    %v3447 = vadd.f32 0.0, %v3446
    %3448 = vdwg.mxu0
    %v3449 = vadd.f32 %v3232, %v3374
    %v3450 = vadd.f32 %v3234, %v3376
    %v3451 = vadd.f32 %v3303, %v3445
    %v3452 = vadd.f32 %v3305, %v3447
    %v3453 = vxor.u32 %v3449, 2147483648
    %v3454 = vmul.f32 %v3453, 1.442695
    %v3455 = vpow.pop %v3454
    %v3456 = vadd.f32 %v3455, 1.0
    %v3457 = vrcp.pop %v3456
    %v3458 = vmul.f32 1.0, %v3457
    %v3459 = vxor.u32 %v3450, 2147483648
    %v3460 = vmul.f32 %v3459, 1.442695
    %v3461 = vpow.pop %v3460
    %v3462 = vadd.f32 %v3461, 1.0
    %v3463 = vrcp.pop %v3462
    %v3464 = vmul.f32 1.0, %v3463
    %v3465 = vtanh.pop %v3451
    %v3466 = vxor.u32 %v3452, 2147483648
    %v3467 = vmul.f32 %v3466, 1.442695
    %v3468 = vpow.pop %v3467
    %v3469 = vadd.f32 %v3468, 1.0
    %v3470 = vrcp.pop %v3469
    %v3471 = vmul.f32 1.0, %v3470
    %v3472 = vmul.f32 %v3464, %v2974
    %v3473 = vmul.f32 %v3458, %v3465
    %v3474 = vadd.f32 %v3472, %v3473
    %v3475 = vtanh.pop %v3474
    %v3476 = vmul.f32 %v3471, %v3475
    %3477 = vmatprep.subr.mxu0 %v283
    %3478 = vmatpush1.msra.mxu0 %v282
    %3479 = vmatprep.subr.mxu0 %v287
    %3480 = vmatpush1.msra.mxu0 %v286
    %3481 = vmatprep.subr.mxu0 %v291
    %3482 = vmatpush1.msra.mxu0 %v290
    %3483 = vmatprep.subr.mxu0 %v295
    %3484 = vmatpush1.msra.mxu0 %v294
    %3485 = vmatprep.subr.mxu0 %v299
    %3486 = vmatpush1.msra.mxu0 %v298
    %3487 = vmatprep.subr.mxu0 %v303
    %3488 = vmatpush1.msra.mxu0 %v302
    %3489 = vmatprep.subr.mxu0 %v307
    %3490 = vmatpush1.msra.mxu0 %v306
    %3491 = vmatprep.subr.mxu0 %v311
    %3492 = vmatpush1.msra.mxu0 %v310
    %3493 = vmatprep.subr.mxu0 %v315
    %3494 = vmatpush1.msra.mxu0 %v314
    %3495 = vmatprep.subr.mxu0 %v319
    %3496 = vmatpush1.msra.mxu0 %v318
    %3497 = vmatprep.subr.mxu0 %v323
    %3498 = vmatpush1.msra.mxu0 %v322
    %3499 = vmatprep.subr.mxu0 %v327
    %3500 = vmatpush1.msra.mxu0 %v326
    %3501 = vmatprep.subr.mxu0 %v331
    %3502 = vmatpush1.msra.mxu0 %v330
    %3503 = vmatprep.subr.mxu0 %v335
    %3504 = vmatpush1.msra.mxu0 %v334
    %3505 = vmatprep.subr.mxu0 %v339
    %3506 = vmatpush1.msra.mxu0 %v338
    %3507 = vmatprep.subr.mxu0 %v343
    %3508 = vmatpush1.msra.mxu0 %v342
    %3509 = vmatprep.subr.mxu0 0.0
    %3510 = vmatpush1.msra.mxu0 0.0
    %3511 = vmatprep.subr.mxu0 0.0
    %3512 = vmatpush1.msra.mxu0 0.0
    %3513 = vmatprep.subr.mxu0 0.0
    %3514 = vmatpush1.msra.mxu0 0.0
    %3515 = vmatprep.subr.mxu0 0.0
    %3516 = vmatpush1.msra.mxu0 0.0
    %3517 = vmatprep.subr.mxu0 0.0
    %3518 = vmatpush1.msra.mxu0 0.0
    %3519 = vmatprep.subr.mxu0 0.0
    %3520 = vmatpush1.msra.mxu0 0.0
    %3521 = vmatprep.subr.mxu0 0.0
    %3522 = vmatpush1.msra.mxu0 0.0
    %3523 = vmatprep.subr.mxu0 0.0
    %3524 = vmatpush1.msra.mxu0 0.0
    %3525 = vmatprep.subr.mxu0 0.0
    %3526 = vmatpush1.msra.mxu0 0.0
    %3527 = vmatprep.subr.mxu0 0.0
    %3528 = vmatpush1.msra.mxu0 0.0
    %3529 = vmatprep.subr.mxu0 0.0
    %3530 = vmatpush1.msra.mxu0 0.0
    %3531 = vmatprep.subr.mxu0 0.0
    %3532 = vmatpush1.msra.mxu0 0.0
    %3533 = vmatprep.subr.mxu0 0.0
    %3534 = vmatpush1.msra.mxu0 0.0
    %3535 = vmatprep.subr.mxu0 0.0
    %3536 = vmatpush1.msra.mxu0 0.0
    %3537 = vmatprep.subr.mxu0 0.0
    %3538 = vmatpush1.msra.mxu0 0.0
    %3539 = vmatprep.subr.mxu0 0.0
    %3540 = vmatpush1.msra.mxu0 0.0
    %3541 = vmatprep.mubr.f32.mxu0 0.0
    %3542 = vmatmul.mubr.f32.gmra.mrb[0].mxu0 %v3163
    %v3543 = vpop.f32.mrb[0].mxu0
    %v3544 = vadd.f32 0.0, %v3543
    %v3545 = vpop.f32.mrb[0].mxu0
    %v3546 = vadd.f32 0.0, %v3545
    %3547 = vdwg.mxu0
    %3548 = vmatprep.subr.mxu0 %v285
    %3549 = vmatpush1.msra.mxu0 %v284
    %3550 = vmatprep.subr.mxu0 %v289
    %3551 = vmatpush1.msra.mxu0 %v288
    %3552 = vmatprep.subr.mxu0 %v293
    %3553 = vmatpush1.msra.mxu0 %v292
    %3554 = vmatprep.subr.mxu0 %v297
    %3555 = vmatpush1.msra.mxu0 %v296
    %3556 = vmatprep.subr.mxu0 %v301
    %3557 = vmatpush1.msra.mxu0 %v300
    %3558 = vmatprep.subr.mxu0 %v305
    %3559 = vmatpush1.msra.mxu0 %v304
    %3560 = vmatprep.subr.mxu0 %v309
    %3561 = vmatpush1.msra.mxu0 %v308
    %3562 = vmatprep.subr.mxu0 %v313
    %3563 = vmatpush1.msra.mxu0 %v312
    %3564 = vmatprep.subr.mxu0 %v317
    %3565 = vmatpush1.msra.mxu0 %v316
    %3566 = vmatprep.subr.mxu0 %v321
    %3567 = vmatpush1.msra.mxu0 %v320
    %3568 = vmatprep.subr.mxu0 %v325
    %3569 = vmatpush1.msra.mxu0 %v324
    %3570 = vmatprep.subr.mxu0 %v329
    %3571 = vmatpush1.msra.mxu0 %v328
    %3572 = vmatprep.subr.mxu0 %v333
    %3573 = vmatpush1.msra.mxu0 %v332
    %3574 = vmatprep.subr.mxu0 %v337
    %3575 = vmatpush1.msra.mxu0 %v336
    %3576 = vmatprep.subr.mxu0 %v341
    %3577 = vmatpush1.msra.mxu0 %v340
    %3578 = vmatprep.subr.mxu0 %v345
    %3579 = vmatpush1.msra.mxu0 %v344
    %3580 = vmatprep.subr.mxu0 0.0
    %3581 = vmatpush1.msra.mxu0 0.0
    %3582 = vmatprep.subr.mxu0 0.0
    %3583 = vmatpush1.msra.mxu0 0.0
    %3584 = vmatprep.subr.mxu0 0.0
    %3585 = vmatpush1.msra.mxu0 0.0
    %3586 = vmatprep.subr.mxu0 0.0
    %3587 = vmatpush1.msra.mxu0 0.0
    %3588 = vmatprep.subr.mxu0 0.0
    %3589 = vmatpush1.msra.mxu0 0.0
    %3590 = vmatprep.subr.mxu0 0.0
    %3591 = vmatpush1.msra.mxu0 0.0
    %3592 = vmatprep.subr.mxu0 0.0
    %3593 = vmatpush1.msra.mxu0 0.0
    %3594 = vmatprep.subr.mxu0 0.0
    %3595 = vmatpush1.msra.mxu0 0.0
    %3596 = vmatprep.subr.mxu0 0.0
    %3597 = vmatpush1.msra.mxu0 0.0
    %3598 = vmatprep.subr.mxu0 0.0
    %3599 = vmatpush1.msra.mxu0 0.0
    %3600 = vmatprep.subr.mxu0 0.0
    %3601 = vmatpush1.msra.mxu0 0.0
    %3602 = vmatprep.subr.mxu0 0.0
    %3603 = vmatpush1.msra.mxu0 0.0
    %3604 = vmatprep.subr.mxu0 0.0
    %3605 = vmatpush1.msra.mxu0 0.0
    %3606 = vmatprep.subr.mxu0 0.0
    %3607 = vmatpush1.msra.mxu0 0.0
    %3608 = vmatprep.subr.mxu0 0.0
    %3609 = vmatpush1.msra.mxu0 0.0
    %3610 = vmatprep.subr.mxu0 0.0
    %3611 = vmatpush1.msra.mxu0 0.0
    %3612 = vmatprep.mubr.f32.mxu0 0.0
    %3613 = vmatmul.mubr.f32.gmra.mrb[0].mxu0 %v3163
    %v3614 = vpop.f32.mrb[0].mxu0
    %v3615 = vadd.f32 0.0, %v3614
    %v3616 = vpop.f32.mrb[0].mxu0
    %v3617 = vadd.f32 0.0, %v3616
    %3618 = vdwg.mxu0
    %v3623 = vrot.slane %v3544, 2
    %v3624 = vrot.slane %v3546, 2
    %v3625 = vrot.slane %v3615, 2
    %v3626 = vrot.slane %v3617, 2
    %v3631 = vadd.f32 %v206, %v3623
    %v3632 = vadd.f32 %v208, %v3624
    %v3633 = vadd.f32 %v277, %v3625
    %v3634 = vadd.f32 %v279, %v3626
    %v3635 = vxor.u32 %v3631, 2147483648
    %v3636 = vmul.f32 %v3635, 1.442695
    %v3637 = vpow.pop %v3636
    %v3638 = vadd.f32 %v3637, 1.0
    %v3639 = vrcp.pop %v3638
    %v3640 = vmul.f32 1.0, %v3639
    %v3641 = vxor.u32 %v3632, 2147483648
    %v3642 = vmul.f32 %v3641, 1.442695
    %v3643 = vpow.pop %v3642
    %v3644 = vadd.f32 %v3643, 1.0
    %v3645 = vrcp.pop %v3644
    %v3646 = vmul.f32 1.0, %v3645
    %v3647 = vtanh.pop %v3633
    %v3648 = vxor.u32 %v3634, 2147483648
    %v3649 = vmul.f32 %v3648, 1.442695
    %v3650 = vpow.pop %v3649
    %v3651 = vadd.f32 %v3650, 1.0
    %v3652 = vrcp.pop %v3651
    %v3653 = vmul.f32 1.0, %v3652
    %v3655 = vrot.slane %v3159, 7
    %v3657 = vmul.f32 %v3646, %v3655
    %v3658 = vmul.f32 %v3640, %v3647
    %v3659 = vadd.f32 %v3657, %v3658
    %v3660 = vtanh.pop %v3659
    %v3661 = vmul.f32 %v3653, %v3660
    %v3663 = vrot.slane %v3661, 6
    %3665 = vmatprep.subr.mxu0 %v517
    %3666 = vmatpush1.msra.mxu0 %v516
    %3667 = vmatprep.subr.mxu0 %v521
    %3668 = vmatpush1.msra.mxu0 %v520
    %3669 = vmatprep.subr.mxu0 %v525
    %3670 = vmatpush1.msra.mxu0 %v524
    %3671 = vmatprep.subr.mxu0 %v529
    %3672 = vmatpush1.msra.mxu0 %v528
    %3673 = vmatprep.subr.mxu0 %v533
    %3674 = vmatpush1.msra.mxu0 %v532
    %3675 = vmatprep.subr.mxu0 %v537
    %3676 = vmatpush1.msra.mxu0 %v536
    %3677 = vmatprep.subr.mxu0 %v541
    %3678 = vmatpush1.msra.mxu0 %v540
    %3679 = vmatprep.subr.mxu0 %v545
    %3680 = vmatpush1.msra.mxu0 %v544
    %3681 = vmatprep.subr.mxu0 %v549
    %3682 = vmatpush1.msra.mxu0 %v548
    %3683 = vmatprep.subr.mxu0 %v553
    %3684 = vmatpush1.msra.mxu0 %v552
    %3685 = vmatprep.subr.mxu0 %v557
    %3686 = vmatpush1.msra.mxu0 %v556
    %3687 = vmatprep.subr.mxu0 %v561
    %3688 = vmatpush1.msra.mxu0 %v560
    %3689 = vmatprep.subr.mxu0 %v565
    %3690 = vmatpush1.msra.mxu0 %v564
    %3691 = vmatprep.subr.mxu0 %v569
    %3692 = vmatpush1.msra.mxu0 %v568
    %3693 = vmatprep.subr.mxu0 %v573
    %3694 = vmatpush1.msra.mxu0 %v572
    %3695 = vmatprep.subr.mxu0 %v577
    %3696 = vmatpush1.msra.mxu0 %v576
    %3697 = vmatprep.subr.mxu0 0.0
    %3698 = vmatpush1.msra.mxu0 0.0
    %3699 = vmatprep.subr.mxu0 0.0
    %3700 = vmatpush1.msra.mxu0 0.0
    %3701 = vmatprep.subr.mxu0 0.0
    %3702 = vmatpush1.msra.mxu0 0.0
    %3703 = vmatprep.subr.mxu0 0.0
    %3704 = vmatpush1.msra.mxu0 0.0
    %3705 = vmatprep.subr.mxu0 0.0
    %3706 = vmatpush1.msra.mxu0 0.0
    %3707 = vmatprep.subr.mxu0 0.0
    %3708 = vmatpush1.msra.mxu0 0.0
    %3709 = vmatprep.subr.mxu0 0.0
    %3710 = vmatpush1.msra.mxu0 0.0
    %3711 = vmatprep.subr.mxu0 0.0
    %3712 = vmatpush1.msra.mxu0 0.0
    %3713 = vmatprep.subr.mxu0 0.0
    %3714 = vmatpush1.msra.mxu0 0.0
    %3715 = vmatprep.subr.mxu0 0.0
    %3716 = vmatpush1.msra.mxu0 0.0
    %3717 = vmatprep.subr.mxu0 0.0
    %3718 = vmatpush1.msra.mxu0 0.0
    %3719 = vmatprep.subr.mxu0 0.0
    %3720 = vmatpush1.msra.mxu0 0.0
    %3721 = vmatprep.subr.mxu0 0.0
    %3722 = vmatpush1.msra.mxu0 0.0
    %3723 = vmatprep.subr.mxu0 0.0
    %3724 = vmatpush1.msra.mxu0 0.0
    %3725 = vmatprep.subr.mxu0 0.0
    %3726 = vmatpush1.msra.mxu0 0.0
    %3727 = vmatprep.subr.mxu0 0.0
    %3728 = vmatpush1.msra.mxu0 0.0
    %3729 = vmatprep.mubr.f32.mxu0 0.0
    %3730 = vmatmul.mubr.f32.gmra.mrb[0].mxu0 %v3663
    %v3731 = vpop.f32.mrb[0].mxu0
    %v3732 = vadd.f32 %v584, %v3731
    %v3733 = vpop.f32.mrb[0].mxu0
    %v3734 = vadd.f32 %v588, %v3733
    %3735 = vdwg.mxu0
    %3736 = vmatprep.subr.mxu0 %v519
    %3737 = vmatpush1.msra.mxu0 %v518
    %3738 = vmatprep.subr.mxu0 %v523
    %3739 = vmatpush1.msra.mxu0 %v522
    %3740 = vmatprep.subr.mxu0 %v527
    %3741 = vmatpush1.msra.mxu0 %v526
    %3742 = vmatprep.subr.mxu0 %v531
    %3743 = vmatpush1.msra.mxu0 %v530
    %3744 = vmatprep.subr.mxu0 %v535
    %3745 = vmatpush1.msra.mxu0 %v534
    %3746 = vmatprep.subr.mxu0 %v539
    %3747 = vmatpush1.msra.mxu0 %v538
    %3748 = vmatprep.subr.mxu0 %v543
    %3749 = vmatpush1.msra.mxu0 %v542
    %3750 = vmatprep.subr.mxu0 %v547
    %3751 = vmatpush1.msra.mxu0 %v546
    %3752 = vmatprep.subr.mxu0 %v551
    %3753 = vmatpush1.msra.mxu0 %v550
    %3754 = vmatprep.subr.mxu0 %v555
    %3755 = vmatpush1.msra.mxu0 %v554
    %3756 = vmatprep.subr.mxu0 %v559
    %3757 = vmatpush1.msra.mxu0 %v558
    %3758 = vmatprep.subr.mxu0 %v563
    %3759 = vmatpush1.msra.mxu0 %v562
    %3760 = vmatprep.subr.mxu0 %v567
    %3761 = vmatpush1.msra.mxu0 %v566
    %3762 = vmatprep.subr.mxu0 %v571
    %3763 = vmatpush1.msra.mxu0 %v570
    %3764 = vmatprep.subr.mxu0 %v575
    %3765 = vmatpush1.msra.mxu0 %v574
    %3766 = vmatprep.subr.mxu0 %v579
    %3767 = vmatpush1.msra.mxu0 %v578
    %3768 = vmatprep.subr.mxu0 0.0
    %3769 = vmatpush1.msra.mxu0 0.0
    %3770 = vmatprep.subr.mxu0 0.0
    %3771 = vmatpush1.msra.mxu0 0.0
    %3772 = vmatprep.subr.mxu0 0.0
    %3773 = vmatpush1.msra.mxu0 0.0
    %3774 = vmatprep.subr.mxu0 0.0
    %3775 = vmatpush1.msra.mxu0 0.0
    %3776 = vmatprep.subr.mxu0 0.0
    %3777 = vmatpush1.msra.mxu0 0.0
    %3778 = vmatprep.subr.mxu0 0.0
    %3779 = vmatpush1.msra.mxu0 0.0
    %3780 = vmatprep.subr.mxu0 0.0
    %3781 = vmatpush1.msra.mxu0 0.0
    %3782 = vmatprep.subr.mxu0 0.0
    %3783 = vmatpush1.msra.mxu0 0.0
    %3784 = vmatprep.subr.mxu0 0.0
    %3785 = vmatpush1.msra.mxu0 0.0
    %3786 = vmatprep.subr.mxu0 0.0
    %3787 = vmatpush1.msra.mxu0 0.0
    %3788 = vmatprep.subr.mxu0 0.0
    %3789 = vmatpush1.msra.mxu0 0.0
    %3790 = vmatprep.subr.mxu0 0.0
    %3791 = vmatpush1.msra.mxu0 0.0
    %3792 = vmatprep.subr.mxu0 0.0
    %3793 = vmatpush1.msra.mxu0 0.0
    %3794 = vmatprep.subr.mxu0 0.0
    %3795 = vmatpush1.msra.mxu0 0.0
    %3796 = vmatprep.subr.mxu0 0.0
    %3797 = vmatpush1.msra.mxu0 0.0
    %3798 = vmatprep.subr.mxu0 0.0
    %3799 = vmatpush1.msra.mxu0 0.0
    %3800 = vmatprep.mubr.f32.mxu0 0.0
    %3801 = vmatmul.mubr.f32.gmra.mrb[0].mxu0 %v3663
    %v3802 = vpop.f32.mrb[0].mxu0
    %v3803 = vadd.f32 %v592, %v3802
    %v3804 = vpop.f32.mrb[0].mxu0
    %v3805 = vadd.f32 %v596, %v3804
    %3806 = vdwg.mxu0
    %3807 = vmatprep.subr.mxu0 %v744
    %3808 = vmatpush1.msra.mxu0 %v743
    %3809 = vmatprep.subr.mxu0 %v748
    %3810 = vmatpush1.msra.mxu0 %v747
    %3811 = vmatprep.subr.mxu0 %v752
    %3812 = vmatpush1.msra.mxu0 %v751
    %3813 = vmatprep.subr.mxu0 %v756
    %3814 = vmatpush1.msra.mxu0 %v755
    %3815 = vmatprep.subr.mxu0 %v760
    %3816 = vmatpush1.msra.mxu0 %v759
    %3817 = vmatprep.subr.mxu0 %v764
    %3818 = vmatpush1.msra.mxu0 %v763
    %3819 = vmatprep.subr.mxu0 %v768
    %3820 = vmatpush1.msra.mxu0 %v767
    %3821 = vmatprep.subr.mxu0 %v772
    %3822 = vmatpush1.msra.mxu0 %v771
    %3823 = vmatprep.subr.mxu0 %v776
    %3824 = vmatpush1.msra.mxu0 %v775
    %3825 = vmatprep.subr.mxu0 %v780
    %3826 = vmatpush1.msra.mxu0 %v779
    %3827 = vmatprep.subr.mxu0 %v784
    %3828 = vmatpush1.msra.mxu0 %v783
    %3829 = vmatprep.subr.mxu0 %v788
    %3830 = vmatpush1.msra.mxu0 %v787
    %3831 = vmatprep.subr.mxu0 %v792
    %3832 = vmatpush1.msra.mxu0 %v791
    %3833 = vmatprep.subr.mxu0 %v796
    %3834 = vmatpush1.msra.mxu0 %v795
    %3835 = vmatprep.subr.mxu0 %v800
    %3836 = vmatpush1.msra.mxu0 %v799
    %3837 = vmatprep.subr.mxu0 %v804
    %3838 = vmatpush1.msra.mxu0 %v803
    %3839 = vmatprep.subr.mxu0 0.0
    %3840 = vmatpush1.msra.mxu0 0.0
    %3841 = vmatprep.subr.mxu0 0.0
    %3842 = vmatpush1.msra.mxu0 0.0
    %3843 = vmatprep.subr.mxu0 0.0
    %3844 = vmatpush1.msra.mxu0 0.0
    %3845 = vmatprep.subr.mxu0 0.0
    %3846 = vmatpush1.msra.mxu0 0.0
    %3847 = vmatprep.subr.mxu0 0.0
    %3848 = vmatpush1.msra.mxu0 0.0
    %3849 = vmatprep.subr.mxu0 0.0
    %3850 = vmatpush1.msra.mxu0 0.0
    %3851 = vmatprep.subr.mxu0 0.0
    %3852 = vmatpush1.msra.mxu0 0.0
    %3853 = vmatprep.subr.mxu0 0.0
    %3854 = vmatpush1.msra.mxu0 0.0
    %3855 = vmatprep.subr.mxu0 0.0
    %3856 = vmatpush1.msra.mxu0 0.0
    %3857 = vmatprep.subr.mxu0 0.0
    %3858 = vmatpush1.msra.mxu0 0.0
    %3859 = vmatprep.subr.mxu0 0.0
    %3860 = vmatpush1.msra.mxu0 0.0
    %3861 = vmatprep.subr.mxu0 0.0
    %3862 = vmatpush1.msra.mxu0 0.0
    %3863 = vmatprep.subr.mxu0 0.0
    %3864 = vmatpush1.msra.mxu0 0.0
    %3865 = vmatprep.subr.mxu0 0.0
    %3866 = vmatpush1.msra.mxu0 0.0
    %3867 = vmatprep.subr.mxu0 0.0
    %3868 = vmatpush1.msra.mxu0 0.0
    %3869 = vmatprep.subr.mxu0 0.0
    %3870 = vmatpush1.msra.mxu0 0.0
    %3871 = vmatprep.mubr.f32.mxu0 0.0
    %3872 = vmatmul.mubr.f32.gmra.mrb[0].mxu0 %v3476
    %v3873 = vpop.f32.mrb[0].mxu0
    %v3874 = vadd.f32 0.0, %v3873
    %v3875 = vpop.f32.mrb[0].mxu0
    %v3876 = vadd.f32 0.0, %v3875
    %3877 = vdwg.mxu0
    %3878 = vmatprep.subr.mxu0 %v746
    %3879 = vmatpush1.msra.mxu0 %v745
    %3880 = vmatprep.subr.mxu0 %v750
    %3881 = vmatpush1.msra.mxu0 %v749
    %3882 = vmatprep.subr.mxu0 %v754
    %3883 = vmatpush1.msra.mxu0 %v753
    %3884 = vmatprep.subr.mxu0 %v758
    %3885 = vmatpush1.msra.mxu0 %v757
    %3886 = vmatprep.subr.mxu0 %v762
    %3887 = vmatpush1.msra.mxu0 %v761
    %3888 = vmatprep.subr.mxu0 %v766
    %3889 = vmatpush1.msra.mxu0 %v765
    %3890 = vmatprep.subr.mxu0 %v770
    %3891 = vmatpush1.msra.mxu0 %v769
    %3892 = vmatprep.subr.mxu0 %v774
    %3893 = vmatpush1.msra.mxu0 %v773
    %3894 = vmatprep.subr.mxu0 %v778
    %3895 = vmatpush1.msra.mxu0 %v777
    %3896 = vmatprep.subr.mxu0 %v782
    %3897 = vmatpush1.msra.mxu0 %v781
    %3898 = vmatprep.subr.mxu0 %v786
    %3899 = vmatpush1.msra.mxu0 %v785
    %3900 = vmatprep.subr.mxu0 %v790
    %3901 = vmatpush1.msra.mxu0 %v789
    %3902 = vmatprep.subr.mxu0 %v794
    %3903 = vmatpush1.msra.mxu0 %v793
    %3904 = vmatprep.subr.mxu0 %v798
    %3905 = vmatpush1.msra.mxu0 %v797
    %3906 = vmatprep.subr.mxu0 %v802
    %3907 = vmatpush1.msra.mxu0 %v801
    %3908 = vmatprep.subr.mxu0 %v806
    %3909 = vmatpush1.msra.mxu0 %v805
    %3910 = vmatprep.subr.mxu0 0.0
    %3911 = vmatpush1.msra.mxu0 0.0
    %3912 = vmatprep.subr.mxu0 0.0
    %3913 = vmatpush1.msra.mxu0 0.0
    %3914 = vmatprep.subr.mxu0 0.0
    %3915 = vmatpush1.msra.mxu0 0.0
    %3916 = vmatprep.subr.mxu0 0.0
    %3917 = vmatpush1.msra.mxu0 0.0
    %3918 = vmatprep.subr.mxu0 0.0
    %3919 = vmatpush1.msra.mxu0 0.0
    %3920 = vmatprep.subr.mxu0 0.0
    %3921 = vmatpush1.msra.mxu0 0.0
    %3922 = vmatprep.subr.mxu0 0.0
    %3923 = vmatpush1.msra.mxu0 0.0
    %3924 = vmatprep.subr.mxu0 0.0
    %3925 = vmatpush1.msra.mxu0 0.0
    %3926 = vmatprep.subr.mxu0 0.0
    %3927 = vmatpush1.msra.mxu0 0.0
    %3928 = vmatprep.subr.mxu0 0.0
    %3929 = vmatpush1.msra.mxu0 0.0
    %3930 = vmatprep.subr.mxu0 0.0
    %3931 = vmatpush1.msra.mxu0 0.0
    %3932 = vmatprep.subr.mxu0 0.0
    %3933 = vmatpush1.msra.mxu0 0.0
    %3934 = vmatprep.subr.mxu0 0.0
    %3935 = vmatpush1.msra.mxu0 0.0
    %3936 = vmatprep.subr.mxu0 0.0
    %3937 = vmatpush1.msra.mxu0 0.0
    %3938 = vmatprep.subr.mxu0 0.0
    %3939 = vmatpush1.msra.mxu0 0.0
    %3940 = vmatprep.subr.mxu0 0.0
    %3941 = vmatpush1.msra.mxu0 0.0
    %3942 = vmatprep.mubr.f32.mxu0 0.0
    %3943 = vmatmul.mubr.f32.gmra.mrb[0].mxu0 %v3476
    %v3944 = vpop.f32.mrb[0].mxu0
    %v3945 = vadd.f32 0.0, %v3944
    %v3946 = vpop.f32.mrb[0].mxu0
    %v3947 = vadd.f32 0.0, %v3946
    %3948 = vdwg.mxu0
    %v3949 = vadd.f32 %v3732, %v3874
    %v3950 = vadd.f32 %v3734, %v3876
    %v3951 = vadd.f32 %v3803, %v3945
    %v3952 = vadd.f32 %v3805, %v3947
    %v3953 = vxor.u32 %v3949, 2147483648
    %v3954 = vmul.f32 %v3953, 1.442695
    %v3955 = vpow.pop %v3954
    %v3956 = vadd.f32 %v3955, 1.0
    %v3957 = vrcp.pop %v3956
    %v3958 = vmul.f32 1.0, %v3957
    %v3959 = vxor.u32 %v3950, 2147483648
    %v3960 = vmul.f32 %v3959, 1.442695
    %v3961 = vpow.pop %v3960
    %v3962 = vadd.f32 %v3961, 1.0
    %v3963 = vrcp.pop %v3962
    %v3964 = vmul.f32 1.0, %v3963
    %v3965 = vtanh.pop %v3951
    %v3966 = vxor.u32 %v3952, 2147483648
    %v3967 = vmul.f32 %v3966, 1.442695
    %v3968 = vpow.pop %v3967
    %v3969 = vadd.f32 %v3968, 1.0
    %v3970 = vrcp.pop %v3969
    %v3971 = vmul.f32 1.0, %v3970
    %v3972 = vmul.f32 %v3964, %v3474
    %v3973 = vmul.f32 %v3958, %v3965
    %v3974 = vadd.f32 %v3972, %v3973
    %v3975 = vtanh.pop %v3974
    %v3976 = vmul.f32 %v3971, %v3975
    %3977 = vmatprep.subr.mxu0 %v283
    %3978 = vmatpush1.msra.mxu0 %v282
    %3979 = vmatprep.subr.mxu0 %v287
    %3980 = vmatpush1.msra.mxu0 %v286
    %3981 = vmatprep.subr.mxu0 %v291
    %3982 = vmatpush1.msra.mxu0 %v290
    %3983 = vmatprep.subr.mxu0 %v295
    %3984 = vmatpush1.msra.mxu0 %v294
    %3985 = vmatprep.subr.mxu0 %v299
    %3986 = vmatpush1.msra.mxu0 %v298
    %3987 = vmatprep.subr.mxu0 %v303
    %3988 = vmatpush1.msra.mxu0 %v302
    %3989 = vmatprep.subr.mxu0 %v307
    %3990 = vmatpush1.msra.mxu0 %v306
    %3991 = vmatprep.subr.mxu0 %v311
    %3992 = vmatpush1.msra.mxu0 %v310
    %3993 = vmatprep.subr.mxu0 %v315
    %3994 = vmatpush1.msra.mxu0 %v314
    %3995 = vmatprep.subr.mxu0 %v319
    %3996 = vmatpush1.msra.mxu0 %v318
    %3997 = vmatprep.subr.mxu0 %v323
    %3998 = vmatpush1.msra.mxu0 %v322
    %3999 = vmatprep.subr.mxu0 %v327
    %4000 = vmatpush1.msra.mxu0 %v326
    %4001 = vmatprep.subr.mxu0 %v331
    %4002 = vmatpush1.msra.mxu0 %v330
    %4003 = vmatprep.subr.mxu0 %v335
    %4004 = vmatpush1.msra.mxu0 %v334
    %4005 = vmatprep.subr.mxu0 %v339
    %4006 = vmatpush1.msra.mxu0 %v338
    %4007 = vmatprep.subr.mxu0 %v343
    %4008 = vmatpush1.msra.mxu0 %v342
    %4009 = vmatprep.subr.mxu0 0.0
    %4010 = vmatpush1.msra.mxu0 0.0
    %4011 = vmatprep.subr.mxu0 0.0
    %4012 = vmatpush1.msra.mxu0 0.0
    %4013 = vmatprep.subr.mxu0 0.0
    %4014 = vmatpush1.msra.mxu0 0.0
    %4015 = vmatprep.subr.mxu0 0.0
    %4016 = vmatpush1.msra.mxu0 0.0
    %4017 = vmatprep.subr.mxu0 0.0
    %4018 = vmatpush1.msra.mxu0 0.0
    %4019 = vmatprep.subr.mxu0 0.0
    %4020 = vmatpush1.msra.mxu0 0.0
    %4021 = vmatprep.subr.mxu0 0.0
    %4022 = vmatpush1.msra.mxu0 0.0
    %4023 = vmatprep.subr.mxu0 0.0
    %4024 = vmatpush1.msra.mxu0 0.0
    %4025 = vmatprep.subr.mxu0 0.0
    %4026 = vmatpush1.msra.mxu0 0.0
    %4027 = vmatprep.subr.mxu0 0.0
    %4028 = vmatpush1.msra.mxu0 0.0
    %4029 = vmatprep.subr.mxu0 0.0
    %4030 = vmatpush1.msra.mxu0 0.0
    %4031 = vmatprep.subr.mxu0 0.0
    %4032 = vmatpush1.msra.mxu0 0.0
    %4033 = vmatprep.subr.mxu0 0.0
    %4034 = vmatpush1.msra.mxu0 0.0
    %4035 = vmatprep.subr.mxu0 0.0
    %4036 = vmatpush1.msra.mxu0 0.0
    %4037 = vmatprep.subr.mxu0 0.0
    %4038 = vmatpush1.msra.mxu0 0.0
    %4039 = vmatprep.subr.mxu0 0.0
    %4040 = vmatpush1.msra.mxu0 0.0
    %4041 = vmatprep.mubr.f32.mxu0 0.0
    %4042 = vmatmul.mubr.f32.gmra.mrb[0].mxu0 %v3663
    %v4043 = vpop.f32.mrb[0].mxu0
    %v4044 = vadd.f32 0.0, %v4043
    %v4045 = vpop.f32.mrb[0].mxu0
    %v4046 = vadd.f32 0.0, %v4045
    %4047 = vdwg.mxu0
    %4048 = vmatprep.subr.mxu0 %v285
    %4049 = vmatpush1.msra.mxu0 %v284
    %4050 = vmatprep.subr.mxu0 %v289
    %4051 = vmatpush1.msra.mxu0 %v288
    %4052 = vmatprep.subr.mxu0 %v293
    %4053 = vmatpush1.msra.mxu0 %v292
    %4054 = vmatprep.subr.mxu0 %v297
    %4055 = vmatpush1.msra.mxu0 %v296
    %4056 = vmatprep.subr.mxu0 %v301
    %4057 = vmatpush1.msra.mxu0 %v300
    %4058 = vmatprep.subr.mxu0 %v305
    %4059 = vmatpush1.msra.mxu0 %v304
    %4060 = vmatprep.subr.mxu0 %v309
    %4061 = vmatpush1.msra.mxu0 %v308
    %4062 = vmatprep.subr.mxu0 %v313
    %4063 = vmatpush1.msra.mxu0 %v312
    %4064 = vmatprep.subr.mxu0 %v317
    %4065 = vmatpush1.msra.mxu0 %v316
    %4066 = vmatprep.subr.mxu0 %v321
    %4067 = vmatpush1.msra.mxu0 %v320
    %4068 = vmatprep.subr.mxu0 %v325
    %4069 = vmatpush1.msra.mxu0 %v324
    %4070 = vmatprep.subr.mxu0 %v329
    %4071 = vmatpush1.msra.mxu0 %v328
    %4072 = vmatprep.subr.mxu0 %v333
    %4073 = vmatpush1.msra.mxu0 %v332
    %4074 = vmatprep.subr.mxu0 %v337
    %4075 = vmatpush1.msra.mxu0 %v336
    %4076 = vmatprep.subr.mxu0 %v341
    %4077 = vmatpush1.msra.mxu0 %v340
    %4078 = vmatprep.subr.mxu0 %v345
    %4079 = vmatpush1.msra.mxu0 %v344
    %4080 = vmatprep.subr.mxu0 0.0
    %4081 = vmatpush1.msra.mxu0 0.0
    %4082 = vmatprep.subr.mxu0 0.0
    %4083 = vmatpush1.msra.mxu0 0.0
    %4084 = vmatprep.subr.mxu0 0.0
    %4085 = vmatpush1.msra.mxu0 0.0
    %4086 = vmatprep.subr.mxu0 0.0
    %4087 = vmatpush1.msra.mxu0 0.0
    %4088 = vmatprep.subr.mxu0 0.0
    %4089 = vmatpush1.msra.mxu0 0.0
    %4090 = vmatprep.subr.mxu0 0.0
    %4091 = vmatpush1.msra.mxu0 0.0
    %4092 = vmatprep.subr.mxu0 0.0
    %4093 = vmatpush1.msra.mxu0 0.0
    %4094 = vmatprep.subr.mxu0 0.0
    %4095 = vmatpush1.msra.mxu0 0.0
    %4096 = vmatprep.subr.mxu0 0.0
    %4097 = vmatpush1.msra.mxu0 0.0
    %4098 = vmatprep.subr.mxu0 0.0
    %4099 = vmatpush1.msra.mxu0 0.0
    %4100 = vmatprep.subr.mxu0 0.0
    %4101 = vmatpush1.msra.mxu0 0.0
    %4102 = vmatprep.subr.mxu0 0.0
    %4103 = vmatpush1.msra.mxu0 0.0
    %4104 = vmatprep.subr.mxu0 0.0
    %4105 = vmatpush1.msra.mxu0 0.0
    %4106 = vmatprep.subr.mxu0 0.0
    %4107 = vmatpush1.msra.mxu0 0.0
    %4108 = vmatprep.subr.mxu0 0.0
    %4109 = vmatpush1.msra.mxu0 0.0
    %4110 = vmatprep.subr.mxu0 0.0
    %4111 = vmatpush1.msra.mxu0 0.0
    %4112 = vmatprep.mubr.f32.mxu0 0.0
    %4113 = vmatmul.mubr.f32.gmra.mrb[0].mxu0 %v3663
    %v4114 = vpop.f32.mrb[0].mxu0
    %v4115 = vadd.f32 0.0, %v4114
    %v4116 = vpop.f32.mrb[0].mxu0
    %v4117 = vadd.f32 0.0, %v4116
    %4118 = vdwg.mxu0
    %v4123 = vrot.slane %v4044, 1
    %v4124 = vrot.slane %v4046, 1
    %v4125 = vrot.slane %v4115, 1
    %v4126 = vrot.slane %v4117, 1
    %v4131 = vadd.f32 %v206, %v4123
    %v4132 = vadd.f32 %v208, %v4124
    %v4133 = vadd.f32 %v277, %v4125
    %v4134 = vadd.f32 %v279, %v4126
    %v4135 = vxor.u32 %v4131, 2147483648
    %v4136 = vmul.f32 %v4135, 1.442695
    %v4137 = vpow.pop %v4136
    %v4138 = vadd.f32 %v4137, 1.0
    %v4139 = vrcp.pop %v4138
    %v4140 = vmul.f32 1.0, %v4139
    %v4141 = vxor.u32 %v4132, 2147483648
    %v4142 = vmul.f32 %v4141, 1.442695
    %v4143 = vpow.pop %v4142
    %v4144 = vadd.f32 %v4143, 1.0
    %v4145 = vrcp.pop %v4144
    %v4146 = vmul.f32 1.0, %v4145
    %v4147 = vtanh.pop %v4133
    %v4148 = vxor.u32 %v4134, 2147483648
    %v4149 = vmul.f32 %v4148, 1.442695
    %v4150 = vpow.pop %v4149
    %v4151 = vadd.f32 %v4150, 1.0
    %v4152 = vrcp.pop %v4151
    %v4153 = vmul.f32 1.0, %v4152
    %v4155 = vrot.slane %v3659, 7
    %v4157 = vmul.f32 %v4146, %v4155
    %v4158 = vmul.f32 %v4140, %v4147
    %v4159 = vadd.f32 %v4157, %v4158
    %v4160 = vtanh.pop %v4159
    %v4161 = vmul.f32 %v4153, %v4160
    %v4163 = vrot.slane %v4161, 7
    %4165 = vmatprep.subr.mxu0 %v517
    %4166 = vmatpush1.msra.mxu0 %v516
    %4167 = vmatprep.subr.mxu0 %v521
    %4168 = vmatpush1.msra.mxu0 %v520
    %4169 = vmatprep.subr.mxu0 %v525
    %4170 = vmatpush1.msra.mxu0 %v524
    %4171 = vmatprep.subr.mxu0 %v529
    %4172 = vmatpush1.msra.mxu0 %v528
    %4173 = vmatprep.subr.mxu0 %v533
    %4174 = vmatpush1.msra.mxu0 %v532
    %4175 = vmatprep.subr.mxu0 %v537
    %4176 = vmatpush1.msra.mxu0 %v536
    %4177 = vmatprep.subr.mxu0 %v541
    %4178 = vmatpush1.msra.mxu0 %v540
    %4179 = vmatprep.subr.mxu0 %v545
    %4180 = vmatpush1.msra.mxu0 %v544
    %4181 = vmatprep.subr.mxu0 %v549
    %4182 = vmatpush1.msra.mxu0 %v548
    %4183 = vmatprep.subr.mxu0 %v553
    %4184 = vmatpush1.msra.mxu0 %v552
    %4185 = vmatprep.subr.mxu0 %v557
    %4186 = vmatpush1.msra.mxu0 %v556
    %4187 = vmatprep.subr.mxu0 %v561
    %4188 = vmatpush1.msra.mxu0 %v560
    %4189 = vmatprep.subr.mxu0 %v565
    %4190 = vmatpush1.msra.mxu0 %v564
    %4191 = vmatprep.subr.mxu0 %v569
    %4192 = vmatpush1.msra.mxu0 %v568
    %4193 = vmatprep.subr.mxu0 %v573
    %4194 = vmatpush1.msra.mxu0 %v572
    %4195 = vmatprep.subr.mxu0 %v577
    %4196 = vmatpush1.msra.mxu0 %v576
    %4197 = vmatprep.subr.mxu0 0.0
    %4198 = vmatpush1.msra.mxu0 0.0
    %4199 = vmatprep.subr.mxu0 0.0
    %4200 = vmatpush1.msra.mxu0 0.0
    %4201 = vmatprep.subr.mxu0 0.0
    %4202 = vmatpush1.msra.mxu0 0.0
    %4203 = vmatprep.subr.mxu0 0.0
    %4204 = vmatpush1.msra.mxu0 0.0
    %4205 = vmatprep.subr.mxu0 0.0
    %4206 = vmatpush1.msra.mxu0 0.0
    %4207 = vmatprep.subr.mxu0 0.0
    %4208 = vmatpush1.msra.mxu0 0.0
    %4209 = vmatprep.subr.mxu0 0.0
    %4210 = vmatpush1.msra.mxu0 0.0
    %4211 = vmatprep.subr.mxu0 0.0
    %4212 = vmatpush1.msra.mxu0 0.0
    %4213 = vmatprep.subr.mxu0 0.0
    %4214 = vmatpush1.msra.mxu0 0.0
    %4215 = vmatprep.subr.mxu0 0.0
    %4216 = vmatpush1.msra.mxu0 0.0
    %4217 = vmatprep.subr.mxu0 0.0
    %4218 = vmatpush1.msra.mxu0 0.0
    %4219 = vmatprep.subr.mxu0 0.0
    %4220 = vmatpush1.msra.mxu0 0.0
    %4221 = vmatprep.subr.mxu0 0.0
    %4222 = vmatpush1.msra.mxu0 0.0
    %4223 = vmatprep.subr.mxu0 0.0
    %4224 = vmatpush1.msra.mxu0 0.0
    %4225 = vmatprep.subr.mxu0 0.0
    %4226 = vmatpush1.msra.mxu0 0.0
    %4227 = vmatprep.subr.mxu0 0.0
    %4228 = vmatpush1.msra.mxu0 0.0
    %4229 = vmatprep.mubr.f32.mxu0 0.0
    %4230 = vmatmul.mubr.f32.gmra.mrb[0].mxu0 %v4163
    %v4231 = vpop.f32.mrb[0].mxu0
    %v4232 = vadd.f32 %v584, %v4231
    %v4233 = vpop.f32.mrb[0].mxu0
    %v4234 = vadd.f32 %v588, %v4233
    %4235 = vdwg.mxu0
    %4236 = vmatprep.subr.mxu0 %v519
    %4237 = vmatpush1.msra.mxu0 %v518
    %4238 = vmatprep.subr.mxu0 %v523
    %4239 = vmatpush1.msra.mxu0 %v522
    %4240 = vmatprep.subr.mxu0 %v527
    %4241 = vmatpush1.msra.mxu0 %v526
    %4242 = vmatprep.subr.mxu0 %v531
    %4243 = vmatpush1.msra.mxu0 %v530
    %4244 = vmatprep.subr.mxu0 %v535
    %4245 = vmatpush1.msra.mxu0 %v534
    %4246 = vmatprep.subr.mxu0 %v539
    %4247 = vmatpush1.msra.mxu0 %v538
    %4248 = vmatprep.subr.mxu0 %v543
    %4249 = vmatpush1.msra.mxu0 %v542
    %4250 = vmatprep.subr.mxu0 %v547
    %4251 = vmatpush1.msra.mxu0 %v546
    %4252 = vmatprep.subr.mxu0 %v551
    %4253 = vmatpush1.msra.mxu0 %v550
    %4254 = vmatprep.subr.mxu0 %v555
    %4255 = vmatpush1.msra.mxu0 %v554
    %4256 = vmatprep.subr.mxu0 %v559
    %4257 = vmatpush1.msra.mxu0 %v558
    %4258 = vmatprep.subr.mxu0 %v563
    %4259 = vmatpush1.msra.mxu0 %v562
    %4260 = vmatprep.subr.mxu0 %v567
    %4261 = vmatpush1.msra.mxu0 %v566
    %4262 = vmatprep.subr.mxu0 %v571
    %4263 = vmatpush1.msra.mxu0 %v570
    %4264 = vmatprep.subr.mxu0 %v575
    %4265 = vmatpush1.msra.mxu0 %v574
    %4266 = vmatprep.subr.mxu0 %v579
    %4267 = vmatpush1.msra.mxu0 %v578
    %4268 = vmatprep.subr.mxu0 0.0
    %4269 = vmatpush1.msra.mxu0 0.0
    %4270 = vmatprep.subr.mxu0 0.0
    %4271 = vmatpush1.msra.mxu0 0.0
    %4272 = vmatprep.subr.mxu0 0.0
    %4273 = vmatpush1.msra.mxu0 0.0
    %4274 = vmatprep.subr.mxu0 0.0
    %4275 = vmatpush1.msra.mxu0 0.0
    %4276 = vmatprep.subr.mxu0 0.0
    %4277 = vmatpush1.msra.mxu0 0.0
    %4278 = vmatprep.subr.mxu0 0.0
    %4279 = vmatpush1.msra.mxu0 0.0
    %4280 = vmatprep.subr.mxu0 0.0
    %4281 = vmatpush1.msra.mxu0 0.0
    %4282 = vmatprep.subr.mxu0 0.0
    %4283 = vmatpush1.msra.mxu0 0.0
    %4284 = vmatprep.subr.mxu0 0.0
    %4285 = vmatpush1.msra.mxu0 0.0
    %4286 = vmatprep.subr.mxu0 0.0
    %4287 = vmatpush1.msra.mxu0 0.0
    %4288 = vmatprep.subr.mxu0 0.0
    %4289 = vmatpush1.msra.mxu0 0.0
    %4290 = vmatprep.subr.mxu0 0.0
    %4291 = vmatpush1.msra.mxu0 0.0
    %4292 = vmatprep.subr.mxu0 0.0
    %4293 = vmatpush1.msra.mxu0 0.0
    %4294 = vmatprep.subr.mxu0 0.0
    %4295 = vmatpush1.msra.mxu0 0.0
    %4296 = vmatprep.subr.mxu0 0.0
    %4297 = vmatpush1.msra.mxu0 0.0
    %4298 = vmatprep.subr.mxu0 0.0
    %4299 = vmatpush1.msra.mxu0 0.0
    %4300 = vmatprep.mubr.f32.mxu0 0.0
    %4301 = vmatmul.mubr.f32.gmra.mrb[0].mxu0 %v4163
    %v4302 = vpop.f32.mrb[0].mxu0
    %v4303 = vadd.f32 %v592, %v4302
    %v4304 = vpop.f32.mrb[0].mxu0
    %v4305 = vadd.f32 %v596, %v4304
    %4306 = vdwg.mxu0
    %4307 = vmatprep.subr.mxu0 %v744
    %4308 = vmatpush1.msra.mxu0 %v743
    %4309 = vmatprep.subr.mxu0 %v748
    %4310 = vmatpush1.msra.mxu0 %v747
    %4311 = vmatprep.subr.mxu0 %v752
    %4312 = vmatpush1.msra.mxu0 %v751
    %4313 = vmatprep.subr.mxu0 %v756
    %4314 = vmatpush1.msra.mxu0 %v755
    %4315 = vmatprep.subr.mxu0 %v760
    %4316 = vmatpush1.msra.mxu0 %v759
    %4317 = vmatprep.subr.mxu0 %v764
    %4318 = vmatpush1.msra.mxu0 %v763
    %4319 = vmatprep.subr.mxu0 %v768
    %4320 = vmatpush1.msra.mxu0 %v767
    %4321 = vmatprep.subr.mxu0 %v772
    %4322 = vmatpush1.msra.mxu0 %v771
    %4323 = vmatprep.subr.mxu0 %v776
    %4324 = vmatpush1.msra.mxu0 %v775
    %4325 = vmatprep.subr.mxu0 %v780
    %4326 = vmatpush1.msra.mxu0 %v779
    %4327 = vmatprep.subr.mxu0 %v784
    %4328 = vmatpush1.msra.mxu0 %v783
    %4329 = vmatprep.subr.mxu0 %v788
    %4330 = vmatpush1.msra.mxu0 %v787
    %4331 = vmatprep.subr.mxu0 %v792
    %4332 = vmatpush1.msra.mxu0 %v791
    %4333 = vmatprep.subr.mxu0 %v796
    %4334 = vmatpush1.msra.mxu0 %v795
    %4335 = vmatprep.subr.mxu0 %v800
    %4336 = vmatpush1.msra.mxu0 %v799
    %4337 = vmatprep.subr.mxu0 %v804
    %4338 = vmatpush1.msra.mxu0 %v803
    %4339 = vmatprep.subr.mxu0 0.0
    %4340 = vmatpush1.msra.mxu0 0.0
    %4341 = vmatprep.subr.mxu0 0.0
    %4342 = vmatpush1.msra.mxu0 0.0
    %4343 = vmatprep.subr.mxu0 0.0
    %4344 = vmatpush1.msra.mxu0 0.0
    %4345 = vmatprep.subr.mxu0 0.0
    %4346 = vmatpush1.msra.mxu0 0.0
    %4347 = vmatprep.subr.mxu0 0.0
    %4348 = vmatpush1.msra.mxu0 0.0
    %4349 = vmatprep.subr.mxu0 0.0
    %4350 = vmatpush1.msra.mxu0 0.0
    %4351 = vmatprep.subr.mxu0 0.0
    %4352 = vmatpush1.msra.mxu0 0.0
    %4353 = vmatprep.subr.mxu0 0.0
    %4354 = vmatpush1.msra.mxu0 0.0
    %4355 = vmatprep.subr.mxu0 0.0
    %4356 = vmatpush1.msra.mxu0 0.0
    %4357 = vmatprep.subr.mxu0 0.0
    %4358 = vmatpush1.msra.mxu0 0.0
    %4359 = vmatprep.subr.mxu0 0.0
    %4360 = vmatpush1.msra.mxu0 0.0
    %4361 = vmatprep.subr.mxu0 0.0
    %4362 = vmatpush1.msra.mxu0 0.0
    %4363 = vmatprep.subr.mxu0 0.0
    %4364 = vmatpush1.msra.mxu0 0.0
    %4365 = vmatprep.subr.mxu0 0.0
    %4366 = vmatpush1.msra.mxu0 0.0
    %4367 = vmatprep.subr.mxu0 0.0
    %4368 = vmatpush1.msra.mxu0 0.0
    %4369 = vmatprep.subr.mxu0 0.0
    %4370 = vmatpush1.msra.mxu0 0.0
    %4371 = vmatprep.mubr.f32.mxu0 0.0
    %4372 = vmatmul.mubr.f32.gmra.mrb[0].mxu0 %v3976
    %v4373 = vpop.f32.mrb[0].mxu0
    %v4374 = vadd.f32 0.0, %v4373
    %v4375 = vpop.f32.mrb[0].mxu0
    %v4376 = vadd.f32 0.0, %v4375
    %4377 = vdwg.mxu0
    %4378 = vmatprep.subr.mxu0 %v746
    %4379 = vmatpush1.msra.mxu0 %v745
    %4380 = vmatprep.subr.mxu0 %v750
    %4381 = vmatpush1.msra.mxu0 %v749
    %4382 = vmatprep.subr.mxu0 %v754
    %4383 = vmatpush1.msra.mxu0 %v753
    %4384 = vmatprep.subr.mxu0 %v758
    %4385 = vmatpush1.msra.mxu0 %v757
    %4386 = vmatprep.subr.mxu0 %v762
    %4387 = vmatpush1.msra.mxu0 %v761
    %4388 = vmatprep.subr.mxu0 %v766
    %4389 = vmatpush1.msra.mxu0 %v765
    %4390 = vmatprep.subr.mxu0 %v770
    %4391 = vmatpush1.msra.mxu0 %v769
    %4392 = vmatprep.subr.mxu0 %v774
    %4393 = vmatpush1.msra.mxu0 %v773
    %4394 = vmatprep.subr.mxu0 %v778
    %4395 = vmatpush1.msra.mxu0 %v777
    %4396 = vmatprep.subr.mxu0 %v782
    %4397 = vmatpush1.msra.mxu0 %v781
    %4398 = vmatprep.subr.mxu0 %v786
    %4399 = vmatpush1.msra.mxu0 %v785
    %4400 = vmatprep.subr.mxu0 %v790
    %4401 = vmatpush1.msra.mxu0 %v789
    %4402 = vmatprep.subr.mxu0 %v794
    %4403 = vmatpush1.msra.mxu0 %v793
    %4404 = vmatprep.subr.mxu0 %v798
    %4405 = vmatpush1.msra.mxu0 %v797
    %4406 = vmatprep.subr.mxu0 %v802
    %4407 = vmatpush1.msra.mxu0 %v801
    %4408 = vmatprep.subr.mxu0 %v806
    %4409 = vmatpush1.msra.mxu0 %v805
    %4410 = vmatprep.subr.mxu0 0.0
    %4411 = vmatpush1.msra.mxu0 0.0
    %4412 = vmatprep.subr.mxu0 0.0
    %4413 = vmatpush1.msra.mxu0 0.0
    %4414 = vmatprep.subr.mxu0 0.0
    %4415 = vmatpush1.msra.mxu0 0.0
    %4416 = vmatprep.subr.mxu0 0.0
    %4417 = vmatpush1.msra.mxu0 0.0
    %4418 = vmatprep.subr.mxu0 0.0
    %4419 = vmatpush1.msra.mxu0 0.0
    %4420 = vmatprep.subr.mxu0 0.0
    %4421 = vmatpush1.msra.mxu0 0.0
    %4422 = vmatprep.subr.mxu0 0.0
    %4423 = vmatpush1.msra.mxu0 0.0
    %4424 = vmatprep.subr.mxu0 0.0
    %4425 = vmatpush1.msra.mxu0 0.0
    %4426 = vmatprep.subr.mxu0 0.0
    %4427 = vmatpush1.msra.mxu0 0.0
    %4428 = vmatprep.subr.mxu0 0.0
    %4429 = vmatpush1.msra.mxu0 0.0
    %4430 = vmatprep.subr.mxu0 0.0
    %4431 = vmatpush1.msra.mxu0 0.0
    %4432 = vmatprep.subr.mxu0 0.0
    %4433 = vmatpush1.msra.mxu0 0.0
    %4434 = vmatprep.subr.mxu0 0.0
    %4435 = vmatpush1.msra.mxu0 0.0
    %4436 = vmatprep.subr.mxu0 0.0
    %4437 = vmatpush1.msra.mxu0 0.0
    %4438 = vmatprep.subr.mxu0 0.0
    %4439 = vmatpush1.msra.mxu0 0.0
    %4440 = vmatprep.subr.mxu0 0.0
    %4441 = vmatpush1.msra.mxu0 0.0
    %4442 = vmatprep.mubr.f32.mxu0 0.0
    %4443 = vmatmul.mubr.f32.gmra.mrb[0].mxu0 %v3976
    %v4444 = vpop.f32.mrb[0].mxu0
    %v4445 = vadd.f32 0.0, %v4444
    %v4446 = vpop.f32.mrb[0].mxu0
    %v4447 = vadd.f32 0.0, %v4446
    %4448 = vdwg.mxu0
    %v4449 = vadd.f32 %v4232, %v4374
    %v4450 = vadd.f32 %v4234, %v4376
    %v4451 = vadd.f32 %v4303, %v4445
    %v4452 = vadd.f32 %v4305, %v4447
    %v4453 = vxor.u32 %v4449, 2147483648
    %v4454 = vmul.f32 %v4453, 1.442695
    %v4455 = vpow.pop %v4454
    %v4456 = vadd.f32 %v4455, 1.0
    %v4457 = vrcp.pop %v4456
    %v4458 = vmul.f32 1.0, %v4457
    %v4459 = vxor.u32 %v4450, 2147483648
    %v4460 = vmul.f32 %v4459, 1.442695
    %v4461 = vpow.pop %v4460
    %v4462 = vadd.f32 %v4461, 1.0
    %v4463 = vrcp.pop %v4462
    %v4464 = vmul.f32 1.0, %v4463
    %v4465 = vtanh.pop %v4451
    %v4466 = vxor.u32 %v4452, 2147483648
    %v4467 = vmul.f32 %v4466, 1.442695
    %v4468 = vpow.pop %v4467
    %v4469 = vadd.f32 %v4468, 1.0
    %v4470 = vrcp.pop %v4469
    %v4471 = vmul.f32 1.0, %v4470
    %v4472 = vmul.f32 %v4464, %v3974
    %v4473 = vmul.f32 %v4458, %v4465
    %v4474 = vadd.f32 %v4472, %v4473
    %v4475 = vtanh.pop %v4474
    %v4476 = vmul.f32 %v4471, %v4475
    %v4477 = vld [vmem:[%s8] sm:$0x1]
    %v4478 = vmul.f32 %v4476, %v4477
    %vm4479 = vcmask 1040384
    %v4480 = vsel %vm4479, %v4478, 0.0
    %4481 = vadd.xlane.f32.xlu0 %v4480
    %v4482 = vpop.xlane.xlu0 %4481
    %v4483 = vrot.slane %v4482, 4
    %v4484 = vadd.f32 %v4482, %v4483
    %v4485 = vrot.slane %v4484, 2
    %v4486 = vadd.f32 %v4484, %v4485
    %v4487 = vrot.slane %v4486, 1
    %v4488 = vadd.f32 %v4486, %v4487
    %s4489 = vtos %v4488
    %v4490 = vld [vmem:[%s7] sm:$0x1]
    %v4491 = vld [vmem:[%s9] sm:$0x1]
    %v4492 = vmul.f32 %v4490, %v4491
    %v4493 = vsel %vm4479, %v4492, 0.0
    %4494 = vadd.xlane.f32.xlu0 %v4493
    %v4495 = vpop.xlane.xlu0 %4494
    %v4496 = vrot.slane %v4495, 4
    %v4497 = vadd.f32 %v4495, %v4496
    %v4498 = vrot.slane %v4497, 2
    %v4499 = vadd.f32 %v4497, %v4498
    %v4500 = vrot.slane %v4499, 1
    %v4501 = vadd.f32 %v4499, %v4500
    %s4502 = vtos %v4501
    %s4503 = sadd.f32 %s4489, %s4502
    %v4504 = vld [vmem:[#allocation2] sm:$0x1]
    %s4505 = vtos %v4504
    %s4506 = sadd.f32 %s4503, %s4505
    %v4507 = vstv %s4506
    %vm4508 = vcmask 0
    %4509 = vst.msk [vmem:[#allocation11] sm:$0x1] %vm4508, %v4507
    // Predicated region
    $region62: #{trann_forward.1} parent=1 // pred_check
      _
    $region63: #{trann_forward.1} parent=1 // pred_check_branch
      %4511 = sbr.rel (0) target = $region65
    $region64: #{trann_forward.1} parent=1 // pred_region
      %s4513 = ssub.s32 16, 16
      %4514 = vsyncadd [#allocation5], %s4513
      %s4516 = sshll.u32 [#allocation11], 4
      %s4517 = int_to_ptr.vmem [resolvable:$true] %s4516
      %4519 = dma.vmem_to_hbm [thread:$0]  %s4517, 16, %s11, [#allocation5]
    $region65: #{trann_forward.1} parent=1 // pred_fallthru
      _
    // Predicated region
    $region66: #{trann_forward.1} parent=1 // pred_check
      _
    $region67: #{trann_forward.1} parent=1 // pred_check_branch
      %4521 = sbr.rel (0) target = $region69
    $region68: #{trann_forward.1} parent=1 // pred_region
      %4522 = dma.done [#allocation5], 16
    $region69: #{trann_forward.1} parent=1 // pred_fallthru
      _
    %4523 = vsyncpa [#allocation4], 1
    %4524 = vsyncpa [#allocation7], 1
    %4525 = vsyncpa [#allocation10], 1
    %4526 = vsyncpa [#allocation5], 1

</llo_original>
